<compile_context>
chip_gen: v6e
topology: v6e:2x2x1
jax: 0.10.0
libtpu: 0.0.40
codegen_flags: <defaults>
</compile_context>

<pallas_src>
import functools

import jax
import jax.numpy as jnp
from jax.experimental import pallas as pl
from jax.experimental.pallas import tpu as pltpu


def _round_up(n, m):
    return ((n + m - 1) // m) * m


# -----------------------------------------------------------------------------
# Pallas kernel: NODEModel forward for one batch tile (weights stay resident).
# -----------------------------------------------------------------------------
def node_model_kernel(
    x_ref,         # [TB, IN_PAD]       bf16 (features zero-padded to 128 lanes)
    w_in_ref,      # [IN_PAD, H]        bf16 (input-BN scale folded in)
    b_in_ref,      # [1, H]             f32  (input-BN folded in)
    w_cat_ref,     # [L, H, DEC_PAD+H]  bf16 (dec cols padded to 128 || leaf*bn_scale)
    b_cat_ref,     # [L, 1, DEC_PAD+H]  f32
    bn_shift_ref,  # [L, 1, H]          f32  (per-layer BN additive shift)
    expand_ref,    # [DEC_PAD, H]       bf16 0/1 tree_dim-repeat matrix (zero rows > T)
    w_extra_ref,   # [H, H]             bf16
    b_extra_ref,   # [1, H]             f32
    w_fc_ref,      # [H, O_PAD]         bf16 (output cols zero-padded to 128)
    b_fc_ref,      # [1, O_PAD]         f32
    out_ref,       # [TB, O_PAD]        f32
    *,
    num_layers,
    dec_pad,
):
    # input_proj (+ folded input BN) + ReLU
    h = jnp.dot(x_ref[...], w_in_ref[...], preferred_element_type=jnp.float32)
    h = jnp.maximum(h + b_in_ref[...], 0.0)            # [TB, H] f32

    expand = expand_ref[...]                            # [DEC_PAD, H] bf16

    # Stacked NODE layers with residual connections (L is small -> static unroll).
    for l in range(num_layers):
        residual = h
        hb = h.astype(jnp.bfloat16)
        # Fused decision+leaf matmul: y[:, :DEC_PAD] = dec logits (zero-padded),
        #                             y[:, DEC_PAD:] = leaf values (BN scale folded).
        y = jnp.dot(hb, w_cat_ref[l], preferred_element_type=jnp.float32) + b_cat_ref[l]
        dec_logits = y[:, :dec_pad]                     # [TB, DEC_PAD]
        leaf = y[:, dec_pad:]                           # [TB, H]
        # Padded gate columns sigmoid to 0.5 but hit zero rows of `expand` -> no-op.
        decisions = jax.nn.sigmoid(dec_logits).astype(jnp.bfloat16)
        # (leaf.view(B,T,D) * dec[:,:,None]).view(B,H) == leaf * (dec @ expand)
        dec_rep = jnp.dot(decisions, expand, preferred_element_type=jnp.float32)
        # Dropout: identity (eval). BN: scale already folded into leaf, add shift.
        out = leaf * dec_rep + bn_shift_ref[l]
        h = jnp.maximum(out + residual, 0.0)

    # extra_fc + ReLU, then output fc (logits).
    e = jnp.dot(h.astype(jnp.bfloat16), w_extra_ref[...],
                preferred_element_type=jnp.float32)
    e = jnp.maximum(e + b_extra_ref[...], 0.0).astype(jnp.bfloat16)
    out_ref[...] = (
        jnp.dot(e, w_fc_ref[...], preferred_element_type=jnp.float32) + b_fc_ref[...]
    )


# -----------------------------------------------------------------------------
# Wrapper: parameter prep (BN folding, dec/leaf fusion, padding) + pallas_call.
# jit'ed so all the parameter packing constant-folds at trace time.
# -----------------------------------------------------------------------------
@functools.partial(
    jax.jit, static_argnames=("num_layers", "num_trees", "tree_dim", "tile_b")
)
def node_model_forward(x, params, *, num_layers, num_trees, tree_dim, tile_b=256):
    B, input_size = x.shape
    H = num_trees * tree_dim
    O = params["w_fc"].shape[1]
    eps = 1e-5

    DEC_PAD = 128
    assert num_trees <= DEC_PAD
    IN_PAD = _round_up(max(input_size, 128), 128)
    O_PAD = _round_up(max(O, 128), 128)

    # --- Fold eval-mode BatchNorm into per-feature scale/shift -------------------
    def fold_bn(gamma, beta, mean, var):
        scale = gamma / jnp.sqrt(var + eps)
        shift = beta - mean * scale
        return scale, shift

    s_in, t_in = fold_bn(params["bn_in_gamma"], params["bn_in_beta"],
                         params["bn_in_mean"], params["bn_in_var"])      # [H]
    s_l, t_l = fold_bn(params["bn_gamma"], params["bn_beta"],
                       params["bn_mean"], params["bn_var"])              # [L, H]

    # --- input projection: fold BN-in scale into weights, pad features -----------
    w_in = params["w_in"] * s_in[None, :]                                # [in, H]
    w_in = jnp.pad(w_in, ((0, IN_PAD - input_size), (0, 0))).astype(jnp.bfloat16)
    b_in = (params["b_in"] * s_in + t_in).reshape(1, H).astype(jnp.float32)

    # --- per-layer fused decision+leaf weights (BN scale folded into leaf) -------
    w_dec = jnp.pad(params["w_dec"], ((0, 0), (0, 0), (0, DEC_PAD - num_trees)))
    b_dec = jnp.pad(params["b_dec"], ((0, 0), (0, DEC_PAD - num_trees)))
    w_leaf = params["w_leaf"] * s_l[:, None, :]                          # [L, H, H]
    b_leaf = params["b_leaf"] * s_l                                      # [L, H]
    w_cat = jnp.concatenate([w_dec, w_leaf], axis=2).astype(jnp.bfloat16)
    b_cat = jnp.concatenate([b_dec, b_leaf], axis=1).reshape(
        num_layers, 1, DEC_PAD + H).astype(jnp.float32)
    bn_shift = t_l.reshape(num_layers, 1, H).astype(jnp.float32)

    # Expansion matrix: dec_rep[:, t*tree_dim + d] = dec[:, t]; zero rows past T.
    expand = jnp.repeat(jnp.eye(num_trees, dtype=jnp.float32), tree_dim, axis=1)
    expand = jnp.pad(expand, ((0, DEC_PAD - num_trees), (0, 0))).astype(jnp.bfloat16)

    # --- head weights -------------------------------------------------------------
    w_extra = params["w_extra"].astype(jnp.bfloat16)
    b_extra = params["b_extra"].reshape(1, H).astype(jnp.float32)
    w_fc = jnp.pad(params["w_fc"], ((0, 0), (0, O_PAD - O))).astype(jnp.bfloat16)
    b_fc = jnp.pad(params["b_fc"], ((0, O_PAD - O),)).reshape(1, O_PAD).astype(jnp.float32)

    # --- batch tiling + padding ----------------------------------------------------
    TB = min(tile_b, _round_up(B, 8))
    B_pad = _round_up(B, TB)
    x_pad = jnp.pad(x, ((0, B_pad - B), (0, IN_PAD - input_size))).astype(jnp.bfloat16)

    inputs = (
        x_pad,
        w_in, b_in,
        w_cat, b_cat, bn_shift,
        expand,
        w_extra, b_extra,
        w_fc, b_fc,
    )

    def const_spec(a):
        nd = a.ndim
        return pl.BlockSpec(a.shape, lambda i, _nd=nd: (0,) * _nd)

    in_specs = [pl.BlockSpec((TB, IN_PAD), lambda i: (i, 0))]            # x: batch-tiled
    in_specs += [const_spec(a) for a in inputs[1:]]                      # weights resident
    out_spec = pl.BlockSpec((TB, O_PAD), lambda i: (i, 0))

    kernel = functools.partial(node_model_kernel, num_layers=num_layers, dec_pad=DEC_PAD)

    out = pl.pallas_call(
        kernel,
        out_shape=jax.ShapeDtypeStruct((B_pad, O_PAD), jnp.float32),
        grid_spec=pltpu.PrefetchScalarGridSpec(
            num_scalar_prefetch=0,
            grid=(B_pad // TB,),
            in_specs=in_specs,
            out_specs=out_spec,
        ),
        compiler_params=pltpu.CompilerParams(
            dimension_semantics=("parallel",),
        ),
    )(*inputs)

    return out[:B, :O]


# -----------------------------------------------------------------------------
# Pure-JAX f32 reference (mirrors the PyTorch forward in eval mode).
# -----------------------------------------------------------------------------
def node_model_reference(x, params, *, num_layers, num_trees, tree_dim):
    eps = 1e-5
    H = num_trees * tree_dim

    def bn(v, gamma, beta, mean, var):
        return (v - mean) / jnp.sqrt(var + eps) * gamma + beta

    h = x @ params["w_in"] + params["b_in"]
    h = bn(h, params["bn_in_gamma"], params["bn_in_beta"],
           params["bn_in_mean"], params["bn_in_var"])
    h = jax.nn.relu(h)
    for l in range(num_layers):
        residual = h
        dec = jax.nn.sigmoid(h @ params["w_dec"][l] + params["b_dec"][l])
        leaf = (h @ params["w_leaf"][l] + params["b_leaf"][l]).reshape(
            h.shape[0], num_trees, tree_dim)
        out = (leaf * dec[:, :, None]).reshape(h.shape[0], H)
        out = bn(out, params["bn_gamma"][l], params["bn_beta"][l],
                 params["bn_mean"][l], params["bn_var"][l])
        h = jax.nn.relu(out + residual)
    e = jax.nn.relu(h @ params["w_extra"] + params["b_extra"])
    return e @ params["w_fc"] + params["b_fc"]


# -----------------------------------------------------------------------------
# Deterministic parameter initialization (PyTorch Linear-style uniform fan-in).
# -----------------------------------------------------------------------------
def init_params(key, *, input_size, output_size, num_layers, num_trees, tree_dim):
    H = num_trees * tree_dim
    keys = iter(jax.random.split(key, 64))

    def linear(kin, kout, fan_in):
        bound = 1.0 / jnp.sqrt(jnp.float32(fan_in))
        w = jax.random.uniform(next(keys), (kin, kout), jnp.float32, -bound, bound)
        b = jax.random.uniform(next(keys), (kout,), jnp.float32, -bound, bound)
        return w, b

    w_in, b_in = linear(input_size, H, input_size)
    w_extra, b_extra = linear(H, H, H)
    w_fc, b_fc = linear(H, output_size, H)

    w_dec, b_dec, w_leaf, b_leaf = [], [], [], []
    for _ in range(num_layers):
        wd, bd = linear(H, num_trees, H)
        wl, bl = linear(H, H, H)
        w_dec.append(wd); b_dec.append(bd); w_leaf.append(wl); b_leaf.append(bl)

    def bn_params(shape):
        gamma = 1.0 + 0.1 * jax.random.normal(next(keys), shape, jnp.float32)
        beta = 0.1 * jax.random.normal(next(keys), shape, jnp.float32)
        mean = 0.1 * jax.random.normal(next(keys), shape, jnp.float32)
        var = 1.0 + 0.1 * jax.random.uniform(next(keys), shape, jnp.float32)
        return gamma, beta, mean, var

    bn_in_gamma, bn_in_beta, bn_in_mean, bn_in_var = bn_params((H,))
    bn_gamma, bn_beta, bn_mean, bn_var = bn_params((num_layers, H))

    return dict(
        w_in=w_in, b_in=b_in,
        bn_in_gamma=bn_in_gamma, bn_in_beta=bn_in_beta,
        bn_in_mean=bn_in_mean, bn_in_var=bn_in_var,
        w_dec=jnp.stack(w_dec), b_dec=jnp.stack(b_dec),
        w_leaf=jnp.stack(w_leaf), b_leaf=jnp.stack(b_leaf),
        bn_gamma=bn_gamma, bn_beta=bn_beta, bn_mean=bn_mean, bn_var=bn_var,
        w_extra=w_extra, b_extra=b_extra,
        w_fc=w_fc, b_fc=b_fc,
    )


if __name__ == "__main__":
    # Shapes consistent with the module defaults; batch chosen to exercise tiling.
    B = 512
    input_size = 16
    output_size = 10
    num_layers = 3
    num_trees = 32
    tree_dim = 8   # hidden_dim = 256

    key = jax.random.PRNGKey(0)
    k_x, k_p = jax.random.split(key)
    x = jax.random.normal(k_x, (B, input_size), jnp.float32)
    params = init_params(
        k_p, input_size=input_size, output_size=output_size,
        num_layers=num_layers, num_trees=num_trees, tree_dim=tree_dim,
    )

    out = node_model_forward(
        x, params, num_layers=num_layers, num_trees=num_trees, tree_dim=tree_dim
    )
    out = jax.block_until_ready(out)

    ref = node_model_reference(
        x, params, num_layers=num_layers, num_trees=num_trees, tree_dim=tree_dim
    )
    assert out.shape == (B, output_size)
    # bf16 MXU operands with f32 accumulation -> relaxed tolerance vs f32 reference.
    assert jnp.allclose(out, ref, atol=5e-2, rtol=5e-2), "mismatch vs JAX reference"

    print("KERNEL_OK")
</pallas_src>

<mosaic_0001>
module attributes {stable_mosaic.version = 11 : i64} {
  func.func @node_model_kernel(%arg0: i32, %arg1: memref<256x128xbf16, #tpu.memory_space<vmem>>, %arg2: memref<128x256xbf16, #tpu.memory_space<vmem>>, %arg3: memref<1x256xf32, #tpu.memory_space<vmem>>, %arg4: memref<3x256x384xbf16, #tpu.memory_space<vmem>>, %arg5: memref<3x1x384xf32, #tpu.memory_space<vmem>>, %arg6: memref<3x1x256xf32, #tpu.memory_space<vmem>>, %arg7: memref<128x256xbf16, #tpu.memory_space<vmem>>, %arg8: memref<256x256xbf16, #tpu.memory_space<vmem>>, %arg9: memref<1x256xf32, #tpu.memory_space<vmem>>, %arg10: memref<256x128xbf16, #tpu.memory_space<vmem>>, %arg11: memref<1x128xf32, #tpu.memory_space<vmem>>, %arg12: memref<256x128xf32, #tpu.memory_space<vmem>>) attributes {dimension_semantics = [#tpu.dimension_semantics<parallel>], iteration_bounds = array<i64: 2>, scalar_prefetch = 0 : i64, scratch_operands = 0 : i64, tpu.core_type = #tpu.core_type<tc>, window_params = [{transform_indices = @transform_0, window_bounds = array<i64: 256, 128>}, {pipeline_mode = #tpu.pipeline_mode<synchronous>, transform_indices = @transform_1, window_bounds = array<i64: 128, 256>}, {pipeline_mode = #tpu.pipeline_mode<synchronous>, transform_indices = @transform_2, window_bounds = array<i64: 1, 256>}, {pipeline_mode = #tpu.pipeline_mode<synchronous>, transform_indices = @transform_3, window_bounds = array<i64: 3, 256, 384>}, {pipeline_mode = #tpu.pipeline_mode<synchronous>, transform_indices = @transform_4, window_bounds = array<i64: 3, 1, 384>}, {pipeline_mode = #tpu.pipeline_mode<synchronous>, transform_indices = @transform_5, window_bounds = array<i64: 3, 1, 256>}, {pipeline_mode = #tpu.pipeline_mode<synchronous>, transform_indices = @transform_6, window_bounds = array<i64: 128, 256>}, {pipeline_mode = #tpu.pipeline_mode<synchronous>, transform_indices = @transform_7, window_bounds = array<i64: 256, 256>}, {pipeline_mode = #tpu.pipeline_mode<synchronous>, transform_indices = @transform_8, window_bounds = array<i64: 1, 256>}, {pipeline_mode = #tpu.pipeline_mode<synchronous>, transform_indices = @transform_9, window_bounds = array<i64: 256, 128>}, {pipeline_mode = #tpu.pipeline_mode<synchronous>, transform_indices = @transform_10, window_bounds = array<i64: 1, 128>}, {transform_indices = @transform_11, window_bounds = array<i64: 256, 128>}]} {
    %c0 = arith.constant 0 : index
    %c0_0 = arith.constant 0 : index
    %0 = vector.load %arg1[%c0, %c0_0] : memref<256x128xbf16, #tpu.memory_space<vmem>>, vector<256x128xbf16>
    %c0_1 = arith.constant 0 : index
    %c0_2 = arith.constant 0 : index
    %1 = vector.load %arg2[%c0_1, %c0_2] : memref<128x256xbf16, #tpu.memory_space<vmem>>, vector<128x256xbf16>
    %cst = arith.constant dense<0.000000e+00> : vector<256x256xf32>
    %2 = tpu.matmul %0, %1, %cst {dimension_numbers = #tpu.dot_dimension_numbers<[1], [0], [0], [1], [0, 0, 1, 1], [], []>} : vector<256x128xbf16>, vector<128x256xbf16>, vector<256x256xf32> -> vector<256x256xf32>
    %c0_3 = arith.constant 0 : index
    %c0_4 = arith.constant 0 : index
    %3 = vector.load %arg3[%c0_3, %c0_4] : memref<1x256xf32, #tpu.memory_space<vmem>>, vector<1x256xf32>
    %4 = vector.broadcast %3 : vector<1x256xf32> to vector<256x256xf32>
    %5 = arith.addf %2, %4 : vector<256x256xf32>
    %cst_5 = arith.constant 0.000000e+00 : f32
    %6 = vector.broadcast %cst_5 : f32 to vector<256x256xf32>
    %7 = arith.maximumf %5, %6 : vector<256x256xf32>
    %c0_6 = arith.constant 0 : index
    %c0_7 = arith.constant 0 : index
    %8 = vector.load %arg7[%c0_6, %c0_7] : memref<128x256xbf16, #tpu.memory_space<vmem>>, vector<128x256xbf16>
    %9 = arith.truncf %7 : vector<256x256xf32> to vector<256x256xbf16>
    %c0_8 = arith.constant 0 : index
    %c0_9 = arith.constant 0 : index
    %c0_10 = arith.constant 0 : index
    %10 = vector.load %arg4[%c0_8, %c0_9, %c0_10] : memref<3x256x384xbf16, #tpu.memory_space<vmem>>, vector<1x256x384xbf16>
    %11 = vector.shape_cast %10 : vector<1x256x384xbf16> to vector<256x384xbf16>
    %cst_11 = arith.constant dense<0.000000e+00> : vector<256x384xf32>
    %12 = tpu.matmul %9, %11, %cst_11 {dimension_numbers = #tpu.dot_dimension_numbers<[1], [0], [0], [1], [0, 0, 1, 1], [], []>} : vector<256x256xbf16>, vector<256x384xbf16>, vector<256x384xf32> -> vector<256x384xf32>
    %c0_12 = arith.constant 0 : index
    %c0_13 = arith.constant 0 : index
    %c0_14 = arith.constant 0 : index
    %13 = vector.load %arg5[%c0_12, %c0_13, %c0_14] : memref<3x1x384xf32, #tpu.memory_space<vmem>>, vector<1x1x384xf32>
    %14 = vector.shape_cast %13 : vector<1x1x384xf32> to vector<1x384xf32>
    %15 = vector.broadcast %14 : vector<1x384xf32> to vector<256x384xf32>
    %16 = arith.addf %12, %15 : vector<256x384xf32>
    %17 = vector.extract_strided_slice %16 {offsets = [0, 0], sizes = [256, 128], strides = [1, 1]} : vector<256x384xf32> to vector<256x128xf32>
    %18 = vector.extract_strided_slice %16 {offsets = [0, 128], sizes = [256, 256], strides = [1, 1]} : vector<256x384xf32> to vector<256x256xf32>
    %19 = arith.negf %17 : vector<256x128xf32>
    %20 = math.exp %19 : vector<256x128xf32>
    %cst_15 = arith.constant 1.000000e+00 : f32
    %21 = vector.broadcast %cst_15 : f32 to vector<256x128xf32>
    %22 = arith.addf %21, %20 : vector<256x128xf32>
    %23 = arith.divf %21, %22 : vector<256x128xf32>
    %24 = arith.truncf %23 : vector<256x128xf32> to vector<256x128xbf16>
    %cst_16 = arith.constant dense<0.000000e+00> : vector<256x256xf32>
    %25 = tpu.matmul %24, %8, %cst_16 {dimension_numbers = #tpu.dot_dimension_numbers<[1], [0], [0], [1], [0, 0, 1, 1], [], []>} : vector<256x128xbf16>, vector<128x256xbf16>, vector<256x256xf32> -> vector<256x256xf32>
    %26 = arith.mulf %18, %25 : vector<256x256xf32>
    %c0_17 = arith.constant 0 : index
    %c0_18 = arith.constant 0 : index
    %c0_19 = arith.constant 0 : index
    %27 = vector.load %arg6[%c0_17, %c0_18, %c0_19] : memref<3x1x256xf32, #tpu.memory_space<vmem>>, vector<1x1x256xf32>
    %28 = vector.shape_cast %27 : vector<1x1x256xf32> to vector<1x256xf32>
    %29 = vector.broadcast %28 : vector<1x256xf32> to vector<256x256xf32>
    %30 = arith.addf %26, %29 : vector<256x256xf32>
    %31 = arith.addf %30, %7 : vector<256x256xf32>
    %cst_20 = arith.constant 0.000000e+00 : f32
    %32 = vector.broadcast %cst_20 : f32 to vector<256x256xf32>
    %33 = arith.maximumf %31, %32 : vector<256x256xf32>
    %34 = arith.truncf %33 : vector<256x256xf32> to vector<256x256xbf16>
    %c1 = arith.constant 1 : index
    %c0_21 = arith.constant 0 : index
    %c0_22 = arith.constant 0 : index
    %35 = vector.load %arg4[%c1, %c0_21, %c0_22] : memref<3x256x384xbf16, #tpu.memory_space<vmem>>, vector<1x256x384xbf16>
    %36 = vector.shape_cast %35 : vector<1x256x384xbf16> to vector<256x384xbf16>
    %cst_23 = arith.constant dense<0.000000e+00> : vector<256x384xf32>
    %37 = tpu.matmul %34, %36, %cst_23 {dimension_numbers = #tpu.dot_dimension_numbers<[1], [0], [0], [1], [0, 0, 1, 1], [], []>} : vector<256x256xbf16>, vector<256x384xbf16>, vector<256x384xf32> -> vector<256x384xf32>
    %c1_24 = arith.constant 1 : index
    %c0_25 = arith.constant 0 : index
    %c0_26 = arith.constant 0 : index
    %38 = vector.load %arg5[%c1_24, %c0_25, %c0_26] : memref<3x1x384xf32, #tpu.memory_space<vmem>>, vector<1x1x384xf32>
    %39 = vector.shape_cast %38 : vector<1x1x384xf32> to vector<1x384xf32>
    %40 = vector.broadcast %39 : vector<1x384xf32> to vector<256x384xf32>
    %41 = arith.addf %37, %40 : vector<256x384xf32>
    %42 = vector.extract_strided_slice %41 {offsets = [0, 0], sizes = [256, 128], strides = [1, 1]} : vector<256x384xf32> to vector<256x128xf32>
    %43 = vector.extract_strided_slice %41 {offsets = [0, 128], sizes = [256, 256], strides = [1, 1]} : vector<256x384xf32> to vector<256x256xf32>
    %44 = arith.negf %42 : vector<256x128xf32>
    %45 = math.exp %44 : vector<256x128xf32>
    %cst_27 = arith.constant 1.000000e+00 : f32
    %46 = vector.broadcast %cst_27 : f32 to vector<256x128xf32>
    %47 = arith.addf %46, %45 : vector<256x128xf32>
    %48 = arith.divf %46, %47 : vector<256x128xf32>
    %49 = arith.truncf %48 : vector<256x128xf32> to vector<256x128xbf16>
    %cst_28 = arith.constant dense<0.000000e+00> : vector<256x256xf32>
    %50 = tpu.matmul %49, %8, %cst_28 {dimension_numbers = #tpu.dot_dimension_numbers<[1], [0], [0], [1], [0, 0, 1, 1], [], []>} : vector<256x128xbf16>, vector<128x256xbf16>, vector<256x256xf32> -> vector<256x256xf32>
    %51 = arith.mulf %43, %50 : vector<256x256xf32>
    %c1_29 = arith.constant 1 : index
    %c0_30 = arith.constant 0 : index
    %c0_31 = arith.constant 0 : index
    %52 = vector.load %arg6[%c1_29, %c0_30, %c0_31] : memref<3x1x256xf32, #tpu.memory_space<vmem>>, vector<1x1x256xf32>
    %53 = vector.shape_cast %52 : vector<1x1x256xf32> to vector<1x256xf32>
    %54 = vector.broadcast %53 : vector<1x256xf32> to vector<256x256xf32>
    %55 = arith.addf %51, %54 : vector<256x256xf32>
    %56 = arith.addf %55, %33 : vector<256x256xf32>
    %cst_32 = arith.constant 0.000000e+00 : f32
    %57 = vector.broadcast %cst_32 : f32 to vector<256x256xf32>
    %58 = arith.maximumf %56, %57 : vector<256x256xf32>
    %59 = arith.truncf %58 : vector<256x256xf32> to vector<256x256xbf16>
    %c2 = arith.constant 2 : index
    %c0_33 = arith.constant 0 : index
    %c0_34 = arith.constant 0 : index
    %60 = vector.load %arg4[%c2, %c0_33, %c0_34] : memref<3x256x384xbf16, #tpu.memory_space<vmem>>, vector<1x256x384xbf16>
    %61 = vector.shape_cast %60 : vector<1x256x384xbf16> to vector<256x384xbf16>
    %cst_35 = arith.constant dense<0.000000e+00> : vector<256x384xf32>
    %62 = tpu.matmul %59, %61, %cst_35 {dimension_numbers = #tpu.dot_dimension_numbers<[1], [0], [0], [1], [0, 0, 1, 1], [], []>} : vector<256x256xbf16>, vector<256x384xbf16>, vector<256x384xf32> -> vector<256x384xf32>
    %c2_36 = arith.constant 2 : index
    %c0_37 = arith.constant 0 : index
    %c0_38 = arith.constant 0 : index
    %63 = vector.load %arg5[%c2_36, %c0_37, %c0_38] : memref<3x1x384xf32, #tpu.memory_space<vmem>>, vector<1x1x384xf32>
    %64 = vector.shape_cast %63 : vector<1x1x384xf32> to vector<1x384xf32>
    %65 = vector.broadcast %64 : vector<1x384xf32> to vector<256x384xf32>
    %66 = arith.addf %62, %65 : vector<256x384xf32>
    %67 = vector.extract_strided_slice %66 {offsets = [0, 0], sizes = [256, 128], strides = [1, 1]} : vector<256x384xf32> to vector<256x128xf32>
    %68 = vector.extract_strided_slice %66 {offsets = [0, 128], sizes = [256, 256], strides = [1, 1]} : vector<256x384xf32> to vector<256x256xf32>
    %69 = arith.negf %67 : vector<256x128xf32>
    %70 = math.exp %69 : vector<256x128xf32>
    %cst_39 = arith.constant 1.000000e+00 : f32
    %71 = vector.broadcast %cst_39 : f32 to vector<256x128xf32>
    %72 = arith.addf %71, %70 : vector<256x128xf32>
    %73 = arith.divf %71, %72 : vector<256x128xf32>
    %74 = arith.truncf %73 : vector<256x128xf32> to vector<256x128xbf16>
    %cst_40 = arith.constant dense<0.000000e+00> : vector<256x256xf32>
    %75 = tpu.matmul %74, %8, %cst_40 {dimension_numbers = #tpu.dot_dimension_numbers<[1], [0], [0], [1], [0, 0, 1, 1], [], []>} : vector<256x128xbf16>, vector<128x256xbf16>, vector<256x256xf32> -> vector<256x256xf32>
    %76 = arith.mulf %68, %75 : vector<256x256xf32>
    %c2_41 = arith.constant 2 : index
    %c0_42 = arith.constant 0 : index
    %c0_43 = arith.constant 0 : index
    %77 = vector.load %arg6[%c2_41, %c0_42, %c0_43] : memref<3x1x256xf32, #tpu.memory_space<vmem>>, vector<1x1x256xf32>
    %78 = vector.shape_cast %77 : vector<1x1x256xf32> to vector<1x256xf32>
    %79 = vector.broadcast %78 : vector<1x256xf32> to vector<256x256xf32>
    %80 = arith.addf %76, %79 : vector<256x256xf32>
    %81 = arith.addf %80, %58 : vector<256x256xf32>
    %cst_44 = arith.constant 0.000000e+00 : f32
    %82 = vector.broadcast %cst_44 : f32 to vector<256x256xf32>
    %83 = arith.maximumf %81, %82 : vector<256x256xf32>
    %84 = arith.truncf %83 : vector<256x256xf32> to vector<256x256xbf16>
    %c0_45 = arith.constant 0 : index
    %c0_46 = arith.constant 0 : index
    %85 = vector.load %arg8[%c0_45, %c0_46] : memref<256x256xbf16, #tpu.memory_space<vmem>>, vector<256x256xbf16>
    %cst_47 = arith.constant dense<0.000000e+00> : vector<256x256xf32>
    %86 = tpu.matmul %84, %85, %cst_47 {dimension_numbers = #tpu.dot_dimension_numbers<[1], [0], [0], [1], [0, 0, 1, 1], [], []>} : vector<256x256xbf16>, vector<256x256xbf16>, vector<256x256xf32> -> vector<256x256xf32>
    %c0_48 = arith.constant 0 : index
    %c0_49 = arith.constant 0 : index
    %87 = vector.load %arg9[%c0_48, %c0_49] : memref<1x256xf32, #tpu.memory_space<vmem>>, vector<1x256xf32>
    %88 = vector.broadcast %87 : vector<1x256xf32> to vector<256x256xf32>
    %89 = arith.addf %86, %88 : vector<256x256xf32>
    %cst_50 = arith.constant 0.000000e+00 : f32
    %90 = vector.broadcast %cst_50 : f32 to vector<256x256xf32>
    %91 = arith.maximumf %89, %90 : vector<256x256xf32>
    %92 = arith.truncf %91 : vector<256x256xf32> to vector<256x256xbf16>
    %c0_51 = arith.constant 0 : index
    %c0_52 = arith.constant 0 : index
    %93 = vector.load %arg10[%c0_51, %c0_52] : memref<256x128xbf16, #tpu.memory_space<vmem>>, vector<256x128xbf16>
    %cst_53 = arith.constant dense<0.000000e+00> : vector<256x128xf32>
    %94 = tpu.matmul %92, %93, %cst_53 {dimension_numbers = #tpu.dot_dimension_numbers<[1], [0], [0], [1], [0, 0, 1, 1], [], []>} : vector<256x256xbf16>, vector<256x128xbf16>, vector<256x128xf32> -> vector<256x128xf32>
    %c0_54 = arith.constant 0 : index
    %c0_55 = arith.constant 0 : index
    %95 = vector.load %arg11[%c0_54, %c0_55] : memref<1x128xf32, #tpu.memory_space<vmem>>, vector<1x128xf32>
    %96 = vector.broadcast %95 : vector<1x128xf32> to vector<256x128xf32>
    %97 = arith.addf %94, %96 : vector<256x128xf32>
    %c0_56 = arith.constant 0 : index
    %c0_57 = arith.constant 0 : index
    %98 = vector.load %arg12[%c0_56, %c0_57] : memref<256x128xf32, #tpu.memory_space<vmem>>, vector<256x128xf32>
    tpu.vector_store %arg12[%c0_56, %c0_57], %97 {strides = array<i32>} : memref<256x128xf32, #tpu.memory_space<vmem>>, vector<256x128xf32>,
    return
  }
  func.func @transform_0(%arg0: i32) -> (i32, i32) {
    %c0_i32 = arith.constant 0 : i32
    %c0_i32_0 = arith.constant 0 : i32
    return %arg0, %c0_i32 : i32, i32
  }
  func.func @transform_1(%arg0: i32) -> (i32, i32) {
    %c0_i32 = arith.constant 0 : i32
    %c0_i32_0 = arith.constant 0 : i32
    %c0_i32_1 = arith.constant 0 : i32
    return %c0_i32, %c0_i32_0 : i32, i32
  }
  func.func @transform_2(%arg0: i32) -> (i32, i32) {
    %c0_i32 = arith.constant 0 : i32
    %c0_i32_0 = arith.constant 0 : i32
    %c0_i32_1 = arith.constant 0 : i32
    return %c0_i32, %c0_i32_0 : i32, i32
  }
  func.func @transform_3(%arg0: i32) -> (i32, i32, i32) {
    %c0_i32 = arith.constant 0 : i32
    %c0_i32_0 = arith.constant 0 : i32
    %c0_i32_1 = arith.constant 0 : i32
    %c0_i32_2 = arith.constant 0 : i32
    return %c0_i32, %c0_i32_0, %c0_i32_1 : i32, i32, i32
  }
  func.func @transform_4(%arg0: i32) -> (i32, i32, i32) {
    %c0_i32 = arith.constant 0 : i32
    %c0_i32_0 = arith.constant 0 : i32
    %c0_i32_1 = arith.constant 0 : i32
    %c0_i32_2 = arith.constant 0 : i32
    return %c0_i32, %c0_i32_0, %c0_i32_1 : i32, i32, i32
  }
  func.func @transform_5(%arg0: i32) -> (i32, i32, i32) {
    %c0_i32 = arith.constant 0 : i32
    %c0_i32_0 = arith.constant 0 : i32
    %c0_i32_1 = arith.constant 0 : i32
    %c0_i32_2 = arith.constant 0 : i32
    return %c0_i32, %c0_i32_0, %c0_i32_1 : i32, i32, i32
  }
  func.func @transform_6(%arg0: i32) -> (i32, i32) {
    %c0_i32 = arith.constant 0 : i32
    %c0_i32_0 = arith.constant 0 : i32
    %c0_i32_1 = arith.constant 0 : i32
    return %c0_i32, %c0_i32_0 : i32, i32
  }
  func.func @transform_7(%arg0: i32) -> (i32, i32) {
    %c0_i32 = arith.constant 0 : i32
    %c0_i32_0 = arith.constant 0 : i32
    %c0_i32_1 = arith.constant 0 : i32
    return %c0_i32, %c0_i32_0 : i32, i32
  }
  func.func @transform_8(%arg0: i32) -> (i32, i32) {
    %c0_i32 = arith.constant 0 : i32
    %c0_i32_0 = arith.constant 0 : i32
    %c0_i32_1 = arith.constant 0 : i32
    return %c0_i32, %c0_i32_0 : i32, i32
  }
  func.func @transform_9(%arg0: i32) -> (i32, i32) {
    %c0_i32 = arith.constant 0 : i32
    %c0_i32_0 = arith.constant 0 : i32
    %c0_i32_1 = arith.constant 0 : i32
    return %c0_i32, %c0_i32_0 : i32, i32
  }
  func.func @transform_10(%arg0: i32) -> (i32, i32) {
    %c0_i32 = arith.constant 0 : i32
    %c0_i32_0 = arith.constant 0 : i32
    %c0_i32_1 = arith.constant 0 : i32
    return %c0_i32, %c0_i32_0 : i32, i32
  }
  func.func @transform_11(%arg0: i32) -> (i32, i32) {
    %c0_i32 = arith.constant 0 : i32
    %c0_i32_0 = arith.constant 0 : i32
    return %arg0, %c0_i32 : i32, i32
  }
}

</mosaic_0001>

<llo_original>
// kernel: mul.23
$region0: #{mul.23}
  #allocation0 [shape = 's32[1]{0}', space=sflag, size = 0x4, scoped, tag = 'scoped memory for mul.23']
  %s0 = inlined_call_operand.vmem [shape: f32[3,256], index: 0, kind: input, shape index: {}]
  %s1 = inlined_call_operand.vmem [shape: f32[3,256], index: 1, kind: input, shape index: {}]
  %s2 = inlined_call_operand.vmem [shape: f32[3,256], index: 2, kind: output, shape index: {}]
  %v3 = vld [vmem:[%s0] sm:$0x7]
  %v4 = vld [vmem:[%s1] sm:$0x7]
  %5 = xla_tuple %v3, %v4
  %6 = xla_tuple %5
  %v7 = vmul.f32 %v3, %v4
  %8 = xla_tuple %v7
  %9 = vst [vmem:[%s2] sm:$0xf] %v7
  %s10 = scalar_lea.vmem %s0, 4
  %v11 = vld [vmem:[%s10] sm:$0x7]
  %s12 = scalar_lea.vmem %s1, 4
  %v13 = vld [vmem:[%s12] sm:$0x7]
  %14 = xla_tuple %v11, %v13
  %15 = xla_tuple %14
  %v16 = vmul.f32 %v11, %v13
  %17 = xla_tuple %v16
  %s18 = scalar_lea.vmem %s2, 4
  %19 = vst [vmem:[%s18] sm:$0xf] %v16

// kernel: node_model_forward.1
$region0: #{node_model_forward.1}
  #allocation0 [shape = 'u32[]', space=smem, size = 0x4, offset = 0x4, fixed_abs, tag = 'smem constant byte address 0x4 - core index']
  #allocation1 [shape = 'u32[144,128]{1,0:T(1,128)}', space=vmem, size = 0x12000, scoped, tag = 'internal scratch']
  %s0 = inlined_call_operand.vmem [shape: bf16[512,128], index: 0, kind: input, shape index: {}]
  %s1 = inlined_call_operand.vmem [shape: bf16[128,256], index: 1, kind: input, shape index: {}]
  %s2 = inlined_call_operand.vmem [shape: f32[1,256], index: 2, kind: input, shape index: {}]
  %s3 = inlined_call_operand.vmem [shape: bf16[3,256,384], index: 3, kind: input, shape index: {}]
  %s4 = inlined_call_operand.vmem [shape: f32[3,1,384], index: 4, kind: input, shape index: {}]
  %s5 = inlined_call_operand.vmem [shape: f32[3,1,256], index: 5, kind: input, shape index: {}]
  %s6 = inlined_call_operand.vmem [shape: bf16[128,256], index: 6, kind: input, shape index: {}]
  %s7 = inlined_call_operand.vmem [shape: bf16[256,256], index: 7, kind: input, shape index: {}]
  %s8 = inlined_call_operand.vmem [shape: f32[1,256], index: 8, kind: input, shape index: {}]
  %s9 = inlined_call_operand.vmem [shape: bf16[256,128], index: 9, kind: input, shape index: {}]
  %s10 = inlined_call_operand.vmem [shape: f32[1,128], index: 10, kind: input, shape index: {}]
  %s11 = inlined_call_operand.vmem [shape: f32[512,128], index: 11, kind: output, shape index: {}]
  %s12 = sld [smem:[#allocation0]]
  $region77: #{node_model_forward.1} parent=0
    _
  %s14 = ssub.s32 1, %s12
  %s15 = scalar_select 0, %s14, %s12
  loop: start=0, step=1, limit=4
  $region2: #{node_model_forward.1} parent=0 // loop_pre_header
    _
  $region3: #{node_model_forward.1} parent=0 // loop_header
    %s17 = sphi 0, %s21
    %p18 = scmp.ge.s32.totalorder %s17, 4
    %s27 = sphi 0, %s29
    %s30 = sphi 0, %s27
    %s31 = sphi 0, %s30
    %s47 = sphi 0, %s31
    %s51 = sphi 0, %s51
    %s53 = sphi 0, %s51
    %s54 = sphi 0, %s53
    %s68 = sphi 0, %s54
    %s72 = sphi 0, %s72
    %s74 = sphi 0, %s72
    %s75 = sphi 0, %s74
    %s89 = sphi 0, %s75
    %s93 = sphi 0, %s93
    %s95 = sphi 0, %s93
    %s96 = sphi 0, %s95
    %s110 = sphi 0, %s96
    %s114 = sphi 0, %s114
    %s116 = sphi 0, %s114
    %s117 = sphi 0, %s116
    %s131 = sphi 0, %s117
    %s135 = sphi 0, %s135
    %s137 = sphi 0, %s135
    %s138 = sphi 0, %s137
    %s152 = sphi 0, %s138
    %s156 = sphi 0, %s156
    %s158 = sphi 0, %s156
    %s159 = sphi 0, %s158
    %s173 = sphi 0, %s159
    %s177 = sphi 0, %s177
    %s179 = sphi 0, %s177
    %s180 = sphi 0, %s179
    %s194 = sphi 0, %s180
    %s198 = sphi 0, %s198
    %s200 = sphi 0, %s198
    %s201 = sphi 0, %s200
    %s215 = sphi 0, %s201
    %s219 = sphi 0, %s219
    %s221 = sphi 0, %s219
    %s222 = sphi 0, %s221
    %s236 = sphi 0, %s222
    %s240 = sphi 0, %s240
    %s242 = sphi 0, %s240
    %s243 = sphi 0, %s242
    %s257 = sphi 0, %s243
    %s263 = sphi 0, %s265
    %s266 = sphi 0, %s263
    %s267 = sphi 0, %s266
    %s283 = sphi 0, %s267
  $region4: #{node_model_forward.1} parent=0 // loop_header_branch
    %20 = sbr.rel (%p18) target = $region8
  $region5: #{node_model_forward.1} parent=0 // loop_body
    %s22 = ssub.s32 %s17, 1
    %s23 = ssub.s32 %s17, 2
    %s24 = sadd.s32 %s17, 1
    %s25 = ssub.s32 %s17, %s24
    %p26 = scmp.eq.s32.totalorder %s25, 0
    %s28 = sadd.s32 %s27, 1
    %s29 = scalar_select %p26, %s27, %s28
    %p32 = pneg %p26
    %p33 = scmp.eq.s32.totalorder %s17, 1
    %p34 = por %p32, %p33
    %p35 = scmp.ne.s32.totalorder %s27, %s30
    %p36 = scmp.eq.s32.totalorder %s17, 0
    %p37 = por %p35, %p36
    %p38 = scmp.ne.s32.totalorder %s27, %s30
    %p39 = scmp.eq.s32.totalorder %s22, 1
    %p40 = por %p38, %p39
    %p41 = scmp.ne.s32.totalorder %s30, %s31
    %p42 = scmp.eq.s32.totalorder %s22, 0
    %p43 = por %p41, %p42
    %p44 = scmp.ne.s32.totalorder %s30, %s31
    %p45 = scmp.eq.s32.totalorder %s23, 1
    %p46 = por %p44, %p45
    %p48 = scmp.ne.s32.totalorder %s31, %s47
    %p49 = scmp.eq.s32.totalorder %s23, 0
    %p50 = por %p48, %p49
    %s52 = sadd.s32 %s51, 1
    %p55 = scmp.eq.s32.totalorder %s17, 1
    %p56 = scmp.ne.s32.totalorder %s51, %s53
    %p57 = scmp.eq.s32.totalorder %s17, 0
    %p58 = por %p56, %p57
    %p59 = scmp.ne.s32.totalorder %s51, %s53
    %p60 = scmp.eq.s32.totalorder %s22, 1
    %p61 = por %p59, %p60
    %p62 = scmp.ne.s32.totalorder %s53, %s54
    %p63 = scmp.eq.s32.totalorder %s22, 0
    %p64 = por %p62, %p63
    %p65 = scmp.ne.s32.totalorder %s53, %s54
    %p66 = scmp.eq.s32.totalorder %s23, 1
    %p67 = por %p65, %p66
    %p69 = scmp.ne.s32.totalorder %s54, %s68
    %p70 = scmp.eq.s32.totalorder %s23, 0
    %p71 = por %p69, %p70
    %s73 = sadd.s32 %s72, 1
    %p76 = scmp.eq.s32.totalorder %s17, 1
    %p77 = scmp.ne.s32.totalorder %s72, %s74
    %p78 = scmp.eq.s32.totalorder %s17, 0
    %p79 = por %p77, %p78
    %p80 = scmp.ne.s32.totalorder %s72, %s74
    %p81 = scmp.eq.s32.totalorder %s22, 1
    %p82 = por %p80, %p81
    %p83 = scmp.ne.s32.totalorder %s74, %s75
    %p84 = scmp.eq.s32.totalorder %s22, 0
    %p85 = por %p83, %p84
    %p86 = scmp.ne.s32.totalorder %s74, %s75
    %p87 = scmp.eq.s32.totalorder %s23, 1
    %p88 = por %p86, %p87
    %p90 = scmp.ne.s32.totalorder %s75, %s89
    %p91 = scmp.eq.s32.totalorder %s23, 0
    %p92 = por %p90, %p91
    %s94 = sadd.s32 %s93, 1
    %p97 = scmp.eq.s32.totalorder %s17, 1
    %p98 = scmp.ne.s32.totalorder %s93, %s95
    %p99 = scmp.eq.s32.totalorder %s17, 0
    %p100 = por %p98, %p99
    %p101 = scmp.ne.s32.totalorder %s93, %s95
    %p102 = scmp.eq.s32.totalorder %s22, 1
    %p103 = por %p101, %p102
    %p104 = scmp.ne.s32.totalorder %s95, %s96
    %p105 = scmp.eq.s32.totalorder %s22, 0
    %p106 = por %p104, %p105
    %p107 = scmp.ne.s32.totalorder %s95, %s96
    %p108 = scmp.eq.s32.totalorder %s23, 1
    %p109 = por %p107, %p108
    %p111 = scmp.ne.s32.totalorder %s96, %s110
    %p112 = scmp.eq.s32.totalorder %s23, 0
    %p113 = por %p111, %p112
    %s115 = sadd.s32 %s114, 1
    %p118 = scmp.eq.s32.totalorder %s17, 1
    %p119 = scmp.ne.s32.totalorder %s114, %s116
    %p120 = scmp.eq.s32.totalorder %s17, 0
    %p121 = por %p119, %p120
    %p122 = scmp.ne.s32.totalorder %s114, %s116
    %p123 = scmp.eq.s32.totalorder %s22, 1
    %p124 = por %p122, %p123
    %p125 = scmp.ne.s32.totalorder %s116, %s117
    %p126 = scmp.eq.s32.totalorder %s22, 0
    %p127 = por %p125, %p126
    %p128 = scmp.ne.s32.totalorder %s116, %s117
    %p129 = scmp.eq.s32.totalorder %s23, 1
    %p130 = por %p128, %p129
    %p132 = scmp.ne.s32.totalorder %s117, %s131
    %p133 = scmp.eq.s32.totalorder %s23, 0
    %p134 = por %p132, %p133
    %s136 = sadd.s32 %s135, 1
    %p139 = scmp.eq.s32.totalorder %s17, 1
    %p140 = scmp.ne.s32.totalorder %s135, %s137
    %p141 = scmp.eq.s32.totalorder %s17, 0
    %p142 = por %p140, %p141
    %p143 = scmp.ne.s32.totalorder %s135, %s137
    %p144 = scmp.eq.s32.totalorder %s22, 1
    %p145 = por %p143, %p144
    %p146 = scmp.ne.s32.totalorder %s137, %s138
    %p147 = scmp.eq.s32.totalorder %s22, 0
    %p148 = por %p146, %p147
    %p149 = scmp.ne.s32.totalorder %s137, %s138
    %p150 = scmp.eq.s32.totalorder %s23, 1
    %p151 = por %p149, %p150
    %p153 = scmp.ne.s32.totalorder %s138, %s152
    %p154 = scmp.eq.s32.totalorder %s23, 0
    %p155 = por %p153, %p154
    %s157 = sadd.s32 %s156, 1
    %p160 = scmp.eq.s32.totalorder %s17, 1
    %p161 = scmp.ne.s32.totalorder %s156, %s158
    %p162 = scmp.eq.s32.totalorder %s17, 0
    %p163 = por %p161, %p162
    %p164 = scmp.ne.s32.totalorder %s156, %s158
    %p165 = scmp.eq.s32.totalorder %s22, 1
    %p166 = por %p164, %p165
    %p167 = scmp.ne.s32.totalorder %s158, %s159
    %p168 = scmp.eq.s32.totalorder %s22, 0
    %p169 = por %p167, %p168
    %p170 = scmp.ne.s32.totalorder %s158, %s159
    %p171 = scmp.eq.s32.totalorder %s23, 1
    %p172 = por %p170, %p171
    %p174 = scmp.ne.s32.totalorder %s159, %s173
    %p175 = scmp.eq.s32.totalorder %s23, 0
    %p176 = por %p174, %p175
    %s178 = sadd.s32 %s177, 1
    %p181 = scmp.eq.s32.totalorder %s17, 1
    %p182 = scmp.ne.s32.totalorder %s177, %s179
    %p183 = scmp.eq.s32.totalorder %s17, 0
    %p184 = por %p182, %p183
    %p185 = scmp.ne.s32.totalorder %s177, %s179
    %p186 = scmp.eq.s32.totalorder %s22, 1
    %p187 = por %p185, %p186
    %p188 = scmp.ne.s32.totalorder %s179, %s180
    %p189 = scmp.eq.s32.totalorder %s22, 0
    %p190 = por %p188, %p189
    %p191 = scmp.ne.s32.totalorder %s179, %s180
    %p192 = scmp.eq.s32.totalorder %s23, 1
    %p193 = por %p191, %p192
    %p195 = scmp.ne.s32.totalorder %s180, %s194
    %p196 = scmp.eq.s32.totalorder %s23, 0
    %p197 = por %p195, %p196
    %s199 = sadd.s32 %s198, 1
    %p202 = scmp.eq.s32.totalorder %s17, 1
    %p203 = scmp.ne.s32.totalorder %s198, %s200
    %p204 = scmp.eq.s32.totalorder %s17, 0
    %p205 = por %p203, %p204
    %p206 = scmp.ne.s32.totalorder %s198, %s200
    %p207 = scmp.eq.s32.totalorder %s22, 1
    %p208 = por %p206, %p207
    %p209 = scmp.ne.s32.totalorder %s200, %s201
    %p210 = scmp.eq.s32.totalorder %s22, 0
    %p211 = por %p209, %p210
    %p212 = scmp.ne.s32.totalorder %s200, %s201
    %p213 = scmp.eq.s32.totalorder %s23, 1
    %p214 = por %p212, %p213
    %p216 = scmp.ne.s32.totalorder %s201, %s215
    %p217 = scmp.eq.s32.totalorder %s23, 0
    %p218 = por %p216, %p217
    %s220 = sadd.s32 %s219, 1
    %p223 = scmp.eq.s32.totalorder %s17, 1
    %p224 = scmp.ne.s32.totalorder %s219, %s221
    %p225 = scmp.eq.s32.totalorder %s17, 0
    %p226 = por %p224, %p225
    %p227 = scmp.ne.s32.totalorder %s219, %s221
    %p228 = scmp.eq.s32.totalorder %s22, 1
    %p229 = por %p227, %p228
    %p230 = scmp.ne.s32.totalorder %s221, %s222
    %p231 = scmp.eq.s32.totalorder %s22, 0
    %p232 = por %p230, %p231
    %p233 = scmp.ne.s32.totalorder %s221, %s222
    %p234 = scmp.eq.s32.totalorder %s23, 1
    %p235 = por %p233, %p234
    %p237 = scmp.ne.s32.totalorder %s222, %s236
    %p238 = scmp.eq.s32.totalorder %s23, 0
    %p239 = por %p237, %p238
    %s241 = sadd.s32 %s240, 1
    %p244 = scmp.eq.s32.totalorder %s17, 1
    %p245 = scmp.ne.s32.totalorder %s240, %s242
    %p246 = scmp.eq.s32.totalorder %s17, 0
    %p247 = por %p245, %p246
    %p248 = scmp.ne.s32.totalorder %s240, %s242
    %p249 = scmp.eq.s32.totalorder %s22, 1
    %p250 = por %p248, %p249
    %p251 = scmp.ne.s32.totalorder %s242, %s243
    %p252 = scmp.eq.s32.totalorder %s22, 0
    %p253 = por %p251, %p252
    %p254 = scmp.ne.s32.totalorder %s242, %s243
    %p255 = scmp.eq.s32.totalorder %s23, 1
    %p256 = por %p254, %p255
    %p258 = scmp.ne.s32.totalorder %s243, %s257
    %p259 = scmp.eq.s32.totalorder %s23, 0
    %p260 = por %p258, %p259
    %s261 = ssub.s32 %s17, %s24
    %p262 = scmp.eq.s32.totalorder %s261, 0
    %s264 = sadd.s32 %s263, 1
    %s265 = scalar_select %p262, %s263, %s264
    %p268 = pneg %p262
    %p269 = scmp.eq.s32.totalorder %s17, 1
    %p270 = por %p268, %p269
    %p271 = scmp.ne.s32.totalorder %s263, %s266
    %p272 = scmp.eq.s32.totalorder %s17, 0
    %p273 = por %p271, %p272
    %p274 = scmp.ne.s32.totalorder %s263, %s266
    %p275 = scmp.eq.s32.totalorder %s22, 1
    %p276 = por %p274, %p275
    %p277 = scmp.ne.s32.totalorder %s266, %s267
    %p278 = scmp.eq.s32.totalorder %s22, 0
    %p279 = por %p277, %p278
    %p280 = scmp.ne.s32.totalorder %s266, %s267
    %p281 = scmp.eq.s32.totalorder %s23, 1
    %p282 = por %p280, %p281
    %p284 = scmp.ne.s32.totalorder %s267, %s283
    %p285 = scmp.eq.s32.totalorder %s23, 0
    %p286 = por %p284, %p285
    %p287 = scmp.le.s32.totalorder 1, %s17
    %p288 = scmp.lt.s32.totalorder %s17, 3
    %p289 = pnand %p287, %p288
    %p290 = pneg %p289
    // Predicated region
    $region9: #{node_model_forward.1} parent=5 // pred_check
      _
    $region10: #{node_model_forward.1} parent=5 // pred_check_branch
      %292 = sbr.rel (%p289) target = $region12
    $region11: #{node_model_forward.1} parent=5 // pred_region
      %s293 = ssub.s32 %s17, 1
      // Predicated region
      $region13: #{node_model_forward.1} parent=11 // pred_check
        %p294 = pneg %p64
      $region14: #{node_model_forward.1} parent=11 // pred_check_branch
        %296 = sbr.rel (%p294) target = $region16
      $region15: #{node_model_forward.1} parent=11 // pred_region
        _
      $region16: #{node_model_forward.1} parent=11 // pred_fallthru
        _
      // Predicated region
      $region17: #{node_model_forward.1} parent=11 // pred_check
        %p297 = pneg %p85
      $region18: #{node_model_forward.1} parent=11 // pred_check_branch
        %299 = sbr.rel (%p297) target = $region20
      $region19: #{node_model_forward.1} parent=11 // pred_region
        _
      $region20: #{node_model_forward.1} parent=11 // pred_fallthru
        _
      // Predicated region
      $region21: #{node_model_forward.1} parent=11 // pred_check
        %p300 = pneg %p106
      $region22: #{node_model_forward.1} parent=11 // pred_check_branch
        %302 = sbr.rel (%p300) target = $region24
      $region23: #{node_model_forward.1} parent=11 // pred_region
        _
      $region24: #{node_model_forward.1} parent=11 // pred_fallthru
        _
      // Predicated region
      $region25: #{node_model_forward.1} parent=11 // pred_check
        %p303 = pneg %p127
      $region26: #{node_model_forward.1} parent=11 // pred_check_branch
        %305 = sbr.rel (%p303) target = $region28
      $region27: #{node_model_forward.1} parent=11 // pred_region
        _
      $region28: #{node_model_forward.1} parent=11 // pred_fallthru
        _
      // Predicated region
      $region29: #{node_model_forward.1} parent=11 // pred_check
        %p306 = pneg %p148
      $region30: #{node_model_forward.1} parent=11 // pred_check_branch
        %308 = sbr.rel (%p306) target = $region32
      $region31: #{node_model_forward.1} parent=11 // pred_region
        _
      $region32: #{node_model_forward.1} parent=11 // pred_fallthru
        _
      // Predicated region
      $region33: #{node_model_forward.1} parent=11 // pred_check
        %p309 = pneg %p169
      $region34: #{node_model_forward.1} parent=11 // pred_check_branch
        %311 = sbr.rel (%p309) target = $region36
      $region35: #{node_model_forward.1} parent=11 // pred_region
        _
      $region36: #{node_model_forward.1} parent=11 // pred_fallthru
        _
      // Predicated region
      $region37: #{node_model_forward.1} parent=11 // pred_check
        %p312 = pneg %p190
      $region38: #{node_model_forward.1} parent=11 // pred_check_branch
        %314 = sbr.rel (%p312) target = $region40
      $region39: #{node_model_forward.1} parent=11 // pred_region
        _
      $region40: #{node_model_forward.1} parent=11 // pred_fallthru
        _
      // Predicated region
      $region41: #{node_model_forward.1} parent=11 // pred_check
        %p315 = pneg %p211
      $region42: #{node_model_forward.1} parent=11 // pred_check_branch
        %317 = sbr.rel (%p315) target = $region44
      $region43: #{node_model_forward.1} parent=11 // pred_region
        _
      $region44: #{node_model_forward.1} parent=11 // pred_fallthru
        _
      // Predicated region
      $region45: #{node_model_forward.1} parent=11 // pred_check
        %p318 = pneg %p232
      $region46: #{node_model_forward.1} parent=11 // pred_check_branch
        %320 = sbr.rel (%p318) target = $region48
      $region47: #{node_model_forward.1} parent=11 // pred_region
        _
      $region48: #{node_model_forward.1} parent=11 // pred_fallthru
        _
      // Predicated region
      $region49: #{node_model_forward.1} parent=11 // pred_check
        %p321 = pneg %p253
      $region50: #{node_model_forward.1} parent=11 // pred_check_branch
        %323 = sbr.rel (%p321) target = $region52
      $region51: #{node_model_forward.1} parent=11 // pred_region
        _
      $region52: #{node_model_forward.1} parent=11 // pred_fallthru
        _
    $region12: #{node_model_forward.1} parent=5 // pred_fallthru
      _
    %p324 = scmp.lt.s32.totalorder %s17, 2
    // Predicated region
    $region53: #{node_model_forward.1} parent=5 // pred_check
      %p325 = pneg %p324
    $region54: #{node_model_forward.1} parent=5 // pred_check_branch
      %327 = sbr.rel (%p325) target = $region56
    $region55: #{node_model_forward.1} parent=5 // pred_region
      // Predicated region
      $region57: #{node_model_forward.1} parent=55 // pred_check
        %p328 = pneg %p37
      $region58: #{node_model_forward.1} parent=55 // pred_check_branch
        %330 = sbr.rel (%p328) target = $region60
      $region59: #{node_model_forward.1} parent=55 // pred_region
        %s331 = smul.u32 32, %s17
        %p332 = scmp.lt.s32.totalorder %s331, 63
        %s333 = scalar_select %p332, %s331, 63
        %s334 = smul.addr %s333, 4
        %s335 = scalar_lea.vmem %s0, %s334
        %s336 = smul.u32 32, %s17
      $region60: #{node_model_forward.1} parent=55 // pred_fallthru
        _
    $region56: #{node_model_forward.1} parent=5 // pred_fallthru
      _
    %p337 = scmp.le.s32.totalorder 1, %s17
    %p338 = scmp.lt.s32.totalorder %s17, 3
    %p339 = pnand %p337, %p338
    %p340 = pneg %p339
    // Predicated region
    $region61: #{node_model_forward.1} parent=5 // pred_check
      _
    $region62: #{node_model_forward.1} parent=5 // pred_check_branch
      %342 = sbr.rel (%p339) target = $region64
    $region63: #{node_model_forward.1} parent=5 // pred_region
      %s343 = ssub.s32 %s17, 1
      %s344 = smul.u32 32, %s22
      %p345 = scmp.lt.s32.totalorder %s344, 63
      %s346 = scalar_select %p345, %s344, 63
      %s347 = smul.addr %s346, 4
      %s348 = scalar_lea.vmem %s0, %s347
      %p349 = pneg %p43
      %p350 = pneg %p40
      %p351 = pneg %p64
      %p352 = pneg %p61
      %p353 = pneg %p85
      %p354 = pneg %p82
      %p355 = pneg %p106
      %p356 = pneg %p103
      %p357 = pneg %p127
      %p358 = pneg %p124
      %p359 = pneg %p148
      %p360 = pneg %p145
      %p361 = pneg %p169
      %p362 = pneg %p166
      %p363 = pneg %p190
      %p364 = pneg %p187
      %p365 = pneg %p211
      %p366 = pneg %p208
      %p367 = pneg %p232
      %p368 = pneg %p229
      %p369 = pneg %p253
      %p370 = pneg %p250
      %p371 = pneg %p279
      %p372 = pneg %p276
      %s373 = smul.u32 32, %s22
      %p374 = scmp.lt.s32.totalorder %s373, 63
      %s375 = scalar_select %p374, %s373, 63
      %s376 = smul.addr %s375, 8
      %s377 = scalar_lea.vmem %s11, %s376
      %s378 = smul.u32 32, %s22
      %p379 = scmp.lt.s32.totalorder %s378, 63
      %s380 = scalar_select %p379, %s378, 63
      %s381 = smul.addr %s380, 4
      %s382 = scalar_lea.vmem %s0, %s381
      %s383 = smul.u32 32, %s22
      %s384 = smul.u32 32, %s22
      %p385 = scmp.lt.s32.totalorder %s384, 63
      %s386 = scalar_select %p385, %s384, 63
      %s387 = smul.addr %s386, 8
      %s388 = scalar_lea.vmem %s11, %s387
      %s389 = smul.u32 32, %s22
      %v391 = vld [vmem:[%s382] sm:$0xf]
      %v392 = vld [vmem:[%s382 + $0x4] sm:$0xf]
      %v393 = vld [vmem:[%s382 + $0x8] sm:$0xf]
      %v394 = vld [vmem:[%s382 + $0xc] sm:$0xf]
      %v395 = vld [vmem:[%s382 + $0x10] sm:$0xf]
      %v396 = vld [vmem:[%s382 + $0x14] sm:$0xf]
      %v397 = vld [vmem:[%s382 + $0x18] sm:$0xf]
      %v398 = vld [vmem:[%s382 + $0x1c] sm:$0xf]
      %v399 = vld [vmem:[%s382 + $0x20] sm:$0xf]
      %v400 = vld [vmem:[%s382 + $0x24] sm:$0xf]
      %v401 = vld [vmem:[%s382 + $0x28] sm:$0xf]
      %v402 = vld [vmem:[%s382 + $0x2c] sm:$0xf]
      %v403 = vld [vmem:[%s382 + $0x30] sm:$0xf]
      %v404 = vld [vmem:[%s382 + $0x34] sm:$0xf]
      %v405 = vld [vmem:[%s382 + $0x38] sm:$0xf]
      %v406 = vld [vmem:[%s382 + $0x3c] sm:$0xf]
      %v407 = vld [vmem:[%s382 + $0x40] sm:$0xf]
      %v408 = vld [vmem:[%s382 + $0x44] sm:$0xf]
      %v409 = vld [vmem:[%s382 + $0x48] sm:$0xf]
      %v410 = vld [vmem:[%s382 + $0x4c] sm:$0xf]
      %v411 = vld [vmem:[%s382 + $0x50] sm:$0xf]
      %v412 = vld [vmem:[%s382 + $0x54] sm:$0xf]
      %v413 = vld [vmem:[%s382 + $0x58] sm:$0xf]
      %v414 = vld [vmem:[%s382 + $0x5c] sm:$0xf]
      %v415 = vld [vmem:[%s382 + $0x60] sm:$0xf]
      %v416 = vld [vmem:[%s382 + $0x64] sm:$0xf]
      %v417 = vld [vmem:[%s382 + $0x68] sm:$0xf]
      %v418 = vld [vmem:[%s382 + $0x6c] sm:$0xf]
      %v419 = vld [vmem:[%s382 + $0x70] sm:$0xf]
      %v420 = vld [vmem:[%s382 + $0x74] sm:$0xf]
      %v421 = vld [vmem:[%s382 + $0x78] sm:$0xf]
      %v422 = vld [vmem:[%s382 + $0x7c] sm:$0xf]
      %v423 = vld [vmem:[%s1] sm:$0xff]
      %v424 = vld [vmem:[%s1 + $0x8] sm:$0xff]
      %v425 = vld [vmem:[%s1 + $0x10] sm:$0xff]
      %v426 = vld [vmem:[%s1 + $0x18] sm:$0xff]
      %v427 = vld [vmem:[%s1 + $0x20] sm:$0xff]
      %v428 = vld [vmem:[%s1 + $0x28] sm:$0xff]
      %v429 = vld [vmem:[%s1 + $0x30] sm:$0xff]
      %v430 = vld [vmem:[%s1 + $0x38] sm:$0xff]
      %v431 = vld [vmem:[%s1 + $0x40] sm:$0xff]
      %v432 = vld [vmem:[%s1 + $0x48] sm:$0xff]
      %v433 = vld [vmem:[%s1 + $0x50] sm:$0xff]
      %v434 = vld [vmem:[%s1 + $0x58] sm:$0xff]
      %v435 = vld [vmem:[%s1 + $0x60] sm:$0xff]
      %v436 = vld [vmem:[%s1 + $0x68] sm:$0xff]
      %v437 = vld [vmem:[%s1 + $0x70] sm:$0xff]
      %v438 = vld [vmem:[%s1 + $0x78] sm:$0xff]
      %v439 = vld [vmem:[%s2] sm:$0x3]
      %v441 = vlaneseq
      %v442 = vshrl.u32 %v441, 7
      %v443 = vsub.s32 0, %v442
      %v444 = vrot.slane %v439, %v443
      %v445 = vlaneseq
      %v446 = vshrl.u32 %v445, 7
      %v447 = vsub.s32 1, %v446
      %v448 = vrot.slane %v439, %v447
      %v483 = vunpack.c.l.b16 %v391
      %v484 = vunpack.c.l.b16 %v392
      %v485 = vunpack.c.l.b16 %v393
      %v486 = vunpack.c.l.b16 %v394
      %v487 = vunpack.c.l.b16 %v395
      %v488 = vunpack.c.l.b16 %v396
      %v489 = vunpack.c.l.b16 %v397
      %v490 = vunpack.c.l.b16 %v398
      %v491 = vunpack.c.l.b16 %v399
      %v492 = vunpack.c.l.b16 %v400
      %v493 = vunpack.c.l.b16 %v401
      %v494 = vunpack.c.l.b16 %v402
      %v495 = vunpack.c.l.b16 %v403
      %v496 = vunpack.c.l.b16 %v404
      %v497 = vunpack.c.l.b16 %v405
      %v498 = vunpack.c.l.b16 %v406
      %v499 = vunpack.c.l.b16 %v407
      %v500 = vunpack.c.l.b16 %v408
      %v501 = vunpack.c.l.b16 %v409
      %v502 = vunpack.c.l.b16 %v410
      %v503 = vunpack.c.l.b16 %v411
      %v504 = vunpack.c.l.b16 %v412
      %v505 = vunpack.c.l.b16 %v413
      %v506 = vunpack.c.l.b16 %v414
      %v507 = vunpack.c.l.b16 %v415
      %v508 = vunpack.c.l.b16 %v416
      %v509 = vunpack.c.l.b16 %v417
      %v510 = vunpack.c.l.b16 %v418
      %v511 = vunpack.c.l.b16 %v419
      %v512 = vunpack.c.l.b16 %v420
      %v513 = vunpack.c.l.b16 %v421
      %v514 = vunpack.c.l.b16 %v422
      %v515 = vpack.c.b16 %v484, %v483
      %v516 = vpack.c.b16 %v486, %v485
      %v517 = vpack.c.b16 %v488, %v487
      %v518 = vpack.c.b16 %v490, %v489
      %v519 = vpack.c.b16 %v492, %v491
      %v520 = vpack.c.b16 %v494, %v493
      %v521 = vpack.c.b16 %v496, %v495
      %v522 = vpack.c.b16 %v498, %v497
      %v523 = vpack.c.b16 %v500, %v499
      %v524 = vpack.c.b16 %v502, %v501
      %v525 = vpack.c.b16 %v504, %v503
      %v526 = vpack.c.b16 %v506, %v505
      %v527 = vpack.c.b16 %v508, %v507
      %v528 = vpack.c.b16 %v510, %v509
      %v529 = vpack.c.b16 %v512, %v511
      %v530 = vpack.c.b16 %v514, %v513
      %v563 = vunpack.c.l.b16 %v423
      %v564 = vunpack.c.h.b16 %v423
      %v565 = vunpack.c.l.b16 %v424
      %v566 = vunpack.c.h.b16 %v424
      %v567 = vunpack.c.l.b16 %v425
      %v568 = vunpack.c.h.b16 %v425
      %v569 = vunpack.c.l.b16 %v426
      %v570 = vunpack.c.h.b16 %v426
      %v571 = vunpack.c.l.b16 %v427
      %v572 = vunpack.c.h.b16 %v427
      %v573 = vunpack.c.l.b16 %v428
      %v574 = vunpack.c.h.b16 %v428
      %v575 = vunpack.c.l.b16 %v429
      %v576 = vunpack.c.h.b16 %v429
      %v577 = vunpack.c.l.b16 %v430
      %v578 = vunpack.c.h.b16 %v430
      %v579 = vunpack.c.l.b16 %v431
      %v580 = vunpack.c.h.b16 %v431
      %v581 = vunpack.c.l.b16 %v432
      %v582 = vunpack.c.h.b16 %v432
      %v583 = vunpack.c.l.b16 %v433
      %v584 = vunpack.c.h.b16 %v433
      %v585 = vunpack.c.l.b16 %v434
      %v586 = vunpack.c.h.b16 %v434
      %v587 = vunpack.c.l.b16 %v435
      %v588 = vunpack.c.h.b16 %v435
      %v589 = vunpack.c.l.b16 %v436
      %v590 = vunpack.c.h.b16 %v436
      %v591 = vunpack.c.l.b16 %v437
      %v592 = vunpack.c.h.b16 %v437
      %v593 = vunpack.c.l.b16 %v438
      %v594 = vunpack.c.h.b16 %v438
      %v595 = vpack.c.b16 %v565, %v563
      %v596 = vpack.c.b16 %v566, %v564
      %v597 = vpack.c.b16 %v569, %v567
      %v598 = vpack.c.b16 %v570, %v568
      %v599 = vpack.c.b16 %v573, %v571
      %v600 = vpack.c.b16 %v574, %v572
      %v601 = vpack.c.b16 %v577, %v575
      %v602 = vpack.c.b16 %v578, %v576
      %v603 = vpack.c.b16 %v581, %v579
      %v604 = vpack.c.b16 %v582, %v580
      %v605 = vpack.c.b16 %v585, %v583
      %v606 = vpack.c.b16 %v586, %v584
      %v607 = vpack.c.b16 %v589, %v587
      %v608 = vpack.c.b16 %v590, %v588
      %v609 = vpack.c.b16 %v593, %v591
      %v610 = vpack.c.b16 %v594, %v592
      %627 = vmatprep.subr.bf16.mxu0 %v610
      %628 = vmatpush1.bf16.msra.mxu0 %v609
      %629 = vmatprep.subr.bf16.mxu0 %v608
      %630 = vmatpush1.bf16.msra.mxu0 %v607
      %631 = vmatprep.subr.bf16.mxu0 %v606
      %632 = vmatpush1.bf16.msra.mxu0 %v605
      %633 = vmatprep.subr.bf16.mxu0 %v604
      %634 = vmatpush1.bf16.msra.mxu0 %v603
      %635 = vmatprep.subr.bf16.mxu0 %v602
      %636 = vmatpush1.bf16.msra.mxu0 %v601
      %637 = vmatprep.subr.bf16.mxu0 %v600
      %638 = vmatpush1.bf16.msra.mxu0 %v599
      %639 = vmatprep.subr.bf16.mxu0 %v598
      %640 = vmatpush1.bf16.msra.mxu0 %v597
      %641 = vmatprep.subr.bf16.mxu0 %v596
      %642 = vmatpush1.bf16.msra.mxu0 %v595
      %643 = vmatprep.subr.bf16.mxu0 0
      %644 = vmatpush2.bf16.msra.mxu0 0
      %645 = vmatprep.subr.bf16.mxu0 0
      %646 = vmatpush2.bf16.msra.mxu0 0
      %647 = vmatprep.subr.bf16.mxu0 0
      %648 = vmatpush2.bf16.msra.mxu0 0
      %649 = vmatprep.subr.bf16.mxu0 0
      %650 = vmatpush2.bf16.msra.mxu0 0
      %651 = vmatprep.subr.bf16.mxu0 0
      %652 = vmatpush2.bf16.msra.mxu0 0
      %653 = vmatprep.subr.bf16.mxu0 0
      %654 = vmatpush2.bf16.msra.mxu0 0
      %655 = vmatprep.subr.bf16.mxu0 0
      %656 = vmatpush2.bf16.msra.mxu0 0
      %657 = vmatprep.subr.bf16.mxu0 0
      %658 = vmatpush2.bf16.msra.mxu0 0
      %659 = vmatprep.mubr.bf16.mxu0 0
      %660 = vmatmul.mubr.bf16.gmra.mxu0 %v515
      %v661 = vpop.f32.mrf.mxu0
      %v662 = vadd.f32 %v444, %v661
      %v663 = vpop.f32.mrf.mxu0
      %v664 = vadd.f32 %v448, %v663
      %v665 = vpop.f32.mrf.mxu0
      %v666 = vadd.f32 %v444, %v665
      %v667 = vpop.f32.mrf.mxu0
      %v668 = vadd.f32 %v448, %v667
      %669 = vmatprep.mubr.bf16.mxu0 0
      %670 = vmatmul.mubr.bf16.gmra.mxu0 %v516
      %v671 = vpop.f32.mrf.mxu0
      %v672 = vadd.f32 %v444, %v671
      %v673 = vpop.f32.mrf.mxu0
      %v674 = vadd.f32 %v448, %v673
      %v675 = vpop.f32.mrf.mxu0
      %v676 = vadd.f32 %v444, %v675
      %v677 = vpop.f32.mrf.mxu0
      %v678 = vadd.f32 %v448, %v677
      %679 = vmatprep.mubr.bf16.mxu0 0
      %680 = vmatmul.mubr.bf16.gmra.mxu0 %v517
      %v681 = vpop.f32.mrf.mxu0
      %v682 = vadd.f32 %v444, %v681
      %v683 = vpop.f32.mrf.mxu0
      %v684 = vadd.f32 %v448, %v683
      %v685 = vpop.f32.mrf.mxu0
      %v686 = vadd.f32 %v444, %v685
      %v687 = vpop.f32.mrf.mxu0
      %v688 = vadd.f32 %v448, %v687
      %689 = vmatprep.mubr.bf16.mxu0 0
      %690 = vmatmul.mubr.bf16.gmra.mxu0 %v518
      %v691 = vpop.f32.mrf.mxu0
      %v692 = vadd.f32 %v444, %v691
      %v693 = vpop.f32.mrf.mxu0
      %v694 = vadd.f32 %v448, %v693
      %v695 = vpop.f32.mrf.mxu0
      %v696 = vadd.f32 %v444, %v695
      %v697 = vpop.f32.mrf.mxu0
      %v698 = vadd.f32 %v448, %v697
      %699 = vmatprep.mubr.bf16.mxu0 0
      %700 = vmatmul.mubr.bf16.gmra.mxu0 %v519
      %v701 = vpop.f32.mrf.mxu0
      %v702 = vadd.f32 %v444, %v701
      %v703 = vpop.f32.mrf.mxu0
      %v704 = vadd.f32 %v448, %v703
      %v705 = vpop.f32.mrf.mxu0
      %v706 = vadd.f32 %v444, %v705
      %v707 = vpop.f32.mrf.mxu0
      %v708 = vadd.f32 %v448, %v707
      %709 = vmatprep.mubr.bf16.mxu0 0
      %710 = vmatmul.mubr.bf16.gmra.mxu0 %v520
      %v711 = vpop.f32.mrf.mxu0
      %v712 = vadd.f32 %v444, %v711
      %v713 = vpop.f32.mrf.mxu0
      %v714 = vadd.f32 %v448, %v713
      %v715 = vpop.f32.mrf.mxu0
      %v716 = vadd.f32 %v444, %v715
      %v717 = vpop.f32.mrf.mxu0
      %v718 = vadd.f32 %v448, %v717
      %719 = vmatprep.mubr.bf16.mxu0 0
      %720 = vmatmul.mubr.bf16.gmra.mxu0 %v521
      %v721 = vpop.f32.mrf.mxu0
      %v722 = vadd.f32 %v444, %v721
      %v723 = vpop.f32.mrf.mxu0
      %v724 = vadd.f32 %v448, %v723
      %v725 = vpop.f32.mrf.mxu0
      %v726 = vadd.f32 %v444, %v725
      %v727 = vpop.f32.mrf.mxu0
      %v728 = vadd.f32 %v448, %v727
      %729 = vmatprep.mubr.bf16.mxu0 0
      %730 = vmatmul.mubr.bf16.gmra.mxu0 %v522
      %v731 = vpop.f32.mrf.mxu0
      %v732 = vadd.f32 %v444, %v731
      %v733 = vpop.f32.mrf.mxu0
      %v734 = vadd.f32 %v448, %v733
      %v735 = vpop.f32.mrf.mxu0
      %v736 = vadd.f32 %v444, %v735
      %v737 = vpop.f32.mrf.mxu0
      %v738 = vadd.f32 %v448, %v737
      %739 = vmatprep.mubr.bf16.mxu0 0
      %740 = vmatmul.mubr.bf16.gmra.mxu0 %v523
      %v741 = vpop.f32.mrf.mxu0
      %v742 = vadd.f32 %v444, %v741
      %v743 = vpop.f32.mrf.mxu0
      %v744 = vadd.f32 %v448, %v743
      %v745 = vpop.f32.mrf.mxu0
      %v746 = vadd.f32 %v444, %v745
      %v747 = vpop.f32.mrf.mxu0
      %v748 = vadd.f32 %v448, %v747
      %749 = vmatprep.mubr.bf16.mxu0 0
      %750 = vmatmul.mubr.bf16.gmra.mxu0 %v524
      %v751 = vpop.f32.mrf.mxu0
      %v752 = vadd.f32 %v444, %v751
      %v753 = vpop.f32.mrf.mxu0
      %v754 = vadd.f32 %v448, %v753
      %v755 = vpop.f32.mrf.mxu0
      %v756 = vadd.f32 %v444, %v755
      %v757 = vpop.f32.mrf.mxu0
      %v758 = vadd.f32 %v448, %v757
      %759 = vmatprep.mubr.bf16.mxu0 0
      %760 = vmatmul.mubr.bf16.gmra.mxu0 %v525
      %v761 = vpop.f32.mrf.mxu0
      %v762 = vadd.f32 %v444, %v761
      %v763 = vpop.f32.mrf.mxu0
      %v764 = vadd.f32 %v448, %v763
      %v765 = vpop.f32.mrf.mxu0
      %v766 = vadd.f32 %v444, %v765
      %v767 = vpop.f32.mrf.mxu0
      %v768 = vadd.f32 %v448, %v767
      %769 = vmatprep.mubr.bf16.mxu0 0
      %770 = vmatmul.mubr.bf16.gmra.mxu0 %v526
      %v771 = vpop.f32.mrf.mxu0
      %v772 = vadd.f32 %v444, %v771
      %v773 = vpop.f32.mrf.mxu0
      %v774 = vadd.f32 %v448, %v773
      %v775 = vpop.f32.mrf.mxu0
      %v776 = vadd.f32 %v444, %v775
      %v777 = vpop.f32.mrf.mxu0
      %v778 = vadd.f32 %v448, %v777
      %779 = vmatprep.mubr.bf16.mxu0 0
      %780 = vmatmul.mubr.bf16.gmra.mxu0 %v527
      %v781 = vpop.f32.mrf.mxu0
      %v782 = vadd.f32 %v444, %v781
      %v783 = vpop.f32.mrf.mxu0
      %v784 = vadd.f32 %v448, %v783
      %v785 = vpop.f32.mrf.mxu0
      %v786 = vadd.f32 %v444, %v785
      %v787 = vpop.f32.mrf.mxu0
      %v788 = vadd.f32 %v448, %v787
      %789 = vmatprep.mubr.bf16.mxu0 0
      %790 = vmatmul.mubr.bf16.gmra.mxu0 %v528
      %v791 = vpop.f32.mrf.mxu0
      %v792 = vadd.f32 %v444, %v791
      %v793 = vpop.f32.mrf.mxu0
      %v794 = vadd.f32 %v448, %v793
      %v795 = vpop.f32.mrf.mxu0
      %v796 = vadd.f32 %v444, %v795
      %v797 = vpop.f32.mrf.mxu0
      %v798 = vadd.f32 %v448, %v797
      %799 = vmatprep.mubr.bf16.mxu0 0
      %800 = vmatmul.mubr.bf16.gmra.mxu0 %v529
      %v801 = vpop.f32.mrf.mxu0
      %v802 = vadd.f32 %v444, %v801
      %v803 = vpop.f32.mrf.mxu0
      %v804 = vadd.f32 %v448, %v803
      %v805 = vpop.f32.mrf.mxu0
      %v806 = vadd.f32 %v444, %v805
      %v807 = vpop.f32.mrf.mxu0
      %v808 = vadd.f32 %v448, %v807
      %809 = vmatprep.mubr.bf16.mxu0 0
      %810 = vmatmul.mubr.bf16.gmra.mxu0 %v530
      %v811 = vpop.f32.mrf.mxu0
      %v812 = vadd.f32 %v444, %v811
      %v813 = vpop.f32.mrf.mxu0
      %v814 = vadd.f32 %v448, %v813
      %v815 = vpop.f32.mrf.mxu0
      %v816 = vadd.f32 %v444, %v815
      %v817 = vpop.f32.mrf.mxu0
      %v818 = vadd.f32 %v448, %v817
      %819 = vdwg.mxu0
      %v820 = vmax.f32 %v662, 0.0
      %v821 = vmax.f32 %v664, 0.0
      %v822 = vmax.f32 %v666, 0.0
      %v823 = vmax.f32 %v668, 0.0
      %v824 = vmax.f32 %v672, 0.0
      %v825 = vmax.f32 %v674, 0.0
      %v826 = vmax.f32 %v676, 0.0
      %v827 = vmax.f32 %v678, 0.0
      %v828 = vmax.f32 %v682, 0.0
      %v829 = vmax.f32 %v684, 0.0
      %v830 = vmax.f32 %v686, 0.0
      %v831 = vmax.f32 %v688, 0.0
      %v832 = vmax.f32 %v692, 0.0
      %v833 = vmax.f32 %v694, 0.0
      %v834 = vmax.f32 %v696, 0.0
      %v835 = vmax.f32 %v698, 0.0
      %v836 = vmax.f32 %v702, 0.0
      %v837 = vmax.f32 %v704, 0.0
      %v838 = vmax.f32 %v706, 0.0
      %v839 = vmax.f32 %v708, 0.0
      %v840 = vmax.f32 %v712, 0.0
      %v841 = vmax.f32 %v714, 0.0
      %v842 = vmax.f32 %v716, 0.0
      %v843 = vmax.f32 %v718, 0.0
      %v844 = vmax.f32 %v722, 0.0
      %v845 = vmax.f32 %v724, 0.0
      %v846 = vmax.f32 %v726, 0.0
      %v847 = vmax.f32 %v728, 0.0
      %v848 = vmax.f32 %v732, 0.0
      %v849 = vmax.f32 %v734, 0.0
      %v850 = vmax.f32 %v736, 0.0
      %v851 = vmax.f32 %v738, 0.0
      %v852 = vmax.f32 %v742, 0.0
      %v853 = vmax.f32 %v744, 0.0
      %v854 = vmax.f32 %v746, 0.0
      %v855 = vmax.f32 %v748, 0.0
      %v856 = vmax.f32 %v752, 0.0
      %v857 = vmax.f32 %v754, 0.0
      %v858 = vmax.f32 %v756, 0.0
      %v859 = vmax.f32 %v758, 0.0
      %v860 = vmax.f32 %v762, 0.0
      %v861 = vmax.f32 %v764, 0.0
      %v862 = vmax.f32 %v766, 0.0
      %v863 = vmax.f32 %v768, 0.0
      %v864 = vmax.f32 %v772, 0.0
      %v865 = vmax.f32 %v774, 0.0
      %v866 = vmax.f32 %v776, 0.0
      %v867 = vmax.f32 %v778, 0.0
      %v868 = vmax.f32 %v782, 0.0
      %v869 = vmax.f32 %v784, 0.0
      %v870 = vmax.f32 %v786, 0.0
      %v871 = vmax.f32 %v788, 0.0
      %v872 = vmax.f32 %v792, 0.0
      %v873 = vmax.f32 %v794, 0.0
      %v874 = vmax.f32 %v796, 0.0
      %v875 = vmax.f32 %v798, 0.0
      %v876 = vmax.f32 %v802, 0.0
      %v877 = vmax.f32 %v804, 0.0
      %v878 = vmax.f32 %v806, 0.0
      %v879 = vmax.f32 %v808, 0.0
      %v880 = vmax.f32 %v812, 0.0
      %v881 = vmax.f32 %v814, 0.0
      %v882 = vmax.f32 %v816, 0.0
      %v883 = vmax.f32 %v818, 0.0
      %v884 = vld [vmem:[%s6] sm:$0xff]
      %v885 = vld [vmem:[%s6 + $0x8] sm:$0xff]
      %v886 = vld [vmem:[%s6 + $0x10] sm:$0xff]
      %v887 = vld [vmem:[%s6 + $0x18] sm:$0xff]
      %v888 = vld [vmem:[%s6 + $0x20] sm:$0xff]
      %v889 = vld [vmem:[%s6 + $0x28] sm:$0xff]
      %v890 = vld [vmem:[%s6 + $0x30] sm:$0xff]
      %v891 = vld [vmem:[%s6 + $0x38] sm:$0xff]
      %v892 = vld [vmem:[%s6 + $0x40] sm:$0xff]
      %v893 = vld [vmem:[%s6 + $0x48] sm:$0xff]
      %v894 = vld [vmem:[%s6 + $0x50] sm:$0xff]
      %v895 = vld [vmem:[%s6 + $0x58] sm:$0xff]
      %v896 = vld [vmem:[%s6 + $0x60] sm:$0xff]
      %v897 = vld [vmem:[%s6 + $0x68] sm:$0xff]
      %v898 = vld [vmem:[%s6 + $0x70] sm:$0xff]
      %v899 = vld [vmem:[%s6 + $0x78] sm:$0xff]
      %v900 = vpack.c.bf16 %v822, %v820
      %v901 = vpack.c.bf16 %v823, %v821
      %v902 = vpack.c.bf16 %v826, %v824
      %v903 = vpack.c.bf16 %v827, %v825
      %v904 = vpack.c.bf16 %v830, %v828
      %v905 = vpack.c.bf16 %v831, %v829
      %v906 = vpack.c.bf16 %v834, %v832
      %v907 = vpack.c.bf16 %v835, %v833
      %v908 = vpack.c.bf16 %v838, %v836
      %v909 = vpack.c.bf16 %v839, %v837
      %v910 = vpack.c.bf16 %v842, %v840
      %v911 = vpack.c.bf16 %v843, %v841
      %v912 = vpack.c.bf16 %v846, %v844
      %v913 = vpack.c.bf16 %v847, %v845
      %v914 = vpack.c.bf16 %v850, %v848
      %v915 = vpack.c.bf16 %v851, %v849
      %v916 = vpack.c.bf16 %v854, %v852
      %v917 = vpack.c.bf16 %v855, %v853
      %v918 = vpack.c.bf16 %v858, %v856
      %v919 = vpack.c.bf16 %v859, %v857
      %v920 = vpack.c.bf16 %v862, %v860
      %v921 = vpack.c.bf16 %v863, %v861
      %v922 = vpack.c.bf16 %v866, %v864
      %v923 = vpack.c.bf16 %v867, %v865
      %v924 = vpack.c.bf16 %v870, %v868
      %v925 = vpack.c.bf16 %v871, %v869
      %v926 = vpack.c.bf16 %v874, %v872
      %v927 = vpack.c.bf16 %v875, %v873
      %v928 = vpack.c.bf16 %v878, %v876
      %v929 = vpack.c.bf16 %v879, %v877
      %v930 = vpack.c.bf16 %v882, %v880
      %v931 = vpack.c.bf16 %v883, %v881
      %v932 = vld [vmem:[%s3] sm:$0xff]
      %v933 = vld [vmem:[%s3 + $0x8] sm:$0xf]
      %v934 = vld [vmem:[%s3 + $0xc] sm:$0xff]
      %v935 = vld [vmem:[%s3 + $0x14] sm:$0xf]
      %v936 = vld [vmem:[%s3 + $0x18] sm:$0xff]
      %v937 = vld [vmem:[%s3 + $0x20] sm:$0xf]
      %v938 = vld [vmem:[%s3 + $0x24] sm:$0xff]
      %v939 = vld [vmem:[%s3 + $0x2c] sm:$0xf]
      %v940 = vld [vmem:[%s3 + $0x30] sm:$0xff]
      %v941 = vld [vmem:[%s3 + $0x38] sm:$0xf]
      %v942 = vld [vmem:[%s3 + $0x3c] sm:$0xff]
      %v943 = vld [vmem:[%s3 + $0x44] sm:$0xf]
      %v944 = vld [vmem:[%s3 + $0x48] sm:$0xff]
      %v945 = vld [vmem:[%s3 + $0x50] sm:$0xf]
      %v946 = vld [vmem:[%s3 + $0x54] sm:$0xff]
      %v947 = vld [vmem:[%s3 + $0x5c] sm:$0xf]
      %v948 = vld [vmem:[%s3 + $0x60] sm:$0xff]
      %v949 = vld [vmem:[%s3 + $0x68] sm:$0xf]
      %v950 = vld [vmem:[%s3 + $0x6c] sm:$0xff]
      %v951 = vld [vmem:[%s3 + $0x74] sm:$0xf]
      %v952 = vld [vmem:[%s3 + $0x78] sm:$0xff]
      %v953 = vld [vmem:[%s3 + $0x80] sm:$0xf]
      %v954 = vld [vmem:[%s3 + $0x84] sm:$0xff]
      %v955 = vld [vmem:[%s3 + $0x8c] sm:$0xf]
      %v956 = vld [vmem:[%s3 + $0x90] sm:$0xff]
      %v957 = vld [vmem:[%s3 + $0x98] sm:$0xf]
      %v958 = vld [vmem:[%s3 + $0x9c] sm:$0xff]
      %v959 = vld [vmem:[%s3 + $0xa4] sm:$0xf]
      %v960 = vld [vmem:[%s3 + $0xa8] sm:$0xff]
      %v961 = vld [vmem:[%s3 + $0xb0] sm:$0xf]
      %v962 = vld [vmem:[%s3 + $0xb4] sm:$0xff]
      %v963 = vld [vmem:[%s3 + $0xbc] sm:$0xf]
      %v964 = vld [vmem:[%s3 + $0xc0] sm:$0xff]
      %v965 = vld [vmem:[%s3 + $0xc8] sm:$0xf]
      %v966 = vld [vmem:[%s3 + $0xcc] sm:$0xff]
      %v967 = vld [vmem:[%s3 + $0xd4] sm:$0xf]
      %v968 = vld [vmem:[%s3 + $0xd8] sm:$0xff]
      %v969 = vld [vmem:[%s3 + $0xe0] sm:$0xf]
      %v970 = vld [vmem:[%s3 + $0xe4] sm:$0xff]
      %v971 = vld [vmem:[%s3 + $0xec] sm:$0xf]
      %v972 = vld [vmem:[%s3 + $0xf0] sm:$0xff]
      %v973 = vld [vmem:[%s3 + $0xf8] sm:$0xf]
      %v974 = vld [vmem:[%s3 + $0xfc] sm:$0xff]
      %v975 = vld [vmem:[%s3 + $0x104] sm:$0xf]
      %v976 = vld [vmem:[%s3 + $0x108] sm:$0xff]
      %v977 = vld [vmem:[%s3 + $0x110] sm:$0xf]
      %v978 = vld [vmem:[%s3 + $0x114] sm:$0xff]
      %v979 = vld [vmem:[%s3 + $0x11c] sm:$0xf]
      %v980 = vld [vmem:[%s3 + $0x120] sm:$0xff]
      %v981 = vld [vmem:[%s3 + $0x128] sm:$0xf]
      %v982 = vld [vmem:[%s3 + $0x12c] sm:$0xff]
      %v983 = vld [vmem:[%s3 + $0x134] sm:$0xf]
      %v984 = vld [vmem:[%s3 + $0x138] sm:$0xff]
      %v985 = vld [vmem:[%s3 + $0x140] sm:$0xf]
      %v986 = vld [vmem:[%s3 + $0x144] sm:$0xff]
      %v987 = vld [vmem:[%s3 + $0x14c] sm:$0xf]
      %v988 = vld [vmem:[%s3 + $0x150] sm:$0xff]
      %v989 = vld [vmem:[%s3 + $0x158] sm:$0xf]
      %v990 = vld [vmem:[%s3 + $0x15c] sm:$0xff]
      %v991 = vld [vmem:[%s3 + $0x164] sm:$0xf]
      %v992 = vld [vmem:[%s3 + $0x168] sm:$0xff]
      %v993 = vld [vmem:[%s3 + $0x170] sm:$0xf]
      %v994 = vld [vmem:[%s3 + $0x174] sm:$0xff]
      %v995 = vld [vmem:[%s3 + $0x17c] sm:$0xf]
      %v996 = vld [vmem:[%s4] sm:$0x7]
      %v998 = vlaneseq
      %v999 = vshrl.u32 %v998, 7
      %v1000 = vsub.s32 0, %v999
      %v1001 = vrot.slane %v996, %v1000
      %v1002 = vlaneseq
      %v1003 = vshrl.u32 %v1002, 7
      %v1004 = vsub.s32 1, %v1003
      %v1005 = vrot.slane %v996, %v1004
      %v1006 = vlaneseq
      %v1007 = vshrl.u32 %v1006, 7
      %v1008 = vsub.s32 2, %v1007
      %v1009 = vrot.slane %v996, %v1008
      %v1077 = vunpack.c.l.b16 %v932
      %v1078 = vunpack.c.h.b16 %v932
      %v1079 = vunpack.c.l.b16 %v933
      %v1080 = vunpack.c.l.b16 %v934
      %v1081 = vunpack.c.h.b16 %v934
      %v1082 = vunpack.c.l.b16 %v935
      %v1083 = vunpack.c.l.b16 %v936
      %v1084 = vunpack.c.h.b16 %v936
      %v1085 = vunpack.c.l.b16 %v937
      %v1086 = vunpack.c.l.b16 %v938
      %v1087 = vunpack.c.h.b16 %v938
      %v1088 = vunpack.c.l.b16 %v939
      %v1089 = vunpack.c.l.b16 %v940
      %v1090 = vunpack.c.h.b16 %v940
      %v1091 = vunpack.c.l.b16 %v941
      %v1092 = vunpack.c.l.b16 %v942
      %v1093 = vunpack.c.h.b16 %v942
      %v1094 = vunpack.c.l.b16 %v943
      %v1095 = vunpack.c.l.b16 %v944
      %v1096 = vunpack.c.h.b16 %v944
      %v1097 = vunpack.c.l.b16 %v945
      %v1098 = vunpack.c.l.b16 %v946
      %v1099 = vunpack.c.h.b16 %v946
      %v1100 = vunpack.c.l.b16 %v947
      %v1101 = vunpack.c.l.b16 %v948
      %v1102 = vunpack.c.h.b16 %v948
      %v1103 = vunpack.c.l.b16 %v949
      %v1104 = vunpack.c.l.b16 %v950
      %v1105 = vunpack.c.h.b16 %v950
      %v1106 = vunpack.c.l.b16 %v951
      %v1107 = vunpack.c.l.b16 %v952
      %v1108 = vunpack.c.h.b16 %v952
      %v1109 = vunpack.c.l.b16 %v953
      %v1110 = vunpack.c.l.b16 %v954
      %v1111 = vunpack.c.h.b16 %v954
      %v1112 = vunpack.c.l.b16 %v955
      %v1113 = vunpack.c.l.b16 %v956
      %v1114 = vunpack.c.h.b16 %v956
      %v1115 = vunpack.c.l.b16 %v957
      %v1116 = vunpack.c.l.b16 %v958
      %v1117 = vunpack.c.h.b16 %v958
      %v1118 = vunpack.c.l.b16 %v959
      %v1119 = vunpack.c.l.b16 %v960
      %v1120 = vunpack.c.h.b16 %v960
      %v1121 = vunpack.c.l.b16 %v961
      %v1122 = vunpack.c.l.b16 %v962
      %v1123 = vunpack.c.h.b16 %v962
      %v1124 = vunpack.c.l.b16 %v963
      %v1125 = vunpack.c.l.b16 %v964
      %v1126 = vunpack.c.h.b16 %v964
      %v1127 = vunpack.c.l.b16 %v965
      %v1128 = vunpack.c.l.b16 %v966
      %v1129 = vunpack.c.h.b16 %v966
      %v1130 = vunpack.c.l.b16 %v967
      %v1131 = vunpack.c.l.b16 %v968
      %v1132 = vunpack.c.h.b16 %v968
      %v1133 = vunpack.c.l.b16 %v969
      %v1134 = vunpack.c.l.b16 %v970
      %v1135 = vunpack.c.h.b16 %v970
      %v1136 = vunpack.c.l.b16 %v971
      %v1137 = vunpack.c.l.b16 %v972
      %v1138 = vunpack.c.h.b16 %v972
      %v1139 = vunpack.c.l.b16 %v973
      %v1140 = vunpack.c.l.b16 %v974
      %v1141 = vunpack.c.h.b16 %v974
      %v1142 = vunpack.c.l.b16 %v975
      %v1143 = vunpack.c.l.b16 %v976
      %v1144 = vunpack.c.h.b16 %v976
      %v1145 = vunpack.c.l.b16 %v977
      %v1146 = vunpack.c.l.b16 %v978
      %v1147 = vunpack.c.h.b16 %v978
      %v1148 = vunpack.c.l.b16 %v979
      %v1149 = vunpack.c.l.b16 %v980
      %v1150 = vunpack.c.h.b16 %v980
      %v1151 = vunpack.c.l.b16 %v981
      %v1152 = vunpack.c.l.b16 %v982
      %v1153 = vunpack.c.h.b16 %v982
      %v1154 = vunpack.c.l.b16 %v983
      %v1155 = vunpack.c.l.b16 %v984
      %v1156 = vunpack.c.h.b16 %v984
      %v1157 = vunpack.c.l.b16 %v985
      %v1158 = vunpack.c.l.b16 %v986
      %v1159 = vunpack.c.h.b16 %v986
      %v1160 = vunpack.c.l.b16 %v987
      %v1161 = vunpack.c.l.b16 %v988
      %v1162 = vunpack.c.h.b16 %v988
      %v1163 = vunpack.c.l.b16 %v989
      %v1164 = vunpack.c.l.b16 %v990
      %v1165 = vunpack.c.h.b16 %v990
      %v1166 = vunpack.c.l.b16 %v991
      %v1167 = vunpack.c.l.b16 %v992
      %v1168 = vunpack.c.h.b16 %v992
      %v1169 = vunpack.c.l.b16 %v993
      %v1170 = vunpack.c.l.b16 %v994
      %v1171 = vunpack.c.h.b16 %v994
      %v1172 = vunpack.c.l.b16 %v995
      %v1173 = vpack.c.b16 %v1080, %v1077
      %v1174 = vpack.c.b16 %v1081, %v1078
      %v1175 = vpack.c.b16 %v1082, %v1079
      %v1176 = vpack.c.b16 %v1086, %v1083
      %v1177 = vpack.c.b16 %v1087, %v1084
      %v1178 = vpack.c.b16 %v1088, %v1085
      %v1179 = vpack.c.b16 %v1092, %v1089
      %v1180 = vpack.c.b16 %v1093, %v1090
      %v1181 = vpack.c.b16 %v1094, %v1091
      %v1182 = vpack.c.b16 %v1098, %v1095
      %v1183 = vpack.c.b16 %v1099, %v1096
      %v1184 = vpack.c.b16 %v1100, %v1097
      %v1185 = vpack.c.b16 %v1104, %v1101
      %v1186 = vpack.c.b16 %v1105, %v1102
      %v1187 = vpack.c.b16 %v1106, %v1103
      %v1188 = vpack.c.b16 %v1110, %v1107
      %v1189 = vpack.c.b16 %v1111, %v1108
      %v1190 = vpack.c.b16 %v1112, %v1109
      %v1191 = vpack.c.b16 %v1116, %v1113
      %v1192 = vpack.c.b16 %v1117, %v1114
      %v1193 = vpack.c.b16 %v1118, %v1115
      %v1194 = vpack.c.b16 %v1122, %v1119
      %v1195 = vpack.c.b16 %v1123, %v1120
      %v1196 = vpack.c.b16 %v1124, %v1121
      %v1197 = vpack.c.b16 %v1128, %v1125
      %v1198 = vpack.c.b16 %v1129, %v1126
      %v1199 = vpack.c.b16 %v1130, %v1127
      %v1200 = vpack.c.b16 %v1134, %v1131
      %v1201 = vpack.c.b16 %v1135, %v1132
      %v1202 = vpack.c.b16 %v1136, %v1133
      %v1203 = vpack.c.b16 %v1140, %v1137
      %v1204 = vpack.c.b16 %v1141, %v1138
      %v1205 = vpack.c.b16 %v1142, %v1139
      %v1206 = vpack.c.b16 %v1146, %v1143
      %v1207 = vpack.c.b16 %v1147, %v1144
      %v1208 = vpack.c.b16 %v1148, %v1145
      %v1209 = vpack.c.b16 %v1152, %v1149
      %v1210 = vpack.c.b16 %v1153, %v1150
      %v1211 = vpack.c.b16 %v1154, %v1151
      %v1212 = vpack.c.b16 %v1158, %v1155
      %v1213 = vpack.c.b16 %v1159, %v1156
      %v1214 = vpack.c.b16 %v1160, %v1157
      %v1215 = vpack.c.b16 %v1164, %v1161
      %v1216 = vpack.c.b16 %v1165, %v1162
      %v1217 = vpack.c.b16 %v1166, %v1163
      %v1218 = vpack.c.b16 %v1170, %v1167
      %v1219 = vpack.c.b16 %v1171, %v1168
      %v1220 = vpack.c.b16 %v1172, %v1169
      %1269 = vmatprep.subr.bf16.mxu0 %v1195
      %1270 = vmatpush1.bf16.msra.mxu0 %v1194
      %1271 = vmatprep.subr.bf16.mxu0 %v1192
      %1272 = vmatpush1.bf16.msra.mxu0 %v1191
      %1273 = vmatprep.subr.bf16.mxu0 %v1189
      %1274 = vmatpush1.bf16.msra.mxu0 %v1188
      %1275 = vmatprep.subr.bf16.mxu0 %v1186
      %1276 = vmatpush1.bf16.msra.mxu0 %v1185
      %1277 = vmatprep.subr.bf16.mxu0 %v1183
      %1278 = vmatpush1.bf16.msra.mxu0 %v1182
      %1279 = vmatprep.subr.bf16.mxu0 %v1180
      %1280 = vmatpush1.bf16.msra.mxu0 %v1179
      %1281 = vmatprep.subr.bf16.mxu0 %v1177
      %1282 = vmatpush1.bf16.msra.mxu0 %v1176
      %1283 = vmatprep.subr.bf16.mxu0 %v1174
      %1284 = vmatpush1.bf16.msra.mxu0 %v1173
      %1285 = vmatprep.subr.bf16.mxu0 %v1219
      %1286 = vmatpush2.bf16.msra.mxu0 %v1218
      %1287 = vmatprep.subr.bf16.mxu0 %v1216
      %1288 = vmatpush2.bf16.msra.mxu0 %v1215
      %1289 = vmatprep.subr.bf16.mxu0 %v1213
      %1290 = vmatpush2.bf16.msra.mxu0 %v1212
      %1291 = vmatprep.subr.bf16.mxu0 %v1210
      %1292 = vmatpush2.bf16.msra.mxu0 %v1209
      %1293 = vmatprep.subr.bf16.mxu0 %v1207
      %1294 = vmatpush2.bf16.msra.mxu0 %v1206
      %1295 = vmatprep.subr.bf16.mxu0 %v1204
      %1296 = vmatpush2.bf16.msra.mxu0 %v1203
      %1297 = vmatprep.subr.bf16.mxu0 %v1201
      %1298 = vmatpush2.bf16.msra.mxu0 %v1200
      %1299 = vmatprep.subr.bf16.mxu0 %v1198
      %1300 = vmatpush2.bf16.msra.mxu0 %v1197
      %1301 = vmatprep.mubr.bf16.mxu0 %v901
      %1302 = vmatmul.mubr.bf16.gmra.mxu0 %v900
      %v1303 = vpop.f32.mrf.mxu0
      %v1304 = vadd.f32 %v1001, %v1303
      %v1305 = vpop.f32.mrf.mxu0
      %v1306 = vadd.f32 %v1005, %v1305
      %v1307 = vpop.f32.mrf.mxu0
      %v1308 = vadd.f32 %v1001, %v1307
      %v1309 = vpop.f32.mrf.mxu0
      %v1310 = vadd.f32 %v1005, %v1309
      %1311 = vmatprep.mubr.bf16.mxu0 %v903
      %1312 = vmatmul.mubr.bf16.gmra.mxu0 %v902
      %v1313 = vpop.f32.mrf.mxu0
      %v1314 = vadd.f32 %v1001, %v1313
      %v1315 = vpop.f32.mrf.mxu0
      %v1316 = vadd.f32 %v1005, %v1315
      %v1317 = vpop.f32.mrf.mxu0
      %v1318 = vadd.f32 %v1001, %v1317
      %v1319 = vpop.f32.mrf.mxu0
      %v1320 = vadd.f32 %v1005, %v1319
      %1321 = vmatprep.mubr.bf16.mxu0 %v905
      %1322 = vmatmul.mubr.bf16.gmra.mxu0 %v904
      %v1323 = vpop.f32.mrf.mxu0
      %v1324 = vadd.f32 %v1001, %v1323
      %v1325 = vpop.f32.mrf.mxu0
      %v1326 = vadd.f32 %v1005, %v1325
      %v1327 = vpop.f32.mrf.mxu0
      %v1328 = vadd.f32 %v1001, %v1327
      %v1329 = vpop.f32.mrf.mxu0
      %v1330 = vadd.f32 %v1005, %v1329
      %1331 = vmatprep.mubr.bf16.mxu0 %v907
      %1332 = vmatmul.mubr.bf16.gmra.mxu0 %v906
      %v1333 = vpop.f32.mrf.mxu0
      %v1334 = vadd.f32 %v1001, %v1333
      %v1335 = vpop.f32.mrf.mxu0
      %v1336 = vadd.f32 %v1005, %v1335
      %v1337 = vpop.f32.mrf.mxu0
      %v1338 = vadd.f32 %v1001, %v1337
      %v1339 = vpop.f32.mrf.mxu0
      %v1340 = vadd.f32 %v1005, %v1339
      %1341 = vmatprep.mubr.bf16.mxu0 %v909
      %1342 = vmatmul.mubr.bf16.gmra.mxu0 %v908
      %v1343 = vpop.f32.mrf.mxu0
      %v1344 = vadd.f32 %v1001, %v1343
      %v1345 = vpop.f32.mrf.mxu0
      %v1346 = vadd.f32 %v1005, %v1345
      %v1347 = vpop.f32.mrf.mxu0
      %v1348 = vadd.f32 %v1001, %v1347
      %v1349 = vpop.f32.mrf.mxu0
      %v1350 = vadd.f32 %v1005, %v1349
      %1351 = vmatprep.mubr.bf16.mxu0 %v911
      %1352 = vmatmul.mubr.bf16.gmra.mxu0 %v910
      %v1353 = vpop.f32.mrf.mxu0
      %v1354 = vadd.f32 %v1001, %v1353
      %v1355 = vpop.f32.mrf.mxu0
      %v1356 = vadd.f32 %v1005, %v1355
      %v1357 = vpop.f32.mrf.mxu0
      %v1358 = vadd.f32 %v1001, %v1357
      %v1359 = vpop.f32.mrf.mxu0
      %v1360 = vadd.f32 %v1005, %v1359
      %1361 = vmatprep.mubr.bf16.mxu0 %v913
      %1362 = vmatmul.mubr.bf16.gmra.mxu0 %v912
      %v1363 = vpop.f32.mrf.mxu0
      %v1364 = vadd.f32 %v1001, %v1363
      %v1365 = vpop.f32.mrf.mxu0
      %v1366 = vadd.f32 %v1005, %v1365
      %v1367 = vpop.f32.mrf.mxu0
      %v1368 = vadd.f32 %v1001, %v1367
      %v1369 = vpop.f32.mrf.mxu0
      %v1370 = vadd.f32 %v1005, %v1369
      %1371 = vmatprep.mubr.bf16.mxu0 %v915
      %1372 = vmatmul.mubr.bf16.gmra.mxu0 %v914
      %v1373 = vpop.f32.mrf.mxu0
      %v1374 = vadd.f32 %v1001, %v1373
      %v1375 = vpop.f32.mrf.mxu0
      %v1376 = vadd.f32 %v1005, %v1375
      %v1377 = vpop.f32.mrf.mxu0
      %v1378 = vadd.f32 %v1001, %v1377
      %v1379 = vpop.f32.mrf.mxu0
      %v1380 = vadd.f32 %v1005, %v1379
      %1381 = vmatprep.mubr.bf16.mxu0 %v917
      %1382 = vmatmul.mubr.bf16.gmra.mxu0 %v916
      %v1383 = vpop.f32.mrf.mxu0
      %v1384 = vadd.f32 %v1001, %v1383
      %v1385 = vpop.f32.mrf.mxu0
      %v1386 = vadd.f32 %v1005, %v1385
      %v1387 = vpop.f32.mrf.mxu0
      %v1388 = vadd.f32 %v1001, %v1387
      %v1389 = vpop.f32.mrf.mxu0
      %v1390 = vadd.f32 %v1005, %v1389
      %1391 = vmatprep.mubr.bf16.mxu0 %v919
      %1392 = vmatmul.mubr.bf16.gmra.mxu0 %v918
      %v1393 = vpop.f32.mrf.mxu0
      %v1394 = vadd.f32 %v1001, %v1393
      %v1395 = vpop.f32.mrf.mxu0
      %v1396 = vadd.f32 %v1005, %v1395
      %v1397 = vpop.f32.mrf.mxu0
      %v1398 = vadd.f32 %v1001, %v1397
      %v1399 = vpop.f32.mrf.mxu0
      %v1400 = vadd.f32 %v1005, %v1399
      %1401 = vmatprep.mubr.bf16.mxu0 %v921
      %1402 = vmatmul.mubr.bf16.gmra.mxu0 %v920
      %v1403 = vpop.f32.mrf.mxu0
      %v1404 = vadd.f32 %v1001, %v1403
      %v1405 = vpop.f32.mrf.mxu0
      %v1406 = vadd.f32 %v1005, %v1405
      %v1407 = vpop.f32.mrf.mxu0
      %v1408 = vadd.f32 %v1001, %v1407
      %v1409 = vpop.f32.mrf.mxu0
      %v1410 = vadd.f32 %v1005, %v1409
      %1411 = vmatprep.mubr.bf16.mxu0 %v923
      %1412 = vmatmul.mubr.bf16.gmra.mxu0 %v922
      %v1413 = vpop.f32.mrf.mxu0
      %v1414 = vadd.f32 %v1001, %v1413
      %v1415 = vpop.f32.mrf.mxu0
      %v1416 = vadd.f32 %v1005, %v1415
      %v1417 = vpop.f32.mrf.mxu0
      %v1418 = vadd.f32 %v1001, %v1417
      %v1419 = vpop.f32.mrf.mxu0
      %v1420 = vadd.f32 %v1005, %v1419
      %1421 = vmatprep.mubr.bf16.mxu0 %v925
      %1422 = vmatmul.mubr.bf16.gmra.mxu0 %v924
      %v1423 = vpop.f32.mrf.mxu0
      %v1424 = vadd.f32 %v1001, %v1423
      %v1425 = vpop.f32.mrf.mxu0
      %v1426 = vadd.f32 %v1005, %v1425
      %v1427 = vpop.f32.mrf.mxu0
      %v1428 = vadd.f32 %v1001, %v1427
      %v1429 = vpop.f32.mrf.mxu0
      %v1430 = vadd.f32 %v1005, %v1429
      %1431 = vmatprep.mubr.bf16.mxu0 %v927
      %1432 = vmatmul.mubr.bf16.gmra.mxu0 %v926
      %v1433 = vpop.f32.mrf.mxu0
      %v1434 = vadd.f32 %v1001, %v1433
      %v1435 = vpop.f32.mrf.mxu0
      %v1436 = vadd.f32 %v1005, %v1435
      %v1437 = vpop.f32.mrf.mxu0
      %v1438 = vadd.f32 %v1001, %v1437
      %v1439 = vpop.f32.mrf.mxu0
      %v1440 = vadd.f32 %v1005, %v1439
      %1441 = vmatprep.mubr.bf16.mxu0 %v929
      %1442 = vmatmul.mubr.bf16.gmra.mxu0 %v928
      %v1443 = vpop.f32.mrf.mxu0
      %v1444 = vadd.f32 %v1001, %v1443
      %v1445 = vpop.f32.mrf.mxu0
      %v1446 = vadd.f32 %v1005, %v1445
      %v1447 = vpop.f32.mrf.mxu0
      %v1448 = vadd.f32 %v1001, %v1447
      %v1449 = vpop.f32.mrf.mxu0
      %v1450 = vadd.f32 %v1005, %v1449
      %1451 = vmatprep.mubr.bf16.mxu0 %v931
      %1452 = vmatmul.mubr.bf16.gmra.mxu0 %v930
      %v1453 = vpop.f32.mrf.mxu0
      %v1454 = vadd.f32 %v1001, %v1453
      %v1455 = vpop.f32.mrf.mxu0
      %v1456 = vadd.f32 %v1005, %v1455
      %v1457 = vpop.f32.mrf.mxu0
      %v1458 = vadd.f32 %v1001, %v1457
      %v1459 = vpop.f32.mrf.mxu0
      %v1460 = vadd.f32 %v1005, %v1459
      %1461 = vdwg.mxu0
      %1462 = vmatprep.subr.bf16.mxu0 0
      %1463 = vmatpush1.bf16.msra.mxu0 %v1196
      %1464 = vmatprep.subr.bf16.mxu0 0
      %1465 = vmatpush1.bf16.msra.mxu0 %v1193
      %1466 = vmatprep.subr.bf16.mxu0 0
      %1467 = vmatpush1.bf16.msra.mxu0 %v1190
      %1468 = vmatprep.subr.bf16.mxu0 0
      %1469 = vmatpush1.bf16.msra.mxu0 %v1187
      %1470 = vmatprep.subr.bf16.mxu0 0
      %1471 = vmatpush1.bf16.msra.mxu0 %v1184
      %1472 = vmatprep.subr.bf16.mxu0 0
      %1473 = vmatpush1.bf16.msra.mxu0 %v1181
      %1474 = vmatprep.subr.bf16.mxu0 0
      %1475 = vmatpush1.bf16.msra.mxu0 %v1178
      %1476 = vmatprep.subr.bf16.mxu0 0
      %1477 = vmatpush1.bf16.msra.mxu0 %v1175
      %1478 = vmatprep.subr.bf16.mxu0 0
      %1479 = vmatpush2.bf16.msra.mxu0 %v1220
      %1480 = vmatprep.subr.bf16.mxu0 0
      %1481 = vmatpush2.bf16.msra.mxu0 %v1217
      %1482 = vmatprep.subr.bf16.mxu0 0
      %1483 = vmatpush2.bf16.msra.mxu0 %v1214
      %1484 = vmatprep.subr.bf16.mxu0 0
      %1485 = vmatpush2.bf16.msra.mxu0 %v1211
      %1486 = vmatprep.subr.bf16.mxu0 0
      %1487 = vmatpush2.bf16.msra.mxu0 %v1208
      %1488 = vmatprep.subr.bf16.mxu0 0
      %1489 = vmatpush2.bf16.msra.mxu0 %v1205
      %1490 = vmatprep.subr.bf16.mxu0 0
      %1491 = vmatpush2.bf16.msra.mxu0 %v1202
      %1492 = vmatprep.subr.bf16.mxu0 0
      %1493 = vmatpush2.bf16.msra.mxu0 %v1199
      %1494 = vmatprep.mubr.bf16.mxu0 %v901
      %1495 = vmatmul.mubr.bf16.gmra.mxu0 %v900
      %v1496 = vpop.f32.mrf.mxu0
      %v1497 = vadd.f32 %v1009, %v1496
      %v1498 = vpop.f32.mrf.mxu0
      %v1499 = vpop.f32.mrf.mxu0
      %v1500 = vadd.f32 %v1009, %v1499
      %v1501 = vpop.f32.mrf.mxu0
      %1502 = vmatprep.mubr.bf16.mxu0 %v903
      %1503 = vmatmul.mubr.bf16.gmra.mxu0 %v902
      %v1504 = vpop.f32.mrf.mxu0
      %v1505 = vadd.f32 %v1009, %v1504
      %v1506 = vpop.f32.mrf.mxu0
      %v1507 = vpop.f32.mrf.mxu0
      %v1508 = vadd.f32 %v1009, %v1507
      %v1509 = vpop.f32.mrf.mxu0
      %1510 = vmatprep.mubr.bf16.mxu0 %v905
      %1511 = vmatmul.mubr.bf16.gmra.mxu0 %v904
      %v1512 = vpop.f32.mrf.mxu0
      %v1513 = vadd.f32 %v1009, %v1512
      %v1514 = vpop.f32.mrf.mxu0
      %v1515 = vpop.f32.mrf.mxu0
      %v1516 = vadd.f32 %v1009, %v1515
      %v1517 = vpop.f32.mrf.mxu0
      %1518 = vmatprep.mubr.bf16.mxu0 %v907
      %1519 = vmatmul.mubr.bf16.gmra.mxu0 %v906
      %v1520 = vpop.f32.mrf.mxu0
      %v1521 = vadd.f32 %v1009, %v1520
      %v1522 = vpop.f32.mrf.mxu0
      %v1523 = vpop.f32.mrf.mxu0
      %v1524 = vadd.f32 %v1009, %v1523
      %v1525 = vpop.f32.mrf.mxu0
      %1526 = vmatprep.mubr.bf16.mxu0 %v909
      %1527 = vmatmul.mubr.bf16.gmra.mxu0 %v908
      %v1528 = vpop.f32.mrf.mxu0
      %v1529 = vadd.f32 %v1009, %v1528
      %v1530 = vpop.f32.mrf.mxu0
      %v1531 = vpop.f32.mrf.mxu0
      %v1532 = vadd.f32 %v1009, %v1531
      %v1533 = vpop.f32.mrf.mxu0
      %1534 = vmatprep.mubr.bf16.mxu0 %v911
      %1535 = vmatmul.mubr.bf16.gmra.mxu0 %v910
      %v1536 = vpop.f32.mrf.mxu0
      %v1537 = vadd.f32 %v1009, %v1536
      %v1538 = vpop.f32.mrf.mxu0
      %v1539 = vpop.f32.mrf.mxu0
      %v1540 = vadd.f32 %v1009, %v1539
      %v1541 = vpop.f32.mrf.mxu0
      %1542 = vmatprep.mubr.bf16.mxu0 %v913
      %1543 = vmatmul.mubr.bf16.gmra.mxu0 %v912
      %v1544 = vpop.f32.mrf.mxu0
      %v1545 = vadd.f32 %v1009, %v1544
      %v1546 = vpop.f32.mrf.mxu0
      %v1547 = vpop.f32.mrf.mxu0
      %v1548 = vadd.f32 %v1009, %v1547
      %v1549 = vpop.f32.mrf.mxu0
      %1550 = vmatprep.mubr.bf16.mxu0 %v915
      %1551 = vmatmul.mubr.bf16.gmra.mxu0 %v914
      %v1552 = vpop.f32.mrf.mxu0
      %v1553 = vadd.f32 %v1009, %v1552
      %v1554 = vpop.f32.mrf.mxu0
      %v1555 = vpop.f32.mrf.mxu0
      %v1556 = vadd.f32 %v1009, %v1555
      %v1557 = vpop.f32.mrf.mxu0
      %1558 = vmatprep.mubr.bf16.mxu0 %v917
      %1559 = vmatmul.mubr.bf16.gmra.mxu0 %v916
      %v1560 = vpop.f32.mrf.mxu0
      %v1561 = vadd.f32 %v1009, %v1560
      %v1562 = vpop.f32.mrf.mxu0
      %v1563 = vpop.f32.mrf.mxu0
      %v1564 = vadd.f32 %v1009, %v1563
      %v1565 = vpop.f32.mrf.mxu0
      %1566 = vmatprep.mubr.bf16.mxu0 %v919
      %1567 = vmatmul.mubr.bf16.gmra.mxu0 %v918
      %v1568 = vpop.f32.mrf.mxu0
      %v1569 = vadd.f32 %v1009, %v1568
      %v1570 = vpop.f32.mrf.mxu0
      %v1571 = vpop.f32.mrf.mxu0
      %v1572 = vadd.f32 %v1009, %v1571
      %v1573 = vpop.f32.mrf.mxu0
      %1574 = vmatprep.mubr.bf16.mxu0 %v921
      %1575 = vmatmul.mubr.bf16.gmra.mxu0 %v920
      %v1576 = vpop.f32.mrf.mxu0
      %v1577 = vadd.f32 %v1009, %v1576
      %v1578 = vpop.f32.mrf.mxu0
      %v1579 = vpop.f32.mrf.mxu0
      %v1580 = vadd.f32 %v1009, %v1579
      %v1581 = vpop.f32.mrf.mxu0
      %1582 = vmatprep.mubr.bf16.mxu0 %v923
      %1583 = vmatmul.mubr.bf16.gmra.mxu0 %v922
      %v1584 = vpop.f32.mrf.mxu0
      %v1585 = vadd.f32 %v1009, %v1584
      %v1586 = vpop.f32.mrf.mxu0
      %v1587 = vpop.f32.mrf.mxu0
      %v1588 = vadd.f32 %v1009, %v1587
      %v1589 = vpop.f32.mrf.mxu0
      %1590 = vmatprep.mubr.bf16.mxu0 %v925
      %1591 = vmatmul.mubr.bf16.gmra.mxu0 %v924
      %v1592 = vpop.f32.mrf.mxu0
      %v1593 = vadd.f32 %v1009, %v1592
      %v1594 = vpop.f32.mrf.mxu0
      %v1595 = vpop.f32.mrf.mxu0
      %v1596 = vadd.f32 %v1009, %v1595
      %v1597 = vpop.f32.mrf.mxu0
      %1598 = vmatprep.mubr.bf16.mxu0 %v927
      %1599 = vmatmul.mubr.bf16.gmra.mxu0 %v926
      %v1600 = vpop.f32.mrf.mxu0
      %v1601 = vadd.f32 %v1009, %v1600
      %v1602 = vpop.f32.mrf.mxu0
      %v1603 = vpop.f32.mrf.mxu0
      %v1604 = vadd.f32 %v1009, %v1603
      %v1605 = vpop.f32.mrf.mxu0
      %1606 = vmatprep.mubr.bf16.mxu0 %v929
      %1607 = vmatmul.mubr.bf16.gmra.mxu0 %v928
      %v1608 = vpop.f32.mrf.mxu0
      %v1609 = vadd.f32 %v1009, %v1608
      %v1610 = vpop.f32.mrf.mxu0
      %v1611 = vpop.f32.mrf.mxu0
      %v1612 = vadd.f32 %v1009, %v1611
      %v1613 = vpop.f32.mrf.mxu0
      %1614 = vmatprep.mubr.bf16.mxu0 %v931
      %1615 = vmatmul.mubr.bf16.gmra.mxu0 %v930
      %v1616 = vpop.f32.mrf.mxu0
      %v1617 = vadd.f32 %v1009, %v1616
      %v1618 = vpop.f32.mrf.mxu0
      %v1619 = vpop.f32.mrf.mxu0
      %v1620 = vadd.f32 %v1009, %v1619
      %v1621 = vpop.f32.mrf.mxu0
      %1622 = vdwg.mxu0
      %v1623 = vxor.u32 %v1304, 2147483648
      %v1624 = vxor.u32 %v1308, 2147483648
      %v1625 = vxor.u32 %v1314, 2147483648
      %v1626 = vxor.u32 %v1318, 2147483648
      %v1627 = vxor.u32 %v1324, 2147483648
      %v1628 = vxor.u32 %v1328, 2147483648
      %v1629 = vxor.u32 %v1334, 2147483648
      %v1630 = vxor.u32 %v1338, 2147483648
      %v1631 = vxor.u32 %v1344, 2147483648
      %v1632 = vxor.u32 %v1348, 2147483648
      %v1633 = vxor.u32 %v1354, 2147483648
      %v1634 = vxor.u32 %v1358, 2147483648
      %v1635 = vxor.u32 %v1364, 2147483648
      %v1636 = vxor.u32 %v1368, 2147483648
      %v1637 = vxor.u32 %v1374, 2147483648
      %v1638 = vxor.u32 %v1378, 2147483648
      %v1639 = vxor.u32 %v1384, 2147483648
      %v1640 = vxor.u32 %v1388, 2147483648
      %v1641 = vxor.u32 %v1394, 2147483648
      %v1642 = vxor.u32 %v1398, 2147483648
      %v1643 = vxor.u32 %v1404, 2147483648
      %v1644 = vxor.u32 %v1408, 2147483648
      %v1645 = vxor.u32 %v1414, 2147483648
      %v1646 = vxor.u32 %v1418, 2147483648
      %v1647 = vxor.u32 %v1424, 2147483648
      %v1648 = vxor.u32 %v1428, 2147483648
      %v1649 = vxor.u32 %v1434, 2147483648
      %v1650 = vxor.u32 %v1438, 2147483648
      %v1651 = vxor.u32 %v1444, 2147483648
      %v1652 = vxor.u32 %v1448, 2147483648
      %v1653 = vxor.u32 %v1454, 2147483648
      %v1654 = vxor.u32 %v1458, 2147483648
      %v1655 = vmul.f32 %v1623, 1.442695
      %v1656 = vpow.pop %v1655
      %v1657 = vmul.f32 %v1624, 1.442695
      %v1658 = vpow.pop %v1657
      %v1659 = vmul.f32 %v1625, 1.442695
      %v1660 = vpow.pop %v1659
      %v1661 = vmul.f32 %v1626, 1.442695
      %v1662 = vpow.pop %v1661
      %v1663 = vmul.f32 %v1627, 1.442695
      %v1664 = vpow.pop %v1663
      %v1665 = vmul.f32 %v1628, 1.442695
      %v1666 = vpow.pop %v1665
      %v1667 = vmul.f32 %v1629, 1.442695
      %v1668 = vpow.pop %v1667
      %v1669 = vmul.f32 %v1630, 1.442695
      %v1670 = vpow.pop %v1669
      %v1671 = vmul.f32 %v1631, 1.442695
      %v1672 = vpow.pop %v1671
      %v1673 = vmul.f32 %v1632, 1.442695
      %v1674 = vpow.pop %v1673
      %v1675 = vmul.f32 %v1633, 1.442695
      %v1676 = vpow.pop %v1675
      %v1677 = vmul.f32 %v1634, 1.442695
      %v1678 = vpow.pop %v1677
      %v1679 = vmul.f32 %v1635, 1.442695
      %v1680 = vpow.pop %v1679
      %v1681 = vmul.f32 %v1636, 1.442695
      %v1682 = vpow.pop %v1681
      %v1683 = vmul.f32 %v1637, 1.442695
      %v1684 = vpow.pop %v1683
      %v1685 = vmul.f32 %v1638, 1.442695
      %v1686 = vpow.pop %v1685
      %v1687 = vmul.f32 %v1639, 1.442695
      %v1688 = vpow.pop %v1687
      %v1689 = vmul.f32 %v1640, 1.442695
      %v1690 = vpow.pop %v1689
      %v1691 = vmul.f32 %v1641, 1.442695
      %v1692 = vpow.pop %v1691
      %v1693 = vmul.f32 %v1642, 1.442695
      %v1694 = vpow.pop %v1693
      %v1695 = vmul.f32 %v1643, 1.442695
      %v1696 = vpow.pop %v1695
      %v1697 = vmul.f32 %v1644, 1.442695
      %v1698 = vpow.pop %v1697
      %v1699 = vmul.f32 %v1645, 1.442695
      %v1700 = vpow.pop %v1699
      %v1701 = vmul.f32 %v1646, 1.442695
      %v1702 = vpow.pop %v1701
      %v1703 = vmul.f32 %v1647, 1.442695
      %v1704 = vpow.pop %v1703
      %v1705 = vmul.f32 %v1648, 1.442695
      %v1706 = vpow.pop %v1705
      %v1707 = vmul.f32 %v1649, 1.442695
      %v1708 = vpow.pop %v1707
      %v1709 = vmul.f32 %v1650, 1.442695
      %v1710 = vpow.pop %v1709
      %v1711 = vmul.f32 %v1651, 1.442695
      %v1712 = vpow.pop %v1711
      %v1713 = vmul.f32 %v1652, 1.442695
      %v1714 = vpow.pop %v1713
      %v1715 = vmul.f32 %v1653, 1.442695
      %v1716 = vpow.pop %v1715
      %v1717 = vmul.f32 %v1654, 1.442695
      %v1718 = vpow.pop %v1717
      %v1719 = vadd.f32 %v1656, 1.0
      %v1720 = vadd.f32 %v1658, 1.0
      %v1721 = vadd.f32 %v1660, 1.0
      %v1722 = vadd.f32 %v1662, 1.0
      %v1723 = vadd.f32 %v1664, 1.0
      %v1724 = vadd.f32 %v1666, 1.0
      %v1725 = vadd.f32 %v1668, 1.0
      %v1726 = vadd.f32 %v1670, 1.0
      %v1727 = vadd.f32 %v1672, 1.0
      %v1728 = vadd.f32 %v1674, 1.0
      %v1729 = vadd.f32 %v1676, 1.0
      %v1730 = vadd.f32 %v1678, 1.0
      %v1731 = vadd.f32 %v1680, 1.0
      %v1732 = vadd.f32 %v1682, 1.0
      %v1733 = vadd.f32 %v1684, 1.0
      %v1734 = vadd.f32 %v1686, 1.0
      %v1735 = vadd.f32 %v1688, 1.0
      %v1736 = vadd.f32 %v1690, 1.0
      %v1737 = vadd.f32 %v1692, 1.0
      %v1738 = vadd.f32 %v1694, 1.0
      %v1739 = vadd.f32 %v1696, 1.0
      %v1740 = vadd.f32 %v1698, 1.0
      %v1741 = vadd.f32 %v1700, 1.0
      %v1742 = vadd.f32 %v1702, 1.0
      %v1743 = vadd.f32 %v1704, 1.0
      %v1744 = vadd.f32 %v1706, 1.0
      %v1745 = vadd.f32 %v1708, 1.0
      %v1746 = vadd.f32 %v1710, 1.0
      %v1747 = vadd.f32 %v1712, 1.0
      %v1748 = vadd.f32 %v1714, 1.0
      %v1749 = vadd.f32 %v1716, 1.0
      %v1750 = vadd.f32 %v1718, 1.0
      %v1751 = vrcp.pop %v1719
      %v1752 = vmul.f32 1.0, %v1751
      %v1753 = vrcp.pop %v1720
      %v1754 = vmul.f32 1.0, %v1753
      %v1755 = vrcp.pop %v1721
      %v1756 = vmul.f32 1.0, %v1755
      %v1757 = vrcp.pop %v1722
      %v1758 = vmul.f32 1.0, %v1757
      %v1759 = vrcp.pop %v1723
      %v1760 = vmul.f32 1.0, %v1759
      %v1761 = vrcp.pop %v1724
      %v1762 = vmul.f32 1.0, %v1761
      %v1763 = vrcp.pop %v1725
      %v1764 = vmul.f32 1.0, %v1763
      %v1765 = vrcp.pop %v1726
      %v1766 = vmul.f32 1.0, %v1765
      %v1767 = vrcp.pop %v1727
      %v1768 = vmul.f32 1.0, %v1767
      %v1769 = vrcp.pop %v1728
      %v1770 = vmul.f32 1.0, %v1769
      %v1771 = vrcp.pop %v1729
      %v1772 = vmul.f32 1.0, %v1771
      %v1773 = vrcp.pop %v1730
      %v1774 = vmul.f32 1.0, %v1773
      %v1775 = vrcp.pop %v1731
      %v1776 = vmul.f32 1.0, %v1775
      %v1777 = vrcp.pop %v1732
      %v1778 = vmul.f32 1.0, %v1777
      %v1779 = vrcp.pop %v1733
      %v1780 = vmul.f32 1.0, %v1779
      %v1781 = vrcp.pop %v1734
      %v1782 = vmul.f32 1.0, %v1781
      %v1783 = vrcp.pop %v1735
      %v1784 = vmul.f32 1.0, %v1783
      %v1785 = vrcp.pop %v1736
      %v1786 = vmul.f32 1.0, %v1785
      %v1787 = vrcp.pop %v1737
      %v1788 = vmul.f32 1.0, %v1787
      %v1789 = vrcp.pop %v1738
      %v1790 = vmul.f32 1.0, %v1789
      %v1791 = vrcp.pop %v1739
      %v1792 = vmul.f32 1.0, %v1791
      %v1793 = vrcp.pop %v1740
      %v1794 = vmul.f32 1.0, %v1793
      %v1795 = vrcp.pop %v1741
      %v1796 = vmul.f32 1.0, %v1795
      %v1797 = vrcp.pop %v1742
      %v1798 = vmul.f32 1.0, %v1797
      %v1799 = vrcp.pop %v1743
      %v1800 = vmul.f32 1.0, %v1799
      %v1801 = vrcp.pop %v1744
      %v1802 = vmul.f32 1.0, %v1801
      %v1803 = vrcp.pop %v1745
      %v1804 = vmul.f32 1.0, %v1803
      %v1805 = vrcp.pop %v1746
      %v1806 = vmul.f32 1.0, %v1805
      %v1807 = vrcp.pop %v1747
      %v1808 = vmul.f32 1.0, %v1807
      %v1809 = vrcp.pop %v1748
      %v1810 = vmul.f32 1.0, %v1809
      %v1811 = vrcp.pop %v1749
      %v1812 = vmul.f32 1.0, %v1811
      %v1813 = vrcp.pop %v1750
      %v1814 = vmul.f32 1.0, %v1813
      %v1815 = vpack.c.bf16 %v1754, %v1752
      %v1816 = vpack.c.bf16 %v1758, %v1756
      %v1817 = vpack.c.bf16 %v1762, %v1760
      %v1818 = vpack.c.bf16 %v1766, %v1764
      %v1819 = vpack.c.bf16 %v1770, %v1768
      %v1820 = vpack.c.bf16 %v1774, %v1772
      %v1821 = vpack.c.bf16 %v1778, %v1776
      %v1822 = vpack.c.bf16 %v1782, %v1780
      %v1823 = vpack.c.bf16 %v1786, %v1784
      %v1824 = vpack.c.bf16 %v1790, %v1788
      %v1825 = vpack.c.bf16 %v1794, %v1792
      %v1826 = vpack.c.bf16 %v1798, %v1796
      %v1827 = vpack.c.bf16 %v1802, %v1800
      %v1828 = vpack.c.bf16 %v1806, %v1804
      %v1829 = vpack.c.bf16 %v1810, %v1808
      %v1830 = vpack.c.bf16 %v1814, %v1812
      %v1847 = vunpack.c.l.b16 %v884
      %v1848 = vunpack.c.h.b16 %v884
      %v1849 = vunpack.c.l.b16 %v885
      %v1850 = vunpack.c.h.b16 %v885
      %v1851 = vunpack.c.l.b16 %v886
      %v1852 = vunpack.c.h.b16 %v886
      %v1853 = vunpack.c.l.b16 %v887
      %v1854 = vunpack.c.h.b16 %v887
      %v1855 = vunpack.c.l.b16 %v888
      %v1856 = vunpack.c.h.b16 %v888
      %v1857 = vunpack.c.l.b16 %v889
      %v1858 = vunpack.c.h.b16 %v889
      %v1859 = vunpack.c.l.b16 %v890
      %v1860 = vunpack.c.h.b16 %v890
      %v1861 = vunpack.c.l.b16 %v891
      %v1862 = vunpack.c.h.b16 %v891
      %v1863 = vunpack.c.l.b16 %v892
      %v1864 = vunpack.c.h.b16 %v892
      %v1865 = vunpack.c.l.b16 %v893
      %v1866 = vunpack.c.h.b16 %v893
      %v1867 = vunpack.c.l.b16 %v894
      %v1868 = vunpack.c.h.b16 %v894
      %v1869 = vunpack.c.l.b16 %v895
      %v1870 = vunpack.c.h.b16 %v895
      %v1871 = vunpack.c.l.b16 %v896
      %v1872 = vunpack.c.h.b16 %v896
      %v1873 = vunpack.c.l.b16 %v897
      %v1874 = vunpack.c.h.b16 %v897
      %v1875 = vunpack.c.l.b16 %v898
      %v1876 = vunpack.c.h.b16 %v898
      %v1877 = vunpack.c.l.b16 %v899
      %v1878 = vunpack.c.h.b16 %v899
      %v1879 = vpack.c.b16 %v1849, %v1847
      %v1880 = vpack.c.b16 %v1850, %v1848
      %v1881 = vpack.c.b16 %v1853, %v1851
      %v1882 = vpack.c.b16 %v1854, %v1852
      %v1883 = vpack.c.b16 %v1857, %v1855
      %v1884 = vpack.c.b16 %v1858, %v1856
      %v1885 = vpack.c.b16 %v1861, %v1859
      %v1886 = vpack.c.b16 %v1862, %v1860
      %v1887 = vpack.c.b16 %v1865, %v1863
      %v1888 = vpack.c.b16 %v1866, %v1864
      %v1889 = vpack.c.b16 %v1869, %v1867
      %v1890 = vpack.c.b16 %v1870, %v1868
      %v1891 = vpack.c.b16 %v1873, %v1871
      %v1892 = vpack.c.b16 %v1874, %v1872
      %v1893 = vpack.c.b16 %v1877, %v1875
      %v1894 = vpack.c.b16 %v1878, %v1876
      %1911 = vmatprep.subr.bf16.mxu0 %v1894
      %1912 = vmatpush1.bf16.msra.mxu0 %v1893
      %1913 = vmatprep.subr.bf16.mxu0 %v1892
      %1914 = vmatpush1.bf16.msra.mxu0 %v1891
      %1915 = vmatprep.subr.bf16.mxu0 %v1890
      %1916 = vmatpush1.bf16.msra.mxu0 %v1889
      %1917 = vmatprep.subr.bf16.mxu0 %v1888
      %1918 = vmatpush1.bf16.msra.mxu0 %v1887
      %1919 = vmatprep.subr.bf16.mxu0 %v1886
      %1920 = vmatpush1.bf16.msra.mxu0 %v1885
      %1921 = vmatprep.subr.bf16.mxu0 %v1884
      %1922 = vmatpush1.bf16.msra.mxu0 %v1883
      %1923 = vmatprep.subr.bf16.mxu0 %v1882
      %1924 = vmatpush1.bf16.msra.mxu0 %v1881
      %1925 = vmatprep.subr.bf16.mxu0 %v1880
      %1926 = vmatpush1.bf16.msra.mxu0 %v1879
      %1927 = vmatprep.subr.bf16.mxu0 0
      %1928 = vmatpush2.bf16.msra.mxu0 0
      %1929 = vmatprep.subr.bf16.mxu0 0
      %1930 = vmatpush2.bf16.msra.mxu0 0
      %1931 = vmatprep.subr.bf16.mxu0 0
      %1932 = vmatpush2.bf16.msra.mxu0 0
      %1933 = vmatprep.subr.bf16.mxu0 0
      %1934 = vmatpush2.bf16.msra.mxu0 0
      %1935 = vmatprep.subr.bf16.mxu0 0
      %1936 = vmatpush2.bf16.msra.mxu0 0
      %1937 = vmatprep.subr.bf16.mxu0 0
      %1938 = vmatpush2.bf16.msra.mxu0 0
      %1939 = vmatprep.subr.bf16.mxu0 0
      %1940 = vmatpush2.bf16.msra.mxu0 0
      %1941 = vmatprep.subr.bf16.mxu0 0
      %1942 = vmatpush2.bf16.msra.mxu0 0
      %1943 = vmatprep.mubr.bf16.mxu0 0
      %1944 = vmatmul.mubr.bf16.gmra.mxu0 %v1815
      %v1945 = vpop.f32.mrf.mxu0
      %v1946 = vadd.f32 0.0, %v1945
      %v1947 = vpop.f32.mrf.mxu0
      %v1948 = vadd.f32 0.0, %v1947
      %v1949 = vpop.f32.mrf.mxu0
      %v1950 = vadd.f32 0.0, %v1949
      %v1951 = vpop.f32.mrf.mxu0
      %v1952 = vadd.f32 0.0, %v1951
      %1953 = vmatprep.mubr.bf16.mxu0 0
      %1954 = vmatmul.mubr.bf16.gmra.mxu0 %v1816
      %v1955 = vpop.f32.mrf.mxu0
      %v1956 = vadd.f32 0.0, %v1955
      %v1957 = vpop.f32.mrf.mxu0
      %v1958 = vadd.f32 0.0, %v1957
      %v1959 = vpop.f32.mrf.mxu0
      %v1960 = vadd.f32 0.0, %v1959
      %v1961 = vpop.f32.mrf.mxu0
      %v1962 = vadd.f32 0.0, %v1961
      %1963 = vmatprep.mubr.bf16.mxu0 0
      %1964 = vmatmul.mubr.bf16.gmra.mxu0 %v1817
      %v1965 = vpop.f32.mrf.mxu0
      %v1966 = vadd.f32 0.0, %v1965
      %v1967 = vpop.f32.mrf.mxu0
      %v1968 = vadd.f32 0.0, %v1967
      %v1969 = vpop.f32.mrf.mxu0
      %v1970 = vadd.f32 0.0, %v1969
      %v1971 = vpop.f32.mrf.mxu0
      %v1972 = vadd.f32 0.0, %v1971
      %1973 = vmatprep.mubr.bf16.mxu0 0
      %1974 = vmatmul.mubr.bf16.gmra.mxu0 %v1818
      %v1975 = vpop.f32.mrf.mxu0
      %v1976 = vadd.f32 0.0, %v1975
      %v1977 = vpop.f32.mrf.mxu0
      %v1978 = vadd.f32 0.0, %v1977
      %v1979 = vpop.f32.mrf.mxu0
      %v1980 = vadd.f32 0.0, %v1979
      %v1981 = vpop.f32.mrf.mxu0
      %v1982 = vadd.f32 0.0, %v1981
      %1983 = vmatprep.mubr.bf16.mxu0 0
      %1984 = vmatmul.mubr.bf16.gmra.mxu0 %v1819
      %v1985 = vpop.f32.mrf.mxu0
      %v1986 = vadd.f32 0.0, %v1985
      %v1987 = vpop.f32.mrf.mxu0
      %v1988 = vadd.f32 0.0, %v1987
      %v1989 = vpop.f32.mrf.mxu0
      %v1990 = vadd.f32 0.0, %v1989
      %v1991 = vpop.f32.mrf.mxu0
      %v1992 = vadd.f32 0.0, %v1991
      %1993 = vmatprep.mubr.bf16.mxu0 0
      %1994 = vmatmul.mubr.bf16.gmra.mxu0 %v1820
      %v1995 = vpop.f32.mrf.mxu0
      %v1996 = vadd.f32 0.0, %v1995
      %v1997 = vpop.f32.mrf.mxu0
      %v1998 = vadd.f32 0.0, %v1997
      %v1999 = vpop.f32.mrf.mxu0
      %v2000 = vadd.f32 0.0, %v1999
      %v2001 = vpop.f32.mrf.mxu0
      %v2002 = vadd.f32 0.0, %v2001
      %2003 = vmatprep.mubr.bf16.mxu0 0
      %2004 = vmatmul.mubr.bf16.gmra.mxu0 %v1821
      %v2005 = vpop.f32.mrf.mxu0
      %v2006 = vadd.f32 0.0, %v2005
      %v2007 = vpop.f32.mrf.mxu0
      %v2008 = vadd.f32 0.0, %v2007
      %v2009 = vpop.f32.mrf.mxu0
      %v2010 = vadd.f32 0.0, %v2009
      %v2011 = vpop.f32.mrf.mxu0
      %v2012 = vadd.f32 0.0, %v2011
      %2013 = vmatprep.mubr.bf16.mxu0 0
      %2014 = vmatmul.mubr.bf16.gmra.mxu0 %v1822
      %v2015 = vpop.f32.mrf.mxu0
      %v2016 = vadd.f32 0.0, %v2015
      %v2017 = vpop.f32.mrf.mxu0
      %v2018 = vadd.f32 0.0, %v2017
      %v2019 = vpop.f32.mrf.mxu0
      %v2020 = vadd.f32 0.0, %v2019
      %v2021 = vpop.f32.mrf.mxu0
      %v2022 = vadd.f32 0.0, %v2021
      %2023 = vmatprep.mubr.bf16.mxu0 0
      %2024 = vmatmul.mubr.bf16.gmra.mxu0 %v1823
      %v2025 = vpop.f32.mrf.mxu0
      %v2026 = vadd.f32 0.0, %v2025
      %v2027 = vpop.f32.mrf.mxu0
      %v2028 = vadd.f32 0.0, %v2027
      %v2029 = vpop.f32.mrf.mxu0
      %v2030 = vadd.f32 0.0, %v2029
      %v2031 = vpop.f32.mrf.mxu0
      %v2032 = vadd.f32 0.0, %v2031
      %2033 = vmatprep.mubr.bf16.mxu0 0
      %2034 = vmatmul.mubr.bf16.gmra.mxu0 %v1824
      %v2035 = vpop.f32.mrf.mxu0
      %v2036 = vadd.f32 0.0, %v2035
      %v2037 = vpop.f32.mrf.mxu0
      %v2038 = vadd.f32 0.0, %v2037
      %v2039 = vpop.f32.mrf.mxu0
      %v2040 = vadd.f32 0.0, %v2039
      %v2041 = vpop.f32.mrf.mxu0
      %v2042 = vadd.f32 0.0, %v2041
      %2043 = vmatprep.mubr.bf16.mxu0 0
      %2044 = vmatmul.mubr.bf16.gmra.mxu0 %v1825
      %v2045 = vpop.f32.mrf.mxu0
      %v2046 = vadd.f32 0.0, %v2045
      %v2047 = vpop.f32.mrf.mxu0
      %v2048 = vadd.f32 0.0, %v2047
      %v2049 = vpop.f32.mrf.mxu0
      %v2050 = vadd.f32 0.0, %v2049
      %v2051 = vpop.f32.mrf.mxu0
      %v2052 = vadd.f32 0.0, %v2051
      %2053 = vmatprep.mubr.bf16.mxu0 0
      %2054 = vmatmul.mubr.bf16.gmra.mxu0 %v1826
      %v2055 = vpop.f32.mrf.mxu0
      %v2056 = vadd.f32 0.0, %v2055
      %v2057 = vpop.f32.mrf.mxu0
      %v2058 = vadd.f32 0.0, %v2057
      %v2059 = vpop.f32.mrf.mxu0
      %v2060 = vadd.f32 0.0, %v2059
      %v2061 = vpop.f32.mrf.mxu0
      %v2062 = vadd.f32 0.0, %v2061
      %2063 = vmatprep.mubr.bf16.mxu0 0
      %2064 = vmatmul.mubr.bf16.gmra.mxu0 %v1827
      %v2065 = vpop.f32.mrf.mxu0
      %v2066 = vadd.f32 0.0, %v2065
      %v2067 = vpop.f32.mrf.mxu0
      %v2068 = vadd.f32 0.0, %v2067
      %v2069 = vpop.f32.mrf.mxu0
      %v2070 = vadd.f32 0.0, %v2069
      %v2071 = vpop.f32.mrf.mxu0
      %v2072 = vadd.f32 0.0, %v2071
      %2073 = vmatprep.mubr.bf16.mxu0 0
      %2074 = vmatmul.mubr.bf16.gmra.mxu0 %v1828
      %v2075 = vpop.f32.mrf.mxu0
      %v2076 = vadd.f32 0.0, %v2075
      %v2077 = vpop.f32.mrf.mxu0
      %v2078 = vadd.f32 0.0, %v2077
      %v2079 = vpop.f32.mrf.mxu0
      %v2080 = vadd.f32 0.0, %v2079
      %v2081 = vpop.f32.mrf.mxu0
      %v2082 = vadd.f32 0.0, %v2081
      %2083 = vmatprep.mubr.bf16.mxu0 0
      %2084 = vmatmul.mubr.bf16.gmra.mxu0 %v1829
      %v2085 = vpop.f32.mrf.mxu0
      %v2086 = vadd.f32 0.0, %v2085
      %v2087 = vpop.f32.mrf.mxu0
      %v2088 = vadd.f32 0.0, %v2087
      %v2089 = vpop.f32.mrf.mxu0
      %v2090 = vadd.f32 0.0, %v2089
      %v2091 = vpop.f32.mrf.mxu0
      %v2092 = vadd.f32 0.0, %v2091
      %2093 = vmatprep.mubr.bf16.mxu0 0
      %2094 = vmatmul.mubr.bf16.gmra.mxu0 %v1830
      %v2095 = vpop.f32.mrf.mxu0
      %v2096 = vadd.f32 0.0, %v2095
      %v2097 = vpop.f32.mrf.mxu0
      %v2098 = vadd.f32 0.0, %v2097
      %v2099 = vpop.f32.mrf.mxu0
      %v2100 = vadd.f32 0.0, %v2099
      %v2101 = vpop.f32.mrf.mxu0
      %v2102 = vadd.f32 0.0, %v2101
      %2103 = vdwg.mxu0
      %v2104 = vmul.f32 %v1306, %v1946
      %v2105 = vmul.f32 %v1497, %v1948
      %v2106 = vmul.f32 %v1310, %v1950
      %v2107 = vmul.f32 %v1500, %v1952
      %v2108 = vmul.f32 %v1316, %v1956
      %v2109 = vmul.f32 %v1505, %v1958
      %v2110 = vmul.f32 %v1320, %v1960
      %v2111 = vmul.f32 %v1508, %v1962
      %v2112 = vmul.f32 %v1326, %v1966
      %v2113 = vmul.f32 %v1513, %v1968
      %v2114 = vmul.f32 %v1330, %v1970
      %v2115 = vmul.f32 %v1516, %v1972
      %v2116 = vmul.f32 %v1336, %v1976
      %v2117 = vmul.f32 %v1521, %v1978
      %v2118 = vmul.f32 %v1340, %v1980
      %v2119 = vmul.f32 %v1524, %v1982
      %v2120 = vmul.f32 %v1346, %v1986
      %v2121 = vmul.f32 %v1529, %v1988
      %v2122 = vmul.f32 %v1350, %v1990
      %v2123 = vmul.f32 %v1532, %v1992
      %v2124 = vmul.f32 %v1356, %v1996
      %v2125 = vmul.f32 %v1537, %v1998
      %v2126 = vmul.f32 %v1360, %v2000
      %v2127 = vmul.f32 %v1540, %v2002
      %v2128 = vmul.f32 %v1366, %v2006
      %v2129 = vmul.f32 %v1545, %v2008
      %v2130 = vmul.f32 %v1370, %v2010
      %v2131 = vmul.f32 %v1548, %v2012
      %v2132 = vmul.f32 %v1376, %v2016
      %v2133 = vmul.f32 %v1553, %v2018
      %v2134 = vmul.f32 %v1380, %v2020
      %v2135 = vmul.f32 %v1556, %v2022
      %v2136 = vmul.f32 %v1386, %v2026
      %v2137 = vmul.f32 %v1561, %v2028
      %v2138 = vmul.f32 %v1390, %v2030
      %v2139 = vmul.f32 %v1564, %v2032
      %v2140 = vmul.f32 %v1396, %v2036
      %v2141 = vmul.f32 %v1569, %v2038
      %v2142 = vmul.f32 %v1400, %v2040
      %v2143 = vmul.f32 %v1572, %v2042
      %v2144 = vmul.f32 %v1406, %v2046
      %v2145 = vmul.f32 %v1577, %v2048
      %v2146 = vmul.f32 %v1410, %v2050
      %v2147 = vmul.f32 %v1580, %v2052
      %v2148 = vmul.f32 %v1416, %v2056
      %v2149 = vmul.f32 %v1585, %v2058
      %v2150 = vmul.f32 %v1420, %v2060
      %v2151 = vmul.f32 %v1588, %v2062
      %v2152 = vmul.f32 %v1426, %v2066
      %v2153 = vmul.f32 %v1593, %v2068
      %v2154 = vmul.f32 %v1430, %v2070
      %v2155 = vmul.f32 %v1596, %v2072
      %v2156 = vmul.f32 %v1436, %v2076
      %v2157 = vmul.f32 %v1601, %v2078
      %v2158 = vmul.f32 %v1440, %v2080
      %v2159 = vmul.f32 %v1604, %v2082
      %v2160 = vmul.f32 %v1446, %v2086
      %v2161 = vmul.f32 %v1609, %v2088
      %v2162 = vmul.f32 %v1450, %v2090
      %v2163 = vmul.f32 %v1612, %v2092
      %v2164 = vmul.f32 %v1456, %v2096
      %v2165 = vmul.f32 %v1617, %v2098
      %v2166 = vmul.f32 %v1460, %v2100
      %v2167 = vmul.f32 %v1620, %v2102
      %v2168 = vld [vmem:[%s5] sm:$0x3]
      %v2170 = vlaneseq
      %v2171 = vshrl.u32 %v2170, 7
      %v2172 = vsub.s32 0, %v2171
      %v2173 = vrot.slane %v2168, %v2172
      %v2174 = vlaneseq
      %v2175 = vshrl.u32 %v2174, 7
      %v2176 = vsub.s32 1, %v2175
      %v2177 = vrot.slane %v2168, %v2176
      %v2180 = vadd.f32 %v2104, %v2173
      %v2181 = vadd.f32 %v2105, %v2177
      %v2182 = vadd.f32 %v2106, %v2173
      %v2183 = vadd.f32 %v2107, %v2177
      %v2184 = vadd.f32 %v2108, %v2173
      %v2185 = vadd.f32 %v2109, %v2177
      %v2186 = vadd.f32 %v2110, %v2173
      %v2187 = vadd.f32 %v2111, %v2177
      %v2188 = vadd.f32 %v2112, %v2173
      %v2189 = vadd.f32 %v2113, %v2177
      %v2190 = vadd.f32 %v2114, %v2173
      %v2191 = vadd.f32 %v2115, %v2177
      %v2192 = vadd.f32 %v2116, %v2173
      %v2193 = vadd.f32 %v2117, %v2177
      %v2194 = vadd.f32 %v2118, %v2173
      %v2195 = vadd.f32 %v2119, %v2177
      %v2196 = vadd.f32 %v2120, %v2173
      %v2197 = vadd.f32 %v2121, %v2177
      %v2198 = vadd.f32 %v2122, %v2173
      %v2199 = vadd.f32 %v2123, %v2177
      %v2200 = vadd.f32 %v2124, %v2173
      %v2201 = vadd.f32 %v2125, %v2177
      %v2202 = vadd.f32 %v2126, %v2173
      %v2203 = vadd.f32 %v2127, %v2177
      %v2204 = vadd.f32 %v2128, %v2173
      %v2205 = vadd.f32 %v2129, %v2177
      %v2206 = vadd.f32 %v2130, %v2173
      %v2207 = vadd.f32 %v2131, %v2177
      %v2208 = vadd.f32 %v2132, %v2173
      %v2209 = vadd.f32 %v2133, %v2177
      %v2210 = vadd.f32 %v2134, %v2173
      %v2211 = vadd.f32 %v2135, %v2177
      %v2212 = vadd.f32 %v2136, %v2173
      %v2213 = vadd.f32 %v2137, %v2177
      %v2214 = vadd.f32 %v2138, %v2173
      %v2215 = vadd.f32 %v2139, %v2177
      %v2216 = vadd.f32 %v2140, %v2173
      %v2217 = vadd.f32 %v2141, %v2177
      %v2218 = vadd.f32 %v2142, %v2173
      %v2219 = vadd.f32 %v2143, %v2177
      %v2220 = vadd.f32 %v2144, %v2173
      %v2221 = vadd.f32 %v2145, %v2177
      %v2222 = vadd.f32 %v2146, %v2173
      %v2223 = vadd.f32 %v2147, %v2177
      %v2224 = vadd.f32 %v2148, %v2173
      %v2225 = vadd.f32 %v2149, %v2177
      %v2226 = vadd.f32 %v2150, %v2173
      %v2227 = vadd.f32 %v2151, %v2177
      %v2228 = vadd.f32 %v2152, %v2173
      %v2229 = vadd.f32 %v2153, %v2177
      %v2230 = vadd.f32 %v2154, %v2173
      %v2231 = vadd.f32 %v2155, %v2177
      %v2232 = vadd.f32 %v2156, %v2173
      %v2233 = vadd.f32 %v2157, %v2177
      %v2234 = vadd.f32 %v2158, %v2173
      %v2235 = vadd.f32 %v2159, %v2177
      %v2236 = vadd.f32 %v2160, %v2173
      %v2237 = vadd.f32 %v2161, %v2177
      %v2238 = vadd.f32 %v2162, %v2173
      %v2239 = vadd.f32 %v2163, %v2177
      %v2240 = vadd.f32 %v2164, %v2173
      %v2241 = vadd.f32 %v2165, %v2177
      %v2242 = vadd.f32 %v2166, %v2173
      %v2243 = vadd.f32 %v2167, %v2177
      %v2244 = vadd.f32 %v2180, %v820
      %v2245 = vadd.f32 %v2181, %v821
      %v2246 = vadd.f32 %v2182, %v822
      %v2247 = vadd.f32 %v2183, %v823
      %v2248 = vadd.f32 %v2184, %v824
      %v2249 = vadd.f32 %v2185, %v825
      %v2250 = vadd.f32 %v2186, %v826
      %v2251 = vadd.f32 %v2187, %v827
      %v2252 = vadd.f32 %v2188, %v828
      %v2253 = vadd.f32 %v2189, %v829
      %v2254 = vadd.f32 %v2190, %v830
      %v2255 = vadd.f32 %v2191, %v831
      %v2256 = vadd.f32 %v2192, %v832
      %v2257 = vadd.f32 %v2193, %v833
      %v2258 = vadd.f32 %v2194, %v834
      %v2259 = vadd.f32 %v2195, %v835
      %v2260 = vadd.f32 %v2196, %v836
      %v2261 = vadd.f32 %v2197, %v837
      %v2262 = vadd.f32 %v2198, %v838
      %v2263 = vadd.f32 %v2199, %v839
      %v2264 = vadd.f32 %v2200, %v840
      %v2265 = vadd.f32 %v2201, %v841
      %v2266 = vadd.f32 %v2202, %v842
      %v2267 = vadd.f32 %v2203, %v843
      %v2268 = vadd.f32 %v2204, %v844
      %v2269 = vadd.f32 %v2205, %v845
      %v2270 = vadd.f32 %v2206, %v846
      %v2271 = vadd.f32 %v2207, %v847
      %v2272 = vadd.f32 %v2208, %v848
      %v2273 = vadd.f32 %v2209, %v849
      %v2274 = vadd.f32 %v2210, %v850
      %v2275 = vadd.f32 %v2211, %v851
      %v2276 = vadd.f32 %v2212, %v852
      %v2277 = vadd.f32 %v2213, %v853
      %v2278 = vadd.f32 %v2214, %v854
      %v2279 = vadd.f32 %v2215, %v855
      %v2280 = vadd.f32 %v2216, %v856
      %v2281 = vadd.f32 %v2217, %v857
      %v2282 = vadd.f32 %v2218, %v858
      %v2283 = vadd.f32 %v2219, %v859
      %v2284 = vadd.f32 %v2220, %v860
      %v2285 = vadd.f32 %v2221, %v861
      %v2286 = vadd.f32 %v2222, %v862
      %v2287 = vadd.f32 %v2223, %v863
      %v2288 = vadd.f32 %v2224, %v864
      %v2289 = vadd.f32 %v2225, %v865
      %v2290 = vadd.f32 %v2226, %v866
      %v2291 = vadd.f32 %v2227, %v867
      %v2292 = vadd.f32 %v2228, %v868
      %v2293 = vadd.f32 %v2229, %v869
      %v2294 = vadd.f32 %v2230, %v870
      %v2295 = vadd.f32 %v2231, %v871
      %v2296 = vadd.f32 %v2232, %v872
      %v2297 = vadd.f32 %v2233, %v873
      %v2298 = vadd.f32 %v2234, %v874
      %v2299 = vadd.f32 %v2235, %v875
      %v2300 = vadd.f32 %v2236, %v876
      %v2301 = vadd.f32 %v2237, %v877
      %v2302 = vadd.f32 %v2238, %v878
      %v2303 = vadd.f32 %v2239, %v879
      %v2304 = vadd.f32 %v2240, %v880
      %v2305 = vadd.f32 %v2241, %v881
      %v2306 = vadd.f32 %v2242, %v882
      %v2307 = vadd.f32 %v2243, %v883
      %v2308 = vmax.f32 %v2244, 0.0
      %v2309 = vmax.f32 %v2245, 0.0
      %v2310 = vmax.f32 %v2246, 0.0
      %v2311 = vmax.f32 %v2247, 0.0
      %v2312 = vmax.f32 %v2248, 0.0
      %v2313 = vmax.f32 %v2249, 0.0
      %v2314 = vmax.f32 %v2250, 0.0
      %v2315 = vmax.f32 %v2251, 0.0
      %v2316 = vmax.f32 %v2252, 0.0
      %v2317 = vmax.f32 %v2253, 0.0
      %v2318 = vmax.f32 %v2254, 0.0
      %v2319 = vmax.f32 %v2255, 0.0
      %v2320 = vmax.f32 %v2256, 0.0
      %v2321 = vmax.f32 %v2257, 0.0
      %v2322 = vmax.f32 %v2258, 0.0
      %v2323 = vmax.f32 %v2259, 0.0
      %v2324 = vmax.f32 %v2260, 0.0
      %v2325 = vmax.f32 %v2261, 0.0
      %v2326 = vmax.f32 %v2262, 0.0
      %v2327 = vmax.f32 %v2263, 0.0
      %v2328 = vmax.f32 %v2264, 0.0
      %v2329 = vmax.f32 %v2265, 0.0
      %v2330 = vmax.f32 %v2266, 0.0
      %v2331 = vmax.f32 %v2267, 0.0
      %v2332 = vmax.f32 %v2268, 0.0
      %v2333 = vmax.f32 %v2269, 0.0
      %v2334 = vmax.f32 %v2270, 0.0
      %v2335 = vmax.f32 %v2271, 0.0
      %v2336 = vmax.f32 %v2272, 0.0
      %v2337 = vmax.f32 %v2273, 0.0
      %v2338 = vmax.f32 %v2274, 0.0
      %v2339 = vmax.f32 %v2275, 0.0
      %v2340 = vmax.f32 %v2276, 0.0
      %v2341 = vmax.f32 %v2277, 0.0
      %v2342 = vmax.f32 %v2278, 0.0
      %v2343 = vmax.f32 %v2279, 0.0
      %v2344 = vmax.f32 %v2280, 0.0
      %v2345 = vmax.f32 %v2281, 0.0
      %v2346 = vmax.f32 %v2282, 0.0
      %v2347 = vmax.f32 %v2283, 0.0
      %v2348 = vmax.f32 %v2284, 0.0
      %v2349 = vmax.f32 %v2285, 0.0
      %v2350 = vmax.f32 %v2286, 0.0
      %v2351 = vmax.f32 %v2287, 0.0
      %v2352 = vmax.f32 %v2288, 0.0
      %v2353 = vmax.f32 %v2289, 0.0
      %v2354 = vmax.f32 %v2290, 0.0
      %v2355 = vmax.f32 %v2291, 0.0
      %v2356 = vmax.f32 %v2292, 0.0
      %v2357 = vmax.f32 %v2293, 0.0
      %v2358 = vmax.f32 %v2294, 0.0
      %v2359 = vmax.f32 %v2295, 0.0
      %v2360 = vmax.f32 %v2296, 0.0
      %v2361 = vmax.f32 %v2297, 0.0
      %v2362 = vmax.f32 %v2298, 0.0
      %v2363 = vmax.f32 %v2299, 0.0
      %v2364 = vmax.f32 %v2300, 0.0
      %v2365 = vmax.f32 %v2301, 0.0
      %v2366 = vmax.f32 %v2302, 0.0
      %v2367 = vmax.f32 %v2303, 0.0
      %v2368 = vmax.f32 %v2304, 0.0
      %v2369 = vmax.f32 %v2305, 0.0
      %v2370 = vmax.f32 %v2306, 0.0
      %v2371 = vmax.f32 %v2307, 0.0
      %v2372 = vpack.c.bf16 %v2310, %v2308
      %v2373 = vpack.c.bf16 %v2311, %v2309
      %v2374 = vpack.c.bf16 %v2314, %v2312
      %v2375 = vpack.c.bf16 %v2315, %v2313
      %v2376 = vpack.c.bf16 %v2318, %v2316
      %v2377 = vpack.c.bf16 %v2319, %v2317
      %v2378 = vpack.c.bf16 %v2322, %v2320
      %v2379 = vpack.c.bf16 %v2323, %v2321
      %v2380 = vpack.c.bf16 %v2326, %v2324
      %v2381 = vpack.c.bf16 %v2327, %v2325
      %v2382 = vpack.c.bf16 %v2330, %v2328
      %v2383 = vpack.c.bf16 %v2331, %v2329
      %v2384 = vpack.c.bf16 %v2334, %v2332
      %v2385 = vpack.c.bf16 %v2335, %v2333
      %v2386 = vpack.c.bf16 %v2338, %v2336
      %v2387 = vpack.c.bf16 %v2339, %v2337
      %v2388 = vpack.c.bf16 %v2342, %v2340
      %v2389 = vpack.c.bf16 %v2343, %v2341
      %v2390 = vpack.c.bf16 %v2346, %v2344
      %v2391 = vpack.c.bf16 %v2347, %v2345
      %v2392 = vpack.c.bf16 %v2350, %v2348
      %v2393 = vpack.c.bf16 %v2351, %v2349
      %v2394 = vpack.c.bf16 %v2354, %v2352
      %v2395 = vpack.c.bf16 %v2355, %v2353
      %v2396 = vpack.c.bf16 %v2358, %v2356
      %v2397 = vpack.c.bf16 %v2359, %v2357
      %v2398 = vpack.c.bf16 %v2362, %v2360
      %v2399 = vpack.c.bf16 %v2363, %v2361
      %v2400 = vpack.c.bf16 %v2366, %v2364
      %v2401 = vpack.c.bf16 %v2367, %v2365
      %v2402 = vpack.c.bf16 %v2370, %v2368
      %v2403 = vpack.c.bf16 %v2371, %v2369
      %s2404 = scalar_lea.vmem %s3, 384
      %v2405 = vld [vmem:[%s2404] sm:$0xff]
      %v2406 = vld [vmem:[%s2404 + $0x8] sm:$0xf]
      %v2407 = vld [vmem:[%s2404 + $0xc] sm:$0xff]
      %v2408 = vld [vmem:[%s2404 + $0x14] sm:$0xf]
      %v2409 = vld [vmem:[%s2404 + $0x18] sm:$0xff]
      %v2410 = vld [vmem:[%s2404 + $0x20] sm:$0xf]
      %v2411 = vld [vmem:[%s2404 + $0x24] sm:$0xff]
      %v2412 = vld [vmem:[%s2404 + $0x2c] sm:$0xf]
      %v2413 = vld [vmem:[%s2404 + $0x30] sm:$0xff]
      %v2414 = vld [vmem:[%s2404 + $0x38] sm:$0xf]
      %v2415 = vld [vmem:[%s2404 + $0x3c] sm:$0xff]
      %v2416 = vld [vmem:[%s2404 + $0x44] sm:$0xf]
      %v2417 = vld [vmem:[%s2404 + $0x48] sm:$0xff]
      %v2418 = vld [vmem:[%s2404 + $0x50] sm:$0xf]
      %v2419 = vld [vmem:[%s2404 + $0x54] sm:$0xff]
      %v2420 = vld [vmem:[%s2404 + $0x5c] sm:$0xf]
      %v2421 = vld [vmem:[%s2404 + $0x60] sm:$0xff]
      %v2422 = vld [vmem:[%s2404 + $0x68] sm:$0xf]
      %v2423 = vld [vmem:[%s2404 + $0x6c] sm:$0xff]
      %v2424 = vld [vmem:[%s2404 + $0x74] sm:$0xf]
      %v2425 = vld [vmem:[%s2404 + $0x78] sm:$0xff]
      %v2426 = vld [vmem:[%s2404 + $0x80] sm:$0xf]
      %v2427 = vld [vmem:[%s2404 + $0x84] sm:$0xff]
      %v2428 = vld [vmem:[%s2404 + $0x8c] sm:$0xf]
      %v2429 = vld [vmem:[%s2404 + $0x90] sm:$0xff]
      %v2430 = vld [vmem:[%s2404 + $0x98] sm:$0xf]
      %v2431 = vld [vmem:[%s2404 + $0x9c] sm:$0xff]
      %v2432 = vld [vmem:[%s2404 + $0xa4] sm:$0xf]
      %v2433 = vld [vmem:[%s2404 + $0xa8] sm:$0xff]
      %v2434 = vld [vmem:[%s2404 + $0xb0] sm:$0xf]
      %v2435 = vld [vmem:[%s2404 + $0xb4] sm:$0xff]
      %v2436 = vld [vmem:[%s2404 + $0xbc] sm:$0xf]
      %v2437 = vld [vmem:[%s2404 + $0xc0] sm:$0xff]
      %v2438 = vld [vmem:[%s2404 + $0xc8] sm:$0xf]
      %v2439 = vld [vmem:[%s2404 + $0xcc] sm:$0xff]
      %v2440 = vld [vmem:[%s2404 + $0xd4] sm:$0xf]
      %v2441 = vld [vmem:[%s2404 + $0xd8] sm:$0xff]
      %v2442 = vld [vmem:[%s2404 + $0xe0] sm:$0xf]
      %v2443 = vld [vmem:[%s2404 + $0xe4] sm:$0xff]
      %v2444 = vld [vmem:[%s2404 + $0xec] sm:$0xf]
      %v2445 = vld [vmem:[%s2404 + $0xf0] sm:$0xff]
      %v2446 = vld [vmem:[%s2404 + $0xf8] sm:$0xf]
      %v2447 = vld [vmem:[%s2404 + $0xfc] sm:$0xff]
      %v2448 = vld [vmem:[%s2404 + $0x104] sm:$0xf]
      %v2449 = vld [vmem:[%s2404 + $0x108] sm:$0xff]
      %v2450 = vld [vmem:[%s2404 + $0x110] sm:$0xf]
      %v2451 = vld [vmem:[%s2404 + $0x114] sm:$0xff]
      %v2452 = vld [vmem:[%s2404 + $0x11c] sm:$0xf]
      %v2453 = vld [vmem:[%s2404 + $0x120] sm:$0xff]
      %v2454 = vld [vmem:[%s2404 + $0x128] sm:$0xf]
      %v2455 = vld [vmem:[%s2404 + $0x12c] sm:$0xff]
      %v2456 = vld [vmem:[%s2404 + $0x134] sm:$0xf]
      %v2457 = vld [vmem:[%s2404 + $0x138] sm:$0xff]
      %v2458 = vld [vmem:[%s2404 + $0x140] sm:$0xf]
      %v2459 = vld [vmem:[%s2404 + $0x144] sm:$0xff]
      %v2460 = vld [vmem:[%s2404 + $0x14c] sm:$0xf]
      %v2461 = vld [vmem:[%s2404 + $0x150] sm:$0xff]
      %v2462 = vld [vmem:[%s2404 + $0x158] sm:$0xf]
      %v2463 = vld [vmem:[%s2404 + $0x15c] sm:$0xff]
      %v2464 = vld [vmem:[%s2404 + $0x164] sm:$0xf]
      %v2465 = vld [vmem:[%s2404 + $0x168] sm:$0xff]
      %v2466 = vld [vmem:[%s2404 + $0x170] sm:$0xf]
      %v2467 = vld [vmem:[%s2404 + $0x174] sm:$0xff]
      %v2468 = vld [vmem:[%s2404 + $0x17c] sm:$0xf]
      %s2469 = scalar_lea.vmem %s4, 3
      %v2470 = vld [vmem:[%s2469] sm:$0x7]
      %v2472 = vlaneseq
      %v2473 = vshrl.u32 %v2472, 7
      %v2474 = vsub.s32 0, %v2473
      %v2475 = vrot.slane %v2470, %v2474
      %v2476 = vlaneseq
      %v2477 = vshrl.u32 %v2476, 7
      %v2478 = vsub.s32 1, %v2477
      %v2479 = vrot.slane %v2470, %v2478
      %v2480 = vlaneseq
      %v2481 = vshrl.u32 %v2480, 7
      %v2482 = vsub.s32 2, %v2481
      %v2483 = vrot.slane %v2470, %v2482
      %v2551 = vunpack.c.l.b16 %v2405
      %v2552 = vunpack.c.h.b16 %v2405
      %v2553 = vunpack.c.l.b16 %v2406
      %v2554 = vunpack.c.l.b16 %v2407
      %v2555 = vunpack.c.h.b16 %v2407
      %v2556 = vunpack.c.l.b16 %v2408
      %v2557 = vunpack.c.l.b16 %v2409
      %v2558 = vunpack.c.h.b16 %v2409
      %v2559 = vunpack.c.l.b16 %v2410
      %v2560 = vunpack.c.l.b16 %v2411
      %v2561 = vunpack.c.h.b16 %v2411
      %v2562 = vunpack.c.l.b16 %v2412
      %v2563 = vunpack.c.l.b16 %v2413
      %v2564 = vunpack.c.h.b16 %v2413
      %v2565 = vunpack.c.l.b16 %v2414
      %v2566 = vunpack.c.l.b16 %v2415
      %v2567 = vunpack.c.h.b16 %v2415
      %v2568 = vunpack.c.l.b16 %v2416
      %v2569 = vunpack.c.l.b16 %v2417
      %v2570 = vunpack.c.h.b16 %v2417
      %v2571 = vunpack.c.l.b16 %v2418
      %v2572 = vunpack.c.l.b16 %v2419
      %v2573 = vunpack.c.h.b16 %v2419
      %v2574 = vunpack.c.l.b16 %v2420
      %v2575 = vunpack.c.l.b16 %v2421
      %v2576 = vunpack.c.h.b16 %v2421
      %v2577 = vunpack.c.l.b16 %v2422
      %v2578 = vunpack.c.l.b16 %v2423
      %v2579 = vunpack.c.h.b16 %v2423
      %v2580 = vunpack.c.l.b16 %v2424
      %v2581 = vunpack.c.l.b16 %v2425
      %v2582 = vunpack.c.h.b16 %v2425
      %v2583 = vunpack.c.l.b16 %v2426
      %v2584 = vunpack.c.l.b16 %v2427
      %v2585 = vunpack.c.h.b16 %v2427
      %v2586 = vunpack.c.l.b16 %v2428
      %v2587 = vunpack.c.l.b16 %v2429
      %v2588 = vunpack.c.h.b16 %v2429
      %v2589 = vunpack.c.l.b16 %v2430
      %v2590 = vunpack.c.l.b16 %v2431
      %v2591 = vunpack.c.h.b16 %v2431
      %v2592 = vunpack.c.l.b16 %v2432
      %v2593 = vunpack.c.l.b16 %v2433
      %v2594 = vunpack.c.h.b16 %v2433
      %v2595 = vunpack.c.l.b16 %v2434
      %v2596 = vunpack.c.l.b16 %v2435
      %v2597 = vunpack.c.h.b16 %v2435
      %v2598 = vunpack.c.l.b16 %v2436
      %v2599 = vunpack.c.l.b16 %v2437
      %v2600 = vunpack.c.h.b16 %v2437
      %v2601 = vunpack.c.l.b16 %v2438
      %v2602 = vunpack.c.l.b16 %v2439
      %v2603 = vunpack.c.h.b16 %v2439
      %v2604 = vunpack.c.l.b16 %v2440
      %v2605 = vunpack.c.l.b16 %v2441
      %v2606 = vunpack.c.h.b16 %v2441
      %v2607 = vunpack.c.l.b16 %v2442
      %v2608 = vunpack.c.l.b16 %v2443
      %v2609 = vunpack.c.h.b16 %v2443
      %v2610 = vunpack.c.l.b16 %v2444
      %v2611 = vunpack.c.l.b16 %v2445
      %v2612 = vunpack.c.h.b16 %v2445
      %v2613 = vunpack.c.l.b16 %v2446
      %v2614 = vunpack.c.l.b16 %v2447
      %v2615 = vunpack.c.h.b16 %v2447
      %v2616 = vunpack.c.l.b16 %v2448
      %v2617 = vunpack.c.l.b16 %v2449
      %v2618 = vunpack.c.h.b16 %v2449
      %v2619 = vunpack.c.l.b16 %v2450
      %v2620 = vunpack.c.l.b16 %v2451
      %v2621 = vunpack.c.h.b16 %v2451
      %v2622 = vunpack.c.l.b16 %v2452
      %v2623 = vunpack.c.l.b16 %v2453
      %v2624 = vunpack.c.h.b16 %v2453
      %v2625 = vunpack.c.l.b16 %v2454
      %v2626 = vunpack.c.l.b16 %v2455
      %v2627 = vunpack.c.h.b16 %v2455
      %v2628 = vunpack.c.l.b16 %v2456
      %v2629 = vunpack.c.l.b16 %v2457
      %v2630 = vunpack.c.h.b16 %v2457
      %v2631 = vunpack.c.l.b16 %v2458
      %v2632 = vunpack.c.l.b16 %v2459
      %v2633 = vunpack.c.h.b16 %v2459
      %v2634 = vunpack.c.l.b16 %v2460
      %v2635 = vunpack.c.l.b16 %v2461
      %v2636 = vunpack.c.h.b16 %v2461
      %v2637 = vunpack.c.l.b16 %v2462
      %v2638 = vunpack.c.l.b16 %v2463
      %v2639 = vunpack.c.h.b16 %v2463
      %v2640 = vunpack.c.l.b16 %v2464
      %v2641 = vunpack.c.l.b16 %v2465
      %v2642 = vunpack.c.h.b16 %v2465
      %v2643 = vunpack.c.l.b16 %v2466
      %v2644 = vunpack.c.l.b16 %v2467
      %v2645 = vunpack.c.h.b16 %v2467
      %v2646 = vunpack.c.l.b16 %v2468
      %v2647 = vpack.c.b16 %v2554, %v2551
      %v2648 = vpack.c.b16 %v2555, %v2552
      %v2649 = vpack.c.b16 %v2556, %v2553
      %v2650 = vpack.c.b16 %v2560, %v2557
      %v2651 = vpack.c.b16 %v2561, %v2558
      %v2652 = vpack.c.b16 %v2562, %v2559
      %v2653 = vpack.c.b16 %v2566, %v2563
      %v2654 = vpack.c.b16 %v2567, %v2564
      %v2655 = vpack.c.b16 %v2568, %v2565
      %v2656 = vpack.c.b16 %v2572, %v2569
      %v2657 = vpack.c.b16 %v2573, %v2570
      %v2658 = vpack.c.b16 %v2574, %v2571
      %v2659 = vpack.c.b16 %v2578, %v2575
      %v2660 = vpack.c.b16 %v2579, %v2576
      %v2661 = vpack.c.b16 %v2580, %v2577
      %v2662 = vpack.c.b16 %v2584, %v2581
      %v2663 = vpack.c.b16 %v2585, %v2582
      %v2664 = vpack.c.b16 %v2586, %v2583
      %v2665 = vpack.c.b16 %v2590, %v2587
      %v2666 = vpack.c.b16 %v2591, %v2588
      %v2667 = vpack.c.b16 %v2592, %v2589
      %v2668 = vpack.c.b16 %v2596, %v2593
      %v2669 = vpack.c.b16 %v2597, %v2594
      %v2670 = vpack.c.b16 %v2598, %v2595
      %v2671 = vpack.c.b16 %v2602, %v2599
      %v2672 = vpack.c.b16 %v2603, %v2600
      %v2673 = vpack.c.b16 %v2604, %v2601
      %v2674 = vpack.c.b16 %v2608, %v2605
      %v2675 = vpack.c.b16 %v2609, %v2606
      %v2676 = vpack.c.b16 %v2610, %v2607
      %v2677 = vpack.c.b16 %v2614, %v2611
      %v2678 = vpack.c.b16 %v2615, %v2612
      %v2679 = vpack.c.b16 %v2616, %v2613
      %v2680 = vpack.c.b16 %v2620, %v2617
      %v2681 = vpack.c.b16 %v2621, %v2618
      %v2682 = vpack.c.b16 %v2622, %v2619
      %v2683 = vpack.c.b16 %v2626, %v2623
      %v2684 = vpack.c.b16 %v2627, %v2624
      %v2685 = vpack.c.b16 %v2628, %v2625
      %v2686 = vpack.c.b16 %v2632, %v2629
      %v2687 = vpack.c.b16 %v2633, %v2630
      %v2688 = vpack.c.b16 %v2634, %v2631
      %v2689 = vpack.c.b16 %v2638, %v2635
      %v2690 = vpack.c.b16 %v2639, %v2636
      %v2691 = vpack.c.b16 %v2640, %v2637
      %v2692 = vpack.c.b16 %v2644, %v2641
      %v2693 = vpack.c.b16 %v2645, %v2642
      %v2694 = vpack.c.b16 %v2646, %v2643
      %2743 = vmatprep.subr.bf16.mxu0 %v2669
      %2744 = vmatpush1.bf16.msra.mxu0 %v2668
      %2745 = vmatprep.subr.bf16.mxu0 %v2666
      %2746 = vmatpush1.bf16.msra.mxu0 %v2665
      %2747 = vmatprep.subr.bf16.mxu0 %v2663
      %2748 = vmatpush1.bf16.msra.mxu0 %v2662
      %2749 = vmatprep.subr.bf16.mxu0 %v2660
      %2750 = vmatpush1.bf16.msra.mxu0 %v2659
      %2751 = vmatprep.subr.bf16.mxu0 %v2657
      %2752 = vmatpush1.bf16.msra.mxu0 %v2656
      %2753 = vmatprep.subr.bf16.mxu0 %v2654
      %2754 = vmatpush1.bf16.msra.mxu0 %v2653
      %2755 = vmatprep.subr.bf16.mxu0 %v2651
      %2756 = vmatpush1.bf16.msra.mxu0 %v2650
      %2757 = vmatprep.subr.bf16.mxu0 %v2648
      %2758 = vmatpush1.bf16.msra.mxu0 %v2647
      %2759 = vmatprep.subr.bf16.mxu0 %v2693
      %2760 = vmatpush2.bf16.msra.mxu0 %v2692
      %2761 = vmatprep.subr.bf16.mxu0 %v2690
      %2762 = vmatpush2.bf16.msra.mxu0 %v2689
      %2763 = vmatprep.subr.bf16.mxu0 %v2687
      %2764 = vmatpush2.bf16.msra.mxu0 %v2686
      %2765 = vmatprep.subr.bf16.mxu0 %v2684
      %2766 = vmatpush2.bf16.msra.mxu0 %v2683
      %2767 = vmatprep.subr.bf16.mxu0 %v2681
      %2768 = vmatpush2.bf16.msra.mxu0 %v2680
      %2769 = vmatprep.subr.bf16.mxu0 %v2678
      %2770 = vmatpush2.bf16.msra.mxu0 %v2677
      %2771 = vmatprep.subr.bf16.mxu0 %v2675
      %2772 = vmatpush2.bf16.msra.mxu0 %v2674
      %2773 = vmatprep.subr.bf16.mxu0 %v2672
      %2774 = vmatpush2.bf16.msra.mxu0 %v2671
      %2775 = vmatprep.mubr.bf16.mxu0 %v2373
      %2776 = vmatmul.mubr.bf16.gmra.mxu0 %v2372
      %v2777 = vpop.f32.mrf.mxu0
      %v2778 = vadd.f32 %v2475, %v2777
      %v2779 = vpop.f32.mrf.mxu0
      %v2780 = vadd.f32 %v2479, %v2779
      %v2781 = vpop.f32.mrf.mxu0
      %v2782 = vadd.f32 %v2475, %v2781
      %v2783 = vpop.f32.mrf.mxu0
      %v2784 = vadd.f32 %v2479, %v2783
      %2785 = vmatprep.mubr.bf16.mxu0 %v2375
      %2786 = vmatmul.mubr.bf16.gmra.mxu0 %v2374
      %v2787 = vpop.f32.mrf.mxu0
      %v2788 = vadd.f32 %v2475, %v2787
      %v2789 = vpop.f32.mrf.mxu0
      %v2790 = vadd.f32 %v2479, %v2789
      %v2791 = vpop.f32.mrf.mxu0
      %v2792 = vadd.f32 %v2475, %v2791
      %v2793 = vpop.f32.mrf.mxu0
      %v2794 = vadd.f32 %v2479, %v2793
      %2795 = vmatprep.mubr.bf16.mxu0 %v2377
      %2796 = vmatmul.mubr.bf16.gmra.mxu0 %v2376
      %v2797 = vpop.f32.mrf.mxu0
      %v2798 = vadd.f32 %v2475, %v2797
      %v2799 = vpop.f32.mrf.mxu0
      %v2800 = vadd.f32 %v2479, %v2799
      %v2801 = vpop.f32.mrf.mxu0
      %v2802 = vadd.f32 %v2475, %v2801
      %v2803 = vpop.f32.mrf.mxu0
      %v2804 = vadd.f32 %v2479, %v2803
      %2805 = vmatprep.mubr.bf16.mxu0 %v2379
      %2806 = vmatmul.mubr.bf16.gmra.mxu0 %v2378
      %v2807 = vpop.f32.mrf.mxu0
      %v2808 = vadd.f32 %v2475, %v2807
      %v2809 = vpop.f32.mrf.mxu0
      %v2810 = vadd.f32 %v2479, %v2809
      %v2811 = vpop.f32.mrf.mxu0
      %v2812 = vadd.f32 %v2475, %v2811
      %v2813 = vpop.f32.mrf.mxu0
      %v2814 = vadd.f32 %v2479, %v2813
      %2815 = vmatprep.mubr.bf16.mxu0 %v2381
      %2816 = vmatmul.mubr.bf16.gmra.mxu0 %v2380
      %v2817 = vpop.f32.mrf.mxu0
      %v2818 = vadd.f32 %v2475, %v2817
      %v2819 = vpop.f32.mrf.mxu0
      %v2820 = vadd.f32 %v2479, %v2819
      %v2821 = vpop.f32.mrf.mxu0
      %v2822 = vadd.f32 %v2475, %v2821
      %v2823 = vpop.f32.mrf.mxu0
      %v2824 = vadd.f32 %v2479, %v2823
      %2825 = vmatprep.mubr.bf16.mxu0 %v2383
      %2826 = vmatmul.mubr.bf16.gmra.mxu0 %v2382
      %v2827 = vpop.f32.mrf.mxu0
      %v2828 = vadd.f32 %v2475, %v2827
      %v2829 = vpop.f32.mrf.mxu0
      %v2830 = vadd.f32 %v2479, %v2829
      %v2831 = vpop.f32.mrf.mxu0
      %v2832 = vadd.f32 %v2475, %v2831
      %v2833 = vpop.f32.mrf.mxu0
      %v2834 = vadd.f32 %v2479, %v2833
      %2835 = vmatprep.mubr.bf16.mxu0 %v2385
      %2836 = vmatmul.mubr.bf16.gmra.mxu0 %v2384
      %v2837 = vpop.f32.mrf.mxu0
      %v2838 = vadd.f32 %v2475, %v2837
      %v2839 = vpop.f32.mrf.mxu0
      %v2840 = vadd.f32 %v2479, %v2839
      %v2841 = vpop.f32.mrf.mxu0
      %v2842 = vadd.f32 %v2475, %v2841
      %v2843 = vpop.f32.mrf.mxu0
      %v2844 = vadd.f32 %v2479, %v2843
      %2845 = vmatprep.mubr.bf16.mxu0 %v2387
      %2846 = vmatmul.mubr.bf16.gmra.mxu0 %v2386
      %v2847 = vpop.f32.mrf.mxu0
      %v2848 = vadd.f32 %v2475, %v2847
      %v2849 = vpop.f32.mrf.mxu0
      %v2850 = vadd.f32 %v2479, %v2849
      %v2851 = vpop.f32.mrf.mxu0
      %v2852 = vadd.f32 %v2475, %v2851
      %v2853 = vpop.f32.mrf.mxu0
      %v2854 = vadd.f32 %v2479, %v2853
      %2855 = vmatprep.mubr.bf16.mxu0 %v2389
      %2856 = vmatmul.mubr.bf16.gmra.mxu0 %v2388
      %v2857 = vpop.f32.mrf.mxu0
      %v2858 = vadd.f32 %v2475, %v2857
      %v2859 = vpop.f32.mrf.mxu0
      %v2860 = vadd.f32 %v2479, %v2859
      %v2861 = vpop.f32.mrf.mxu0
      %v2862 = vadd.f32 %v2475, %v2861
      %v2863 = vpop.f32.mrf.mxu0
      %v2864 = vadd.f32 %v2479, %v2863
      %2865 = vmatprep.mubr.bf16.mxu0 %v2391
      %2866 = vmatmul.mubr.bf16.gmra.mxu0 %v2390
      %v2867 = vpop.f32.mrf.mxu0
      %v2868 = vadd.f32 %v2475, %v2867
      %v2869 = vpop.f32.mrf.mxu0
      %v2870 = vadd.f32 %v2479, %v2869
      %v2871 = vpop.f32.mrf.mxu0
      %v2872 = vadd.f32 %v2475, %v2871
      %v2873 = vpop.f32.mrf.mxu0
      %v2874 = vadd.f32 %v2479, %v2873
      %2875 = vmatprep.mubr.bf16.mxu0 %v2393
      %2876 = vmatmul.mubr.bf16.gmra.mxu0 %v2392
      %v2877 = vpop.f32.mrf.mxu0
      %v2878 = vadd.f32 %v2475, %v2877
      %v2879 = vpop.f32.mrf.mxu0
      %v2880 = vadd.f32 %v2479, %v2879
      %v2881 = vpop.f32.mrf.mxu0
      %v2882 = vadd.f32 %v2475, %v2881
      %v2883 = vpop.f32.mrf.mxu0
      %v2884 = vadd.f32 %v2479, %v2883
      %2885 = vmatprep.mubr.bf16.mxu0 %v2395
      %2886 = vmatmul.mubr.bf16.gmra.mxu0 %v2394
      %v2887 = vpop.f32.mrf.mxu0
      %v2888 = vadd.f32 %v2475, %v2887
      %v2889 = vpop.f32.mrf.mxu0
      %v2890 = vadd.f32 %v2479, %v2889
      %v2891 = vpop.f32.mrf.mxu0
      %v2892 = vadd.f32 %v2475, %v2891
      %v2893 = vpop.f32.mrf.mxu0
      %v2894 = vadd.f32 %v2479, %v2893
      %2895 = vmatprep.mubr.bf16.mxu0 %v2397
      %2896 = vmatmul.mubr.bf16.gmra.mxu0 %v2396
      %v2897 = vpop.f32.mrf.mxu0
      %v2898 = vadd.f32 %v2475, %v2897
      %v2899 = vpop.f32.mrf.mxu0
      %v2900 = vadd.f32 %v2479, %v2899
      %v2901 = vpop.f32.mrf.mxu0
      %v2902 = vadd.f32 %v2475, %v2901
      %v2903 = vpop.f32.mrf.mxu0
      %v2904 = vadd.f32 %v2479, %v2903
      %2905 = vmatprep.mubr.bf16.mxu0 %v2399
      %2906 = vmatmul.mubr.bf16.gmra.mxu0 %v2398
      %v2907 = vpop.f32.mrf.mxu0
      %v2908 = vadd.f32 %v2475, %v2907
      %v2909 = vpop.f32.mrf.mxu0
      %v2910 = vadd.f32 %v2479, %v2909
      %v2911 = vpop.f32.mrf.mxu0
      %v2912 = vadd.f32 %v2475, %v2911
      %v2913 = vpop.f32.mrf.mxu0
      %v2914 = vadd.f32 %v2479, %v2913
      %2915 = vmatprep.mubr.bf16.mxu0 %v2401
      %2916 = vmatmul.mubr.bf16.gmra.mxu0 %v2400
      %v2917 = vpop.f32.mrf.mxu0
      %v2918 = vadd.f32 %v2475, %v2917
      %v2919 = vpop.f32.mrf.mxu0
      %v2920 = vadd.f32 %v2479, %v2919
      %v2921 = vpop.f32.mrf.mxu0
      %v2922 = vadd.f32 %v2475, %v2921
      %v2923 = vpop.f32.mrf.mxu0
      %v2924 = vadd.f32 %v2479, %v2923
      %2925 = vmatprep.mubr.bf16.mxu0 %v2403
      %2926 = vmatmul.mubr.bf16.gmra.mxu0 %v2402
      %v2927 = vpop.f32.mrf.mxu0
      %v2928 = vadd.f32 %v2475, %v2927
      %v2929 = vpop.f32.mrf.mxu0
      %v2930 = vadd.f32 %v2479, %v2929
      %v2931 = vpop.f32.mrf.mxu0
      %v2932 = vadd.f32 %v2475, %v2931
      %v2933 = vpop.f32.mrf.mxu0
      %v2934 = vadd.f32 %v2479, %v2933
      %2935 = vdwg.mxu0
      %2936 = vmatprep.subr.bf16.mxu0 0
      %2937 = vmatpush1.bf16.msra.mxu0 %v2670
      %2938 = vmatprep.subr.bf16.mxu0 0
      %2939 = vmatpush1.bf16.msra.mxu0 %v2667
      %2940 = vmatprep.subr.bf16.mxu0 0
      %2941 = vmatpush1.bf16.msra.mxu0 %v2664
      %2942 = vmatprep.subr.bf16.mxu0 0
      %2943 = vmatpush1.bf16.msra.mxu0 %v2661
      %2944 = vmatprep.subr.bf16.mxu0 0
      %2945 = vmatpush1.bf16.msra.mxu0 %v2658
      %2946 = vmatprep.subr.bf16.mxu0 0
      %2947 = vmatpush1.bf16.msra.mxu0 %v2655
      %2948 = vmatprep.subr.bf16.mxu0 0
      %2949 = vmatpush1.bf16.msra.mxu0 %v2652
      %2950 = vmatprep.subr.bf16.mxu0 0
      %2951 = vmatpush1.bf16.msra.mxu0 %v2649
      %2952 = vmatprep.subr.bf16.mxu0 0
      %2953 = vmatpush2.bf16.msra.mxu0 %v2694
      %2954 = vmatprep.subr.bf16.mxu0 0
      %2955 = vmatpush2.bf16.msra.mxu0 %v2691
      %2956 = vmatprep.subr.bf16.mxu0 0
      %2957 = vmatpush2.bf16.msra.mxu0 %v2688
      %2958 = vmatprep.subr.bf16.mxu0 0
      %2959 = vmatpush2.bf16.msra.mxu0 %v2685
      %2960 = vmatprep.subr.bf16.mxu0 0
      %2961 = vmatpush2.bf16.msra.mxu0 %v2682
      %2962 = vmatprep.subr.bf16.mxu0 0
      %2963 = vmatpush2.bf16.msra.mxu0 %v2679
      %2964 = vmatprep.subr.bf16.mxu0 0
      %2965 = vmatpush2.bf16.msra.mxu0 %v2676
      %2966 = vmatprep.subr.bf16.mxu0 0
      %2967 = vmatpush2.bf16.msra.mxu0 %v2673
      %2968 = vmatprep.mubr.bf16.mxu0 %v2373
      %2969 = vmatmul.mubr.bf16.gmra.mxu0 %v2372
      %v2970 = vpop.f32.mrf.mxu0
      %v2971 = vadd.f32 %v2483, %v2970
      %v2972 = vpop.f32.mrf.mxu0
      %v2973 = vpop.f32.mrf.mxu0
      %v2974 = vadd.f32 %v2483, %v2973
      %v2975 = vpop.f32.mrf.mxu0
      %2976 = vmatprep.mubr.bf16.mxu0 %v2375
      %2977 = vmatmul.mubr.bf16.gmra.mxu0 %v2374
      %v2978 = vpop.f32.mrf.mxu0
      %v2979 = vadd.f32 %v2483, %v2978
      %v2980 = vpop.f32.mrf.mxu0
      %v2981 = vpop.f32.mrf.mxu0
      %v2982 = vadd.f32 %v2483, %v2981
      %v2983 = vpop.f32.mrf.mxu0
      %2984 = vmatprep.mubr.bf16.mxu0 %v2377
      %2985 = vmatmul.mubr.bf16.gmra.mxu0 %v2376
      %v2986 = vpop.f32.mrf.mxu0
      %v2987 = vadd.f32 %v2483, %v2986
      %v2988 = vpop.f32.mrf.mxu0
      %v2989 = vpop.f32.mrf.mxu0
      %v2990 = vadd.f32 %v2483, %v2989
      %v2991 = vpop.f32.mrf.mxu0
      %2992 = vmatprep.mubr.bf16.mxu0 %v2379
      %2993 = vmatmul.mubr.bf16.gmra.mxu0 %v2378
      %v2994 = vpop.f32.mrf.mxu0
      %v2995 = vadd.f32 %v2483, %v2994
      %v2996 = vpop.f32.mrf.mxu0
      %v2997 = vpop.f32.mrf.mxu0
      %v2998 = vadd.f32 %v2483, %v2997
      %v2999 = vpop.f32.mrf.mxu0
      %3000 = vmatprep.mubr.bf16.mxu0 %v2381
      %3001 = vmatmul.mubr.bf16.gmra.mxu0 %v2380
      %v3002 = vpop.f32.mrf.mxu0
      %v3003 = vadd.f32 %v2483, %v3002
      %v3004 = vpop.f32.mrf.mxu0
      %v3005 = vpop.f32.mrf.mxu0
      %v3006 = vadd.f32 %v2483, %v3005
      %v3007 = vpop.f32.mrf.mxu0
      %3008 = vmatprep.mubr.bf16.mxu0 %v2383
      %3009 = vmatmul.mubr.bf16.gmra.mxu0 %v2382
      %v3010 = vpop.f32.mrf.mxu0
      %v3011 = vadd.f32 %v2483, %v3010
      %v3012 = vpop.f32.mrf.mxu0
      %v3013 = vpop.f32.mrf.mxu0
      %v3014 = vadd.f32 %v2483, %v3013
      %v3015 = vpop.f32.mrf.mxu0
      %3016 = vmatprep.mubr.bf16.mxu0 %v2385
      %3017 = vmatmul.mubr.bf16.gmra.mxu0 %v2384
      %v3018 = vpop.f32.mrf.mxu0
      %v3019 = vadd.f32 %v2483, %v3018
      %v3020 = vpop.f32.mrf.mxu0
      %v3021 = vpop.f32.mrf.mxu0
      %v3022 = vadd.f32 %v2483, %v3021
      %v3023 = vpop.f32.mrf.mxu0
      %3024 = vmatprep.mubr.bf16.mxu0 %v2387
      %3025 = vmatmul.mubr.bf16.gmra.mxu0 %v2386
      %v3026 = vpop.f32.mrf.mxu0
      %v3027 = vadd.f32 %v2483, %v3026
      %v3028 = vpop.f32.mrf.mxu0
      %v3029 = vpop.f32.mrf.mxu0
      %v3030 = vadd.f32 %v2483, %v3029
      %v3031 = vpop.f32.mrf.mxu0
      %3032 = vmatprep.mubr.bf16.mxu0 %v2389
      %3033 = vmatmul.mubr.bf16.gmra.mxu0 %v2388
      %v3034 = vpop.f32.mrf.mxu0
      %v3035 = vadd.f32 %v2483, %v3034
      %v3036 = vpop.f32.mrf.mxu0
      %v3037 = vpop.f32.mrf.mxu0
      %v3038 = vadd.f32 %v2483, %v3037
      %v3039 = vpop.f32.mrf.mxu0
      %3040 = vmatprep.mubr.bf16.mxu0 %v2391
      %3041 = vmatmul.mubr.bf16.gmra.mxu0 %v2390
      %v3042 = vpop.f32.mrf.mxu0
      %v3043 = vadd.f32 %v2483, %v3042
      %v3044 = vpop.f32.mrf.mxu0
      %v3045 = vpop.f32.mrf.mxu0
      %v3046 = vadd.f32 %v2483, %v3045
      %v3047 = vpop.f32.mrf.mxu0
      %3048 = vmatprep.mubr.bf16.mxu0 %v2393
      %3049 = vmatmul.mubr.bf16.gmra.mxu0 %v2392
      %v3050 = vpop.f32.mrf.mxu0
      %v3051 = vadd.f32 %v2483, %v3050
      %v3052 = vpop.f32.mrf.mxu0
      %v3053 = vpop.f32.mrf.mxu0
      %v3054 = vadd.f32 %v2483, %v3053
      %v3055 = vpop.f32.mrf.mxu0
      %3056 = vmatprep.mubr.bf16.mxu0 %v2395
      %3057 = vmatmul.mubr.bf16.gmra.mxu0 %v2394
      %v3058 = vpop.f32.mrf.mxu0
      %v3059 = vadd.f32 %v2483, %v3058
      %v3060 = vpop.f32.mrf.mxu0
      %v3061 = vpop.f32.mrf.mxu0
      %v3062 = vadd.f32 %v2483, %v3061
      %v3063 = vpop.f32.mrf.mxu0
      %3064 = vmatprep.mubr.bf16.mxu0 %v2397
      %3065 = vmatmul.mubr.bf16.gmra.mxu0 %v2396
      %v3066 = vpop.f32.mrf.mxu0
      %v3067 = vadd.f32 %v2483, %v3066
      %v3068 = vpop.f32.mrf.mxu0
      %v3069 = vpop.f32.mrf.mxu0
      %v3070 = vadd.f32 %v2483, %v3069
      %v3071 = vpop.f32.mrf.mxu0
      %3072 = vmatprep.mubr.bf16.mxu0 %v2399
      %3073 = vmatmul.mubr.bf16.gmra.mxu0 %v2398
      %v3074 = vpop.f32.mrf.mxu0
      %v3075 = vadd.f32 %v2483, %v3074
      %v3076 = vpop.f32.mrf.mxu0
      %v3077 = vpop.f32.mrf.mxu0
      %v3078 = vadd.f32 %v2483, %v3077
      %v3079 = vpop.f32.mrf.mxu0
      %3080 = vmatprep.mubr.bf16.mxu0 %v2401
      %3081 = vmatmul.mubr.bf16.gmra.mxu0 %v2400
      %v3082 = vpop.f32.mrf.mxu0
      %v3083 = vadd.f32 %v2483, %v3082
      %v3084 = vpop.f32.mrf.mxu0
      %v3085 = vpop.f32.mrf.mxu0
      %v3086 = vadd.f32 %v2483, %v3085
      %v3087 = vpop.f32.mrf.mxu0
      %3088 = vmatprep.mubr.bf16.mxu0 %v2403
      %3089 = vmatmul.mubr.bf16.gmra.mxu0 %v2402
      %v3090 = vpop.f32.mrf.mxu0
      %v3091 = vadd.f32 %v2483, %v3090
      %v3092 = vpop.f32.mrf.mxu0
      %v3093 = vpop.f32.mrf.mxu0
      %v3094 = vadd.f32 %v2483, %v3093
      %v3095 = vpop.f32.mrf.mxu0
      %3096 = vdwg.mxu0
      %v3097 = vxor.u32 %v2778, 2147483648
      %v3098 = vxor.u32 %v2782, 2147483648
      %v3099 = vxor.u32 %v2788, 2147483648
      %v3100 = vxor.u32 %v2792, 2147483648
      %v3101 = vxor.u32 %v2798, 2147483648
      %v3102 = vxor.u32 %v2802, 2147483648
      %v3103 = vxor.u32 %v2808, 2147483648
      %v3104 = vxor.u32 %v2812, 2147483648
      %v3105 = vxor.u32 %v2818, 2147483648
      %v3106 = vxor.u32 %v2822, 2147483648
      %v3107 = vxor.u32 %v2828, 2147483648
      %v3108 = vxor.u32 %v2832, 2147483648
      %v3109 = vxor.u32 %v2838, 2147483648
      %v3110 = vxor.u32 %v2842, 2147483648
      %v3111 = vxor.u32 %v2848, 2147483648
      %v3112 = vxor.u32 %v2852, 2147483648
      %v3113 = vxor.u32 %v2858, 2147483648
      %v3114 = vxor.u32 %v2862, 2147483648
      %v3115 = vxor.u32 %v2868, 2147483648
      %v3116 = vxor.u32 %v2872, 2147483648
      %v3117 = vxor.u32 %v2878, 2147483648
      %v3118 = vxor.u32 %v2882, 2147483648
      %v3119 = vxor.u32 %v2888, 2147483648
      %v3120 = vxor.u32 %v2892, 2147483648
      %v3121 = vxor.u32 %v2898, 2147483648
      %v3122 = vxor.u32 %v2902, 2147483648
      %v3123 = vxor.u32 %v2908, 2147483648
      %v3124 = vxor.u32 %v2912, 2147483648
      %v3125 = vxor.u32 %v2918, 2147483648
      %v3126 = vxor.u32 %v2922, 2147483648
      %v3127 = vxor.u32 %v2928, 2147483648
      %v3128 = vxor.u32 %v2932, 2147483648
      %v3129 = vmul.f32 %v3097, 1.442695
      %v3130 = vpow.pop %v3129
      %v3131 = vmul.f32 %v3098, 1.442695
      %v3132 = vpow.pop %v3131
      %v3133 = vmul.f32 %v3099, 1.442695
      %v3134 = vpow.pop %v3133
      %v3135 = vmul.f32 %v3100, 1.442695
      %v3136 = vpow.pop %v3135
      %v3137 = vmul.f32 %v3101, 1.442695
      %v3138 = vpow.pop %v3137
      %v3139 = vmul.f32 %v3102, 1.442695
      %v3140 = vpow.pop %v3139
      %v3141 = vmul.f32 %v3103, 1.442695
      %v3142 = vpow.pop %v3141
      %v3143 = vmul.f32 %v3104, 1.442695
      %v3144 = vpow.pop %v3143
      %v3145 = vmul.f32 %v3105, 1.442695
      %v3146 = vpow.pop %v3145
      %v3147 = vmul.f32 %v3106, 1.442695
      %v3148 = vpow.pop %v3147
      %v3149 = vmul.f32 %v3107, 1.442695
      %v3150 = vpow.pop %v3149
      %v3151 = vmul.f32 %v3108, 1.442695
      %v3152 = vpow.pop %v3151
      %v3153 = vmul.f32 %v3109, 1.442695
      %v3154 = vpow.pop %v3153
      %v3155 = vmul.f32 %v3110, 1.442695
      %v3156 = vpow.pop %v3155
      %v3157 = vmul.f32 %v3111, 1.442695
      %v3158 = vpow.pop %v3157
      %v3159 = vmul.f32 %v3112, 1.442695
      %v3160 = vpow.pop %v3159
      %v3161 = vmul.f32 %v3113, 1.442695
      %v3162 = vpow.pop %v3161
      %v3163 = vmul.f32 %v3114, 1.442695
      %v3164 = vpow.pop %v3163
      %v3165 = vmul.f32 %v3115, 1.442695
      %v3166 = vpow.pop %v3165
      %v3167 = vmul.f32 %v3116, 1.442695
      %v3168 = vpow.pop %v3167
      %v3169 = vmul.f32 %v3117, 1.442695
      %v3170 = vpow.pop %v3169
      %v3171 = vmul.f32 %v3118, 1.442695
      %v3172 = vpow.pop %v3171
      %v3173 = vmul.f32 %v3119, 1.442695
      %v3174 = vpow.pop %v3173
      %v3175 = vmul.f32 %v3120, 1.442695
      %v3176 = vpow.pop %v3175
      %v3177 = vmul.f32 %v3121, 1.442695
      %v3178 = vpow.pop %v3177
      %v3179 = vmul.f32 %v3122, 1.442695
      %v3180 = vpow.pop %v3179
      %v3181 = vmul.f32 %v3123, 1.442695
      %v3182 = vpow.pop %v3181
      %v3183 = vmul.f32 %v3124, 1.442695
      %v3184 = vpow.pop %v3183
      %v3185 = vmul.f32 %v3125, 1.442695
      %v3186 = vpow.pop %v3185
      %v3187 = vmul.f32 %v3126, 1.442695
      %v3188 = vpow.pop %v3187
      %v3189 = vmul.f32 %v3127, 1.442695
      %v3190 = vpow.pop %v3189
      %v3191 = vmul.f32 %v3128, 1.442695
      %v3192 = vpow.pop %v3191
      %v3193 = vadd.f32 %v3130, 1.0
      %v3194 = vadd.f32 %v3132, 1.0
      %v3195 = vadd.f32 %v3134, 1.0
      %v3196 = vadd.f32 %v3136, 1.0
      %v3197 = vadd.f32 %v3138, 1.0
      %v3198 = vadd.f32 %v3140, 1.0
      %v3199 = vadd.f32 %v3142, 1.0
      %v3200 = vadd.f32 %v3144, 1.0
      %v3201 = vadd.f32 %v3146, 1.0
      %v3202 = vadd.f32 %v3148, 1.0
      %v3203 = vadd.f32 %v3150, 1.0
      %v3204 = vadd.f32 %v3152, 1.0
      %v3205 = vadd.f32 %v3154, 1.0
      %v3206 = vadd.f32 %v3156, 1.0
      %v3207 = vadd.f32 %v3158, 1.0
      %v3208 = vadd.f32 %v3160, 1.0
      %v3209 = vadd.f32 %v3162, 1.0
      %v3210 = vadd.f32 %v3164, 1.0
      %v3211 = vadd.f32 %v3166, 1.0
      %v3212 = vadd.f32 %v3168, 1.0
      %v3213 = vadd.f32 %v3170, 1.0
      %v3214 = vadd.f32 %v3172, 1.0
      %v3215 = vadd.f32 %v3174, 1.0
      %v3216 = vadd.f32 %v3176, 1.0
      %v3217 = vadd.f32 %v3178, 1.0
      %v3218 = vadd.f32 %v3180, 1.0
      %v3219 = vadd.f32 %v3182, 1.0
      %v3220 = vadd.f32 %v3184, 1.0
      %v3221 = vadd.f32 %v3186, 1.0
      %v3222 = vadd.f32 %v3188, 1.0
      %v3223 = vadd.f32 %v3190, 1.0
      %v3224 = vadd.f32 %v3192, 1.0
      %v3225 = vrcp.pop %v3193
      %v3226 = vmul.f32 1.0, %v3225
      %v3227 = vrcp.pop %v3194
      %v3228 = vmul.f32 1.0, %v3227
      %v3229 = vrcp.pop %v3195
      %v3230 = vmul.f32 1.0, %v3229
      %v3231 = vrcp.pop %v3196
      %v3232 = vmul.f32 1.0, %v3231
      %v3233 = vrcp.pop %v3197
      %v3234 = vmul.f32 1.0, %v3233
      %v3235 = vrcp.pop %v3198
      %v3236 = vmul.f32 1.0, %v3235
      %v3237 = vrcp.pop %v3199
      %v3238 = vmul.f32 1.0, %v3237
      %v3239 = vrcp.pop %v3200
      %v3240 = vmul.f32 1.0, %v3239
      %v3241 = vrcp.pop %v3201
      %v3242 = vmul.f32 1.0, %v3241
      %v3243 = vrcp.pop %v3202
      %v3244 = vmul.f32 1.0, %v3243
      %v3245 = vrcp.pop %v3203
      %v3246 = vmul.f32 1.0, %v3245
      %v3247 = vrcp.pop %v3204
      %v3248 = vmul.f32 1.0, %v3247
      %v3249 = vrcp.pop %v3205
      %v3250 = vmul.f32 1.0, %v3249
      %v3251 = vrcp.pop %v3206
      %v3252 = vmul.f32 1.0, %v3251
      %v3253 = vrcp.pop %v3207
      %v3254 = vmul.f32 1.0, %v3253
      %v3255 = vrcp.pop %v3208
      %v3256 = vmul.f32 1.0, %v3255
      %v3257 = vrcp.pop %v3209
      %v3258 = vmul.f32 1.0, %v3257
      %v3259 = vrcp.pop %v3210
      %v3260 = vmul.f32 1.0, %v3259
      %v3261 = vrcp.pop %v3211
      %v3262 = vmul.f32 1.0, %v3261
      %v3263 = vrcp.pop %v3212
      %v3264 = vmul.f32 1.0, %v3263
      %v3265 = vrcp.pop %v3213
      %v3266 = vmul.f32 1.0, %v3265
      %v3267 = vrcp.pop %v3214
      %v3268 = vmul.f32 1.0, %v3267
      %v3269 = vrcp.pop %v3215
      %v3270 = vmul.f32 1.0, %v3269
      %v3271 = vrcp.pop %v3216
      %v3272 = vmul.f32 1.0, %v3271
      %v3273 = vrcp.pop %v3217
      %v3274 = vmul.f32 1.0, %v3273
      %v3275 = vrcp.pop %v3218
      %v3276 = vmul.f32 1.0, %v3275
      %v3277 = vrcp.pop %v3219
      %v3278 = vmul.f32 1.0, %v3277
      %v3279 = vrcp.pop %v3220
      %v3280 = vmul.f32 1.0, %v3279
      %v3281 = vrcp.pop %v3221
      %v3282 = vmul.f32 1.0, %v3281
      %v3283 = vrcp.pop %v3222
      %v3284 = vmul.f32 1.0, %v3283
      %v3285 = vrcp.pop %v3223
      %v3286 = vmul.f32 1.0, %v3285
      %v3287 = vrcp.pop %v3224
      %v3288 = vmul.f32 1.0, %v3287
      %v3289 = vpack.c.bf16 %v3228, %v3226
      %v3290 = vpack.c.bf16 %v3232, %v3230
      %v3291 = vpack.c.bf16 %v3236, %v3234
      %v3292 = vpack.c.bf16 %v3240, %v3238
      %v3293 = vpack.c.bf16 %v3244, %v3242
      %v3294 = vpack.c.bf16 %v3248, %v3246
      %v3295 = vpack.c.bf16 %v3252, %v3250
      %v3296 = vpack.c.bf16 %v3256, %v3254
      %v3297 = vpack.c.bf16 %v3260, %v3258
      %v3298 = vpack.c.bf16 %v3264, %v3262
      %v3299 = vpack.c.bf16 %v3268, %v3266
      %v3300 = vpack.c.bf16 %v3272, %v3270
      %v3301 = vpack.c.bf16 %v3276, %v3274
      %v3302 = vpack.c.bf16 %v3280, %v3278
      %v3303 = vpack.c.bf16 %v3284, %v3282
      %v3304 = vpack.c.bf16 %v3288, %v3286
      %3305 = vmatprep.subr.bf16.mxu0 %v1894
      %3306 = vmatpush1.bf16.msra.mxu0 %v1893
      %3307 = vmatprep.subr.bf16.mxu0 %v1892
      %3308 = vmatpush1.bf16.msra.mxu0 %v1891
      %3309 = vmatprep.subr.bf16.mxu0 %v1890
      %3310 = vmatpush1.bf16.msra.mxu0 %v1889
      %3311 = vmatprep.subr.bf16.mxu0 %v1888
      %3312 = vmatpush1.bf16.msra.mxu0 %v1887
      %3313 = vmatprep.subr.bf16.mxu0 %v1886
      %3314 = vmatpush1.bf16.msra.mxu0 %v1885
      %3315 = vmatprep.subr.bf16.mxu0 %v1884
      %3316 = vmatpush1.bf16.msra.mxu0 %v1883
      %3317 = vmatprep.subr.bf16.mxu0 %v1882
      %3318 = vmatpush1.bf16.msra.mxu0 %v1881
      %3319 = vmatprep.subr.bf16.mxu0 %v1880
      %3320 = vmatpush1.bf16.msra.mxu0 %v1879
      %3321 = vmatprep.subr.bf16.mxu0 0
      %3322 = vmatpush2.bf16.msra.mxu0 0
      %3323 = vmatprep.subr.bf16.mxu0 0
      %3324 = vmatpush2.bf16.msra.mxu0 0
      %3325 = vmatprep.subr.bf16.mxu0 0
      %3326 = vmatpush2.bf16.msra.mxu0 0
      %3327 = vmatprep.subr.bf16.mxu0 0
      %3328 = vmatpush2.bf16.msra.mxu0 0
      %3329 = vmatprep.subr.bf16.mxu0 0
      %3330 = vmatpush2.bf16.msra.mxu0 0
      %3331 = vmatprep.subr.bf16.mxu0 0
      %3332 = vmatpush2.bf16.msra.mxu0 0
      %3333 = vmatprep.subr.bf16.mxu0 0
      %3334 = vmatpush2.bf16.msra.mxu0 0
      %3335 = vmatprep.subr.bf16.mxu0 0
      %3336 = vmatpush2.bf16.msra.mxu0 0
      %3337 = vmatprep.mubr.bf16.mxu0 0
      %3338 = vmatmul.mubr.bf16.gmra.mxu0 %v3289
      %v3339 = vpop.f32.mrf.mxu0
      %v3340 = vadd.f32 0.0, %v3339
      %v3341 = vpop.f32.mrf.mxu0
      %v3342 = vadd.f32 0.0, %v3341
      %v3343 = vpop.f32.mrf.mxu0
      %v3344 = vadd.f32 0.0, %v3343
      %v3345 = vpop.f32.mrf.mxu0
      %v3346 = vadd.f32 0.0, %v3345
      %3347 = vmatprep.mubr.bf16.mxu0 0
      %3348 = vmatmul.mubr.bf16.gmra.mxu0 %v3290
      %v3349 = vpop.f32.mrf.mxu0
      %v3350 = vadd.f32 0.0, %v3349
      %v3351 = vpop.f32.mrf.mxu0
      %v3352 = vadd.f32 0.0, %v3351
      %v3353 = vpop.f32.mrf.mxu0
      %v3354 = vadd.f32 0.0, %v3353
      %v3355 = vpop.f32.mrf.mxu0
      %v3356 = vadd.f32 0.0, %v3355
      %3357 = vmatprep.mubr.bf16.mxu0 0
      %3358 = vmatmul.mubr.bf16.gmra.mxu0 %v3291
      %v3359 = vpop.f32.mrf.mxu0
      %v3360 = vadd.f32 0.0, %v3359
      %v3361 = vpop.f32.mrf.mxu0
      %v3362 = vadd.f32 0.0, %v3361
      %v3363 = vpop.f32.mrf.mxu0
      %v3364 = vadd.f32 0.0, %v3363
      %v3365 = vpop.f32.mrf.mxu0
      %v3366 = vadd.f32 0.0, %v3365
      %3367 = vmatprep.mubr.bf16.mxu0 0
      %3368 = vmatmul.mubr.bf16.gmra.mxu0 %v3292
      %v3369 = vpop.f32.mrf.mxu0
      %v3370 = vadd.f32 0.0, %v3369
      %v3371 = vpop.f32.mrf.mxu0
      %v3372 = vadd.f32 0.0, %v3371
      %v3373 = vpop.f32.mrf.mxu0
      %v3374 = vadd.f32 0.0, %v3373
      %v3375 = vpop.f32.mrf.mxu0
      %v3376 = vadd.f32 0.0, %v3375
      %3377 = vmatprep.mubr.bf16.mxu0 0
      %3378 = vmatmul.mubr.bf16.gmra.mxu0 %v3293
      %v3379 = vpop.f32.mrf.mxu0
      %v3380 = vadd.f32 0.0, %v3379
      %v3381 = vpop.f32.mrf.mxu0
      %v3382 = vadd.f32 0.0, %v3381
      %v3383 = vpop.f32.mrf.mxu0
      %v3384 = vadd.f32 0.0, %v3383
      %v3385 = vpop.f32.mrf.mxu0
      %v3386 = vadd.f32 0.0, %v3385
      %3387 = vmatprep.mubr.bf16.mxu0 0
      %3388 = vmatmul.mubr.bf16.gmra.mxu0 %v3294
      %v3389 = vpop.f32.mrf.mxu0
      %v3390 = vadd.f32 0.0, %v3389
      %v3391 = vpop.f32.mrf.mxu0
      %v3392 = vadd.f32 0.0, %v3391
      %v3393 = vpop.f32.mrf.mxu0
      %v3394 = vadd.f32 0.0, %v3393
      %v3395 = vpop.f32.mrf.mxu0
      %v3396 = vadd.f32 0.0, %v3395
      %3397 = vmatprep.mubr.bf16.mxu0 0
      %3398 = vmatmul.mubr.bf16.gmra.mxu0 %v3295
      %v3399 = vpop.f32.mrf.mxu0
      %v3400 = vadd.f32 0.0, %v3399
      %v3401 = vpop.f32.mrf.mxu0
      %v3402 = vadd.f32 0.0, %v3401
      %v3403 = vpop.f32.mrf.mxu0
      %v3404 = vadd.f32 0.0, %v3403
      %v3405 = vpop.f32.mrf.mxu0
      %v3406 = vadd.f32 0.0, %v3405
      %3407 = vmatprep.mubr.bf16.mxu0 0
      %3408 = vmatmul.mubr.bf16.gmra.mxu0 %v3296
      %v3409 = vpop.f32.mrf.mxu0
      %v3410 = vadd.f32 0.0, %v3409
      %v3411 = vpop.f32.mrf.mxu0
      %v3412 = vadd.f32 0.0, %v3411
      %v3413 = vpop.f32.mrf.mxu0
      %v3414 = vadd.f32 0.0, %v3413
      %v3415 = vpop.f32.mrf.mxu0
      %v3416 = vadd.f32 0.0, %v3415
      %3417 = vmatprep.mubr.bf16.mxu0 0
      %3418 = vmatmul.mubr.bf16.gmra.mxu0 %v3297
      %v3419 = vpop.f32.mrf.mxu0
      %v3420 = vadd.f32 0.0, %v3419
      %v3421 = vpop.f32.mrf.mxu0
      %v3422 = vadd.f32 0.0, %v3421
      %v3423 = vpop.f32.mrf.mxu0
      %v3424 = vadd.f32 0.0, %v3423
      %v3425 = vpop.f32.mrf.mxu0
      %v3426 = vadd.f32 0.0, %v3425
      %3427 = vmatprep.mubr.bf16.mxu0 0
      %3428 = vmatmul.mubr.bf16.gmra.mxu0 %v3298
      %v3429 = vpop.f32.mrf.mxu0
      %v3430 = vadd.f32 0.0, %v3429
      %v3431 = vpop.f32.mrf.mxu0
      %v3432 = vadd.f32 0.0, %v3431
      %v3433 = vpop.f32.mrf.mxu0
      %v3434 = vadd.f32 0.0, %v3433
      %v3435 = vpop.f32.mrf.mxu0
      %v3436 = vadd.f32 0.0, %v3435
      %3437 = vmatprep.mubr.bf16.mxu0 0
      %3438 = vmatmul.mubr.bf16.gmra.mxu0 %v3299
      %v3439 = vpop.f32.mrf.mxu0
      %v3440 = vadd.f32 0.0, %v3439
      %v3441 = vpop.f32.mrf.mxu0
      %v3442 = vadd.f32 0.0, %v3441
      %v3443 = vpop.f32.mrf.mxu0
      %v3444 = vadd.f32 0.0, %v3443
      %v3445 = vpop.f32.mrf.mxu0
      %v3446 = vadd.f32 0.0, %v3445
      %3447 = vmatprep.mubr.bf16.mxu0 0
      %3448 = vmatmul.mubr.bf16.gmra.mxu0 %v3300
      %v3449 = vpop.f32.mrf.mxu0
      %v3450 = vadd.f32 0.0, %v3449
      %v3451 = vpop.f32.mrf.mxu0
      %v3452 = vadd.f32 0.0, %v3451
      %v3453 = vpop.f32.mrf.mxu0
      %v3454 = vadd.f32 0.0, %v3453
      %v3455 = vpop.f32.mrf.mxu0
      %v3456 = vadd.f32 0.0, %v3455
      %3457 = vmatprep.mubr.bf16.mxu0 0
      %3458 = vmatmul.mubr.bf16.gmra.mxu0 %v3301
      %v3459 = vpop.f32.mrf.mxu0
      %v3460 = vadd.f32 0.0, %v3459
      %v3461 = vpop.f32.mrf.mxu0
      %v3462 = vadd.f32 0.0, %v3461
      %v3463 = vpop.f32.mrf.mxu0
      %v3464 = vadd.f32 0.0, %v3463
      %v3465 = vpop.f32.mrf.mxu0
      %v3466 = vadd.f32 0.0, %v3465
      %3467 = vmatprep.mubr.bf16.mxu0 0
      %3468 = vmatmul.mubr.bf16.gmra.mxu0 %v3302
      %v3469 = vpop.f32.mrf.mxu0
      %v3470 = vadd.f32 0.0, %v3469
      %v3471 = vpop.f32.mrf.mxu0
      %v3472 = vadd.f32 0.0, %v3471
      %v3473 = vpop.f32.mrf.mxu0
      %v3474 = vadd.f32 0.0, %v3473
      %v3475 = vpop.f32.mrf.mxu0
      %v3476 = vadd.f32 0.0, %v3475
      %3477 = vmatprep.mubr.bf16.mxu0 0
      %3478 = vmatmul.mubr.bf16.gmra.mxu0 %v3303
      %v3479 = vpop.f32.mrf.mxu0
      %v3480 = vadd.f32 0.0, %v3479
      %v3481 = vpop.f32.mrf.mxu0
      %v3482 = vadd.f32 0.0, %v3481
      %v3483 = vpop.f32.mrf.mxu0
      %v3484 = vadd.f32 0.0, %v3483
      %v3485 = vpop.f32.mrf.mxu0
      %v3486 = vadd.f32 0.0, %v3485
      %3487 = vmatprep.mubr.bf16.mxu0 0
      %3488 = vmatmul.mubr.bf16.gmra.mxu0 %v3304
      %v3489 = vpop.f32.mrf.mxu0
      %v3490 = vadd.f32 0.0, %v3489
      %v3491 = vpop.f32.mrf.mxu0
      %v3492 = vadd.f32 0.0, %v3491
      %v3493 = vpop.f32.mrf.mxu0
      %v3494 = vadd.f32 0.0, %v3493
      %v3495 = vpop.f32.mrf.mxu0
      %v3496 = vadd.f32 0.0, %v3495
      %3497 = vdwg.mxu0
      %v3498 = vmul.f32 %v2780, %v3340
      %v3499 = vmul.f32 %v2971, %v3342
      %v3500 = vmul.f32 %v2784, %v3344
      %v3501 = vmul.f32 %v2974, %v3346
      %v3502 = vmul.f32 %v2790, %v3350
      %v3503 = vmul.f32 %v2979, %v3352
      %v3504 = vmul.f32 %v2794, %v3354
      %v3505 = vmul.f32 %v2982, %v3356
      %v3506 = vmul.f32 %v2800, %v3360
      %v3507 = vmul.f32 %v2987, %v3362
      %v3508 = vmul.f32 %v2804, %v3364
      %v3509 = vmul.f32 %v2990, %v3366
      %v3510 = vmul.f32 %v2810, %v3370
      %v3511 = vmul.f32 %v2995, %v3372
      %v3512 = vmul.f32 %v2814, %v3374
      %v3513 = vmul.f32 %v2998, %v3376
      %v3514 = vmul.f32 %v2820, %v3380
      %v3515 = vmul.f32 %v3003, %v3382
      %v3516 = vmul.f32 %v2824, %v3384
      %v3517 = vmul.f32 %v3006, %v3386
      %v3518 = vmul.f32 %v2830, %v3390
      %v3519 = vmul.f32 %v3011, %v3392
      %v3520 = vmul.f32 %v2834, %v3394
      %v3521 = vmul.f32 %v3014, %v3396
      %v3522 = vmul.f32 %v2840, %v3400
      %v3523 = vmul.f32 %v3019, %v3402
      %v3524 = vmul.f32 %v2844, %v3404
      %v3525 = vmul.f32 %v3022, %v3406
      %v3526 = vmul.f32 %v2850, %v3410
      %v3527 = vmul.f32 %v3027, %v3412
      %v3528 = vmul.f32 %v2854, %v3414
      %v3529 = vmul.f32 %v3030, %v3416
      %v3530 = vmul.f32 %v2860, %v3420
      %v3531 = vmul.f32 %v3035, %v3422
      %v3532 = vmul.f32 %v2864, %v3424
      %v3533 = vmul.f32 %v3038, %v3426
      %v3534 = vmul.f32 %v2870, %v3430
      %v3535 = vmul.f32 %v3043, %v3432
      %v3536 = vmul.f32 %v2874, %v3434
      %v3537 = vmul.f32 %v3046, %v3436
      %v3538 = vmul.f32 %v2880, %v3440
      %v3539 = vmul.f32 %v3051, %v3442
      %v3540 = vmul.f32 %v2884, %v3444
      %v3541 = vmul.f32 %v3054, %v3446
      %v3542 = vmul.f32 %v2890, %v3450
      %v3543 = vmul.f32 %v3059, %v3452
      %v3544 = vmul.f32 %v2894, %v3454
      %v3545 = vmul.f32 %v3062, %v3456
      %v3546 = vmul.f32 %v2900, %v3460
      %v3547 = vmul.f32 %v3067, %v3462
      %v3548 = vmul.f32 %v2904, %v3464
      %v3549 = vmul.f32 %v3070, %v3466
      %v3550 = vmul.f32 %v2910, %v3470
      %v3551 = vmul.f32 %v3075, %v3472
      %v3552 = vmul.f32 %v2914, %v3474
      %v3553 = vmul.f32 %v3078, %v3476
      %v3554 = vmul.f32 %v2920, %v3480
      %v3555 = vmul.f32 %v3083, %v3482
      %v3556 = vmul.f32 %v2924, %v3484
      %v3557 = vmul.f32 %v3086, %v3486
      %v3558 = vmul.f32 %v2930, %v3490
      %v3559 = vmul.f32 %v3091, %v3492
      %v3560 = vmul.f32 %v2934, %v3494
      %v3561 = vmul.f32 %v3094, %v3496
      %s3562 = scalar_lea.vmem %s5, 2
      %v3563 = vld [vmem:[%s3562] sm:$0x3]
      %v3565 = vlaneseq
      %v3566 = vshrl.u32 %v3565, 7
      %v3567 = vsub.s32 0, %v3566
      %v3568 = vrot.slane %v3563, %v3567
      %v3569 = vlaneseq
      %v3570 = vshrl.u32 %v3569, 7
      %v3571 = vsub.s32 1, %v3570
      %v3572 = vrot.slane %v3563, %v3571
      %v3575 = vadd.f32 %v3498, %v3568
      %v3576 = vadd.f32 %v3499, %v3572
      %v3577 = vadd.f32 %v3500, %v3568
      %v3578 = vadd.f32 %v3501, %v3572
      %v3579 = vadd.f32 %v3502, %v3568
      %v3580 = vadd.f32 %v3503, %v3572
      %v3581 = vadd.f32 %v3504, %v3568
      %v3582 = vadd.f32 %v3505, %v3572
      %v3583 = vadd.f32 %v3506, %v3568
      %v3584 = vadd.f32 %v3507, %v3572
      %v3585 = vadd.f32 %v3508, %v3568
      %v3586 = vadd.f32 %v3509, %v3572
      %v3587 = vadd.f32 %v3510, %v3568
      %v3588 = vadd.f32 %v3511, %v3572
      %v3589 = vadd.f32 %v3512, %v3568
      %v3590 = vadd.f32 %v3513, %v3572
      %v3591 = vadd.f32 %v3514, %v3568
      %v3592 = vadd.f32 %v3515, %v3572
      %v3593 = vadd.f32 %v3516, %v3568
      %v3594 = vadd.f32 %v3517, %v3572
      %v3595 = vadd.f32 %v3518, %v3568
      %v3596 = vadd.f32 %v3519, %v3572
      %v3597 = vadd.f32 %v3520, %v3568
      %v3598 = vadd.f32 %v3521, %v3572
      %v3599 = vadd.f32 %v3522, %v3568
      %v3600 = vadd.f32 %v3523, %v3572
      %v3601 = vadd.f32 %v3524, %v3568
      %v3602 = vadd.f32 %v3525, %v3572
      %v3603 = vadd.f32 %v3526, %v3568
      %v3604 = vadd.f32 %v3527, %v3572
      %v3605 = vadd.f32 %v3528, %v3568
      %v3606 = vadd.f32 %v3529, %v3572
      %v3607 = vadd.f32 %v3530, %v3568
      %v3608 = vadd.f32 %v3531, %v3572
      %v3609 = vadd.f32 %v3532, %v3568
      %v3610 = vadd.f32 %v3533, %v3572
      %v3611 = vadd.f32 %v3534, %v3568
      %v3612 = vadd.f32 %v3535, %v3572
      %v3613 = vadd.f32 %v3536, %v3568
      %v3614 = vadd.f32 %v3537, %v3572
      %v3615 = vadd.f32 %v3538, %v3568
      %v3616 = vadd.f32 %v3539, %v3572
      %v3617 = vadd.f32 %v3540, %v3568
      %v3618 = vadd.f32 %v3541, %v3572
      %v3619 = vadd.f32 %v3542, %v3568
      %v3620 = vadd.f32 %v3543, %v3572
      %v3621 = vadd.f32 %v3544, %v3568
      %v3622 = vadd.f32 %v3545, %v3572
      %v3623 = vadd.f32 %v3546, %v3568
      %v3624 = vadd.f32 %v3547, %v3572
      %v3625 = vadd.f32 %v3548, %v3568
      %v3626 = vadd.f32 %v3549, %v3572
      %v3627 = vadd.f32 %v3550, %v3568
      %v3628 = vadd.f32 %v3551, %v3572
      %v3629 = vadd.f32 %v3552, %v3568
      %v3630 = vadd.f32 %v3553, %v3572
      %v3631 = vadd.f32 %v3554, %v3568
      %v3632 = vadd.f32 %v3555, %v3572
      %v3633 = vadd.f32 %v3556, %v3568
      %v3634 = vadd.f32 %v3557, %v3572
      %v3635 = vadd.f32 %v3558, %v3568
      %v3636 = vadd.f32 %v3559, %v3572
      %v3637 = vadd.f32 %v3560, %v3568
      %v3638 = vadd.f32 %v3561, %v3572
      %v3639 = vadd.f32 %v3575, %v2308
      %v3640 = vadd.f32 %v3576, %v2309
      %v3641 = vadd.f32 %v3577, %v2310
      %v3642 = vadd.f32 %v3578, %v2311
      %v3643 = vadd.f32 %v3579, %v2312
      %v3644 = vadd.f32 %v3580, %v2313
      %v3645 = vadd.f32 %v3581, %v2314
      %v3646 = vadd.f32 %v3582, %v2315
      %v3647 = vadd.f32 %v3583, %v2316
      %v3648 = vadd.f32 %v3584, %v2317
      %v3649 = vadd.f32 %v3585, %v2318
      %v3650 = vadd.f32 %v3586, %v2319
      %v3651 = vadd.f32 %v3587, %v2320
      %v3652 = vadd.f32 %v3588, %v2321
      %v3653 = vadd.f32 %v3589, %v2322
      %v3654 = vadd.f32 %v3590, %v2323
      %v3655 = vadd.f32 %v3591, %v2324
      %v3656 = vadd.f32 %v3592, %v2325
      %v3657 = vadd.f32 %v3593, %v2326
      %v3658 = vadd.f32 %v3594, %v2327
      %v3659 = vadd.f32 %v3595, %v2328
      %v3660 = vadd.f32 %v3596, %v2329
      %v3661 = vadd.f32 %v3597, %v2330
      %v3662 = vadd.f32 %v3598, %v2331
      %v3663 = vadd.f32 %v3599, %v2332
      %v3664 = vadd.f32 %v3600, %v2333
      %v3665 = vadd.f32 %v3601, %v2334
      %v3666 = vadd.f32 %v3602, %v2335
      %v3667 = vadd.f32 %v3603, %v2336
      %v3668 = vadd.f32 %v3604, %v2337
      %v3669 = vadd.f32 %v3605, %v2338
      %v3670 = vadd.f32 %v3606, %v2339
      %v3671 = vadd.f32 %v3607, %v2340
      %v3672 = vadd.f32 %v3608, %v2341
      %v3673 = vadd.f32 %v3609, %v2342
      %v3674 = vadd.f32 %v3610, %v2343
      %v3675 = vadd.f32 %v3611, %v2344
      %v3676 = vadd.f32 %v3612, %v2345
      %v3677 = vadd.f32 %v3613, %v2346
      %v3678 = vadd.f32 %v3614, %v2347
      %v3679 = vadd.f32 %v3615, %v2348
      %v3680 = vadd.f32 %v3616, %v2349
      %v3681 = vadd.f32 %v3617, %v2350
      %v3682 = vadd.f32 %v3618, %v2351
      %v3683 = vadd.f32 %v3619, %v2352
      %v3684 = vadd.f32 %v3620, %v2353
      %v3685 = vadd.f32 %v3621, %v2354
      %v3686 = vadd.f32 %v3622, %v2355
      %v3687 = vadd.f32 %v3623, %v2356
      %v3688 = vadd.f32 %v3624, %v2357
      %v3689 = vadd.f32 %v3625, %v2358
      %v3690 = vadd.f32 %v3626, %v2359
      %v3691 = vadd.f32 %v3627, %v2360
      %v3692 = vadd.f32 %v3628, %v2361
      %v3693 = vadd.f32 %v3629, %v2362
      %v3694 = vadd.f32 %v3630, %v2363
      %v3695 = vadd.f32 %v3631, %v2364
      %v3696 = vadd.f32 %v3632, %v2365
      %v3697 = vadd.f32 %v3633, %v2366
      %v3698 = vadd.f32 %v3634, %v2367
      %v3699 = vadd.f32 %v3635, %v2368
      %v3700 = vadd.f32 %v3636, %v2369
      %v3701 = vadd.f32 %v3637, %v2370
      %v3702 = vadd.f32 %v3638, %v2371
      %v3703 = vmax.f32 %v3639, 0.0
      %v3704 = vmax.f32 %v3640, 0.0
      %v3705 = vmax.f32 %v3641, 0.0
      %v3706 = vmax.f32 %v3642, 0.0
      %v3707 = vmax.f32 %v3643, 0.0
      %v3708 = vmax.f32 %v3644, 0.0
      %v3709 = vmax.f32 %v3645, 0.0
      %v3710 = vmax.f32 %v3646, 0.0
      %v3711 = vmax.f32 %v3647, 0.0
      %v3712 = vmax.f32 %v3648, 0.0
      %v3713 = vmax.f32 %v3649, 0.0
      %v3714 = vmax.f32 %v3650, 0.0
      %v3715 = vmax.f32 %v3651, 0.0
      %v3716 = vmax.f32 %v3652, 0.0
      %v3717 = vmax.f32 %v3653, 0.0
      %v3718 = vmax.f32 %v3654, 0.0
      %v3719 = vmax.f32 %v3655, 0.0
      %v3720 = vmax.f32 %v3656, 0.0
      %v3721 = vmax.f32 %v3657, 0.0
      %v3722 = vmax.f32 %v3658, 0.0
      %v3723 = vmax.f32 %v3659, 0.0
      %v3724 = vmax.f32 %v3660, 0.0
      %v3725 = vmax.f32 %v3661, 0.0
      %v3726 = vmax.f32 %v3662, 0.0
      %v3727 = vmax.f32 %v3663, 0.0
      %v3728 = vmax.f32 %v3664, 0.0
      %v3729 = vmax.f32 %v3665, 0.0
      %v3730 = vmax.f32 %v3666, 0.0
      %v3731 = vmax.f32 %v3667, 0.0
      %v3732 = vmax.f32 %v3668, 0.0
      %v3733 = vmax.f32 %v3669, 0.0
      %v3734 = vmax.f32 %v3670, 0.0
      %v3735 = vmax.f32 %v3671, 0.0
      %v3736 = vmax.f32 %v3672, 0.0
      %v3737 = vmax.f32 %v3673, 0.0
      %v3738 = vmax.f32 %v3674, 0.0
      %v3739 = vmax.f32 %v3675, 0.0
      %v3740 = vmax.f32 %v3676, 0.0
      %v3741 = vmax.f32 %v3677, 0.0
      %v3742 = vmax.f32 %v3678, 0.0
      %v3743 = vmax.f32 %v3679, 0.0
      %v3744 = vmax.f32 %v3680, 0.0
      %v3745 = vmax.f32 %v3681, 0.0
      %v3746 = vmax.f32 %v3682, 0.0
      %v3747 = vmax.f32 %v3683, 0.0
      %v3748 = vmax.f32 %v3684, 0.0
      %v3749 = vmax.f32 %v3685, 0.0
      %v3750 = vmax.f32 %v3686, 0.0
      %v3751 = vmax.f32 %v3687, 0.0
      %v3752 = vmax.f32 %v3688, 0.0
      %v3753 = vmax.f32 %v3689, 0.0
      %v3754 = vmax.f32 %v3690, 0.0
      %v3755 = vmax.f32 %v3691, 0.0
      %v3756 = vmax.f32 %v3692, 0.0
      %v3757 = vmax.f32 %v3693, 0.0
      %v3758 = vmax.f32 %v3694, 0.0
      %v3759 = vmax.f32 %v3695, 0.0
      %v3760 = vmax.f32 %v3696, 0.0
      %v3761 = vmax.f32 %v3697, 0.0
      %v3762 = vmax.f32 %v3698, 0.0
      %v3763 = vmax.f32 %v3699, 0.0
      %v3764 = vmax.f32 %v3700, 0.0
      %v3765 = vmax.f32 %v3701, 0.0
      %v3766 = vmax.f32 %v3702, 0.0
      %v3767 = vpack.c.bf16 %v3705, %v3703
      %v3768 = vpack.c.bf16 %v3706, %v3704
      %v3769 = vpack.c.bf16 %v3709, %v3707
      %v3770 = vpack.c.bf16 %v3710, %v3708
      %v3771 = vpack.c.bf16 %v3713, %v3711
      %v3772 = vpack.c.bf16 %v3714, %v3712
      %v3773 = vpack.c.bf16 %v3717, %v3715
      %v3774 = vpack.c.bf16 %v3718, %v3716
      %v3775 = vpack.c.bf16 %v3721, %v3719
      %v3776 = vpack.c.bf16 %v3722, %v3720
      %v3777 = vpack.c.bf16 %v3725, %v3723
      %v3778 = vpack.c.bf16 %v3726, %v3724
      %v3779 = vpack.c.bf16 %v3729, %v3727
      %v3780 = vpack.c.bf16 %v3730, %v3728
      %v3781 = vpack.c.bf16 %v3733, %v3731
      %v3782 = vpack.c.bf16 %v3734, %v3732
      %v3783 = vpack.c.bf16 %v3737, %v3735
      %v3784 = vpack.c.bf16 %v3738, %v3736
      %v3785 = vpack.c.bf16 %v3741, %v3739
      %v3786 = vpack.c.bf16 %v3742, %v3740
      %v3787 = vpack.c.bf16 %v3745, %v3743
      %v3788 = vpack.c.bf16 %v3746, %v3744
      %v3789 = vpack.c.bf16 %v3749, %v3747
      %v3790 = vpack.c.bf16 %v3750, %v3748
      %v3791 = vpack.c.bf16 %v3753, %v3751
      %v3792 = vpack.c.bf16 %v3754, %v3752
      %v3793 = vpack.c.bf16 %v3757, %v3755
      %v3794 = vpack.c.bf16 %v3758, %v3756
      %v3795 = vpack.c.bf16 %v3761, %v3759
      %v3796 = vpack.c.bf16 %v3762, %v3760
      %v3797 = vpack.c.bf16 %v3765, %v3763
      %v3798 = vpack.c.bf16 %v3766, %v3764
      %s3799 = scalar_lea.vmem %s3, 768
      %v3800 = vld [vmem:[%s3799] sm:$0xff]
      %v3801 = vld [vmem:[%s3799 + $0x8] sm:$0xf]
      %v3802 = vld [vmem:[%s3799 + $0xc] sm:$0xff]
      %v3803 = vld [vmem:[%s3799 + $0x14] sm:$0xf]
      %v3804 = vld [vmem:[%s3799 + $0x18] sm:$0xff]
      %v3805 = vld [vmem:[%s3799 + $0x20] sm:$0xf]
      %v3806 = vld [vmem:[%s3799 + $0x24] sm:$0xff]
      %v3807 = vld [vmem:[%s3799 + $0x2c] sm:$0xf]
      %v3808 = vld [vmem:[%s3799 + $0x30] sm:$0xff]
      %v3809 = vld [vmem:[%s3799 + $0x38] sm:$0xf]
      %v3810 = vld [vmem:[%s3799 + $0x3c] sm:$0xff]
      %v3811 = vld [vmem:[%s3799 + $0x44] sm:$0xf]
      %v3812 = vld [vmem:[%s3799 + $0x48] sm:$0xff]
      %v3813 = vld [vmem:[%s3799 + $0x50] sm:$0xf]
      %v3814 = vld [vmem:[%s3799 + $0x54] sm:$0xff]
      %v3815 = vld [vmem:[%s3799 + $0x5c] sm:$0xf]
      %v3816 = vld [vmem:[%s3799 + $0x60] sm:$0xff]
      %v3817 = vld [vmem:[%s3799 + $0x68] sm:$0xf]
      %v3818 = vld [vmem:[%s3799 + $0x6c] sm:$0xff]
      %v3819 = vld [vmem:[%s3799 + $0x74] sm:$0xf]
      %v3820 = vld [vmem:[%s3799 + $0x78] sm:$0xff]
      %v3821 = vld [vmem:[%s3799 + $0x80] sm:$0xf]
      %v3822 = vld [vmem:[%s3799 + $0x84] sm:$0xff]
      %v3823 = vld [vmem:[%s3799 + $0x8c] sm:$0xf]
      %v3824 = vld [vmem:[%s3799 + $0x90] sm:$0xff]
      %v3825 = vld [vmem:[%s3799 + $0x98] sm:$0xf]
      %v3826 = vld [vmem:[%s3799 + $0x9c] sm:$0xff]
      %v3827 = vld [vmem:[%s3799 + $0xa4] sm:$0xf]
      %v3828 = vld [vmem:[%s3799 + $0xa8] sm:$0xff]
      %v3829 = vld [vmem:[%s3799 + $0xb0] sm:$0xf]
      %v3830 = vld [vmem:[%s3799 + $0xb4] sm:$0xff]
      %v3831 = vld [vmem:[%s3799 + $0xbc] sm:$0xf]
      %v3832 = vld [vmem:[%s3799 + $0xc0] sm:$0xff]
      %v3833 = vld [vmem:[%s3799 + $0xc8] sm:$0xf]
      %v3834 = vld [vmem:[%s3799 + $0xcc] sm:$0xff]
      %v3835 = vld [vmem:[%s3799 + $0xd4] sm:$0xf]
      %v3836 = vld [vmem:[%s3799 + $0xd8] sm:$0xff]
      %v3837 = vld [vmem:[%s3799 + $0xe0] sm:$0xf]
      %v3838 = vld [vmem:[%s3799 + $0xe4] sm:$0xff]
      %v3839 = vld [vmem:[%s3799 + $0xec] sm:$0xf]
      %v3840 = vld [vmem:[%s3799 + $0xf0] sm:$0xff]
      %v3841 = vld [vmem:[%s3799 + $0xf8] sm:$0xf]
      %v3842 = vld [vmem:[%s3799 + $0xfc] sm:$0xff]
      %v3843 = vld [vmem:[%s3799 + $0x104] sm:$0xf]
      %v3844 = vld [vmem:[%s3799 + $0x108] sm:$0xff]
      %v3845 = vld [vmem:[%s3799 + $0x110] sm:$0xf]
      %v3846 = vld [vmem:[%s3799 + $0x114] sm:$0xff]
      %v3847 = vld [vmem:[%s3799 + $0x11c] sm:$0xf]
      %v3848 = vld [vmem:[%s3799 + $0x120] sm:$0xff]
      %v3849 = vld [vmem:[%s3799 + $0x128] sm:$0xf]
      %v3850 = vld [vmem:[%s3799 + $0x12c] sm:$0xff]
      %v3851 = vld [vmem:[%s3799 + $0x134] sm:$0xf]
      %v3852 = vld [vmem:[%s3799 + $0x138] sm:$0xff]
      %v3853 = vld [vmem:[%s3799 + $0x140] sm:$0xf]
      %v3854 = vld [vmem:[%s3799 + $0x144] sm:$0xff]
      %v3855 = vld [vmem:[%s3799 + $0x14c] sm:$0xf]
      %v3856 = vld [vmem:[%s3799 + $0x150] sm:$0xff]
      %v3857 = vld [vmem:[%s3799 + $0x158] sm:$0xf]
      %v3858 = vld [vmem:[%s3799 + $0x15c] sm:$0xff]
      %v3859 = vld [vmem:[%s3799 + $0x164] sm:$0xf]
      %v3860 = vld [vmem:[%s3799 + $0x168] sm:$0xff]
      %v3861 = vld [vmem:[%s3799 + $0x170] sm:$0xf]
      %v3862 = vld [vmem:[%s3799 + $0x174] sm:$0xff]
      %v3863 = vld [vmem:[%s3799 + $0x17c] sm:$0xf]
      %s3864 = scalar_lea.vmem %s4, 6
      %v3865 = vld [vmem:[%s3864] sm:$0x7]
      %v3867 = vlaneseq
      %v3868 = vshrl.u32 %v3867, 7
      %v3869 = vsub.s32 0, %v3868
      %v3870 = vrot.slane %v3865, %v3869
      %v3871 = vlaneseq
      %v3872 = vshrl.u32 %v3871, 7
      %v3873 = vsub.s32 1, %v3872
      %v3874 = vrot.slane %v3865, %v3873
      %v3875 = vlaneseq
      %v3876 = vshrl.u32 %v3875, 7
      %v3877 = vsub.s32 2, %v3876
      %v3878 = vrot.slane %v3865, %v3877
      %v3946 = vunpack.c.l.b16 %v3800
      %v3947 = vunpack.c.h.b16 %v3800
      %v3948 = vunpack.c.l.b16 %v3801
      %v3949 = vunpack.c.l.b16 %v3802
      %v3950 = vunpack.c.h.b16 %v3802
      %v3951 = vunpack.c.l.b16 %v3803
      %v3952 = vunpack.c.l.b16 %v3804
      %v3953 = vunpack.c.h.b16 %v3804
      %v3954 = vunpack.c.l.b16 %v3805
      %v3955 = vunpack.c.l.b16 %v3806
      %v3956 = vunpack.c.h.b16 %v3806
      %v3957 = vunpack.c.l.b16 %v3807
      %v3958 = vunpack.c.l.b16 %v3808
      %v3959 = vunpack.c.h.b16 %v3808
      %v3960 = vunpack.c.l.b16 %v3809
      %v3961 = vunpack.c.l.b16 %v3810
      %v3962 = vunpack.c.h.b16 %v3810
      %v3963 = vunpack.c.l.b16 %v3811
      %v3964 = vunpack.c.l.b16 %v3812
      %v3965 = vunpack.c.h.b16 %v3812
      %v3966 = vunpack.c.l.b16 %v3813
      %v3967 = vunpack.c.l.b16 %v3814
      %v3968 = vunpack.c.h.b16 %v3814
      %v3969 = vunpack.c.l.b16 %v3815
      %v3970 = vunpack.c.l.b16 %v3816
      %v3971 = vunpack.c.h.b16 %v3816
      %v3972 = vunpack.c.l.b16 %v3817
      %v3973 = vunpack.c.l.b16 %v3818
      %v3974 = vunpack.c.h.b16 %v3818
      %v3975 = vunpack.c.l.b16 %v3819
      %v3976 = vunpack.c.l.b16 %v3820
      %v3977 = vunpack.c.h.b16 %v3820
      %v3978 = vunpack.c.l.b16 %v3821
      %v3979 = vunpack.c.l.b16 %v3822
      %v3980 = vunpack.c.h.b16 %v3822
      %v3981 = vunpack.c.l.b16 %v3823
      %v3982 = vunpack.c.l.b16 %v3824
      %v3983 = vunpack.c.h.b16 %v3824
      %v3984 = vunpack.c.l.b16 %v3825
      %v3985 = vunpack.c.l.b16 %v3826
      %v3986 = vunpack.c.h.b16 %v3826
      %v3987 = vunpack.c.l.b16 %v3827
      %v3988 = vunpack.c.l.b16 %v3828
      %v3989 = vunpack.c.h.b16 %v3828
      %v3990 = vunpack.c.l.b16 %v3829
      %v3991 = vunpack.c.l.b16 %v3830
      %v3992 = vunpack.c.h.b16 %v3830
      %v3993 = vunpack.c.l.b16 %v3831
      %v3994 = vunpack.c.l.b16 %v3832
      %v3995 = vunpack.c.h.b16 %v3832
      %v3996 = vunpack.c.l.b16 %v3833
      %v3997 = vunpack.c.l.b16 %v3834
      %v3998 = vunpack.c.h.b16 %v3834
      %v3999 = vunpack.c.l.b16 %v3835
      %v4000 = vunpack.c.l.b16 %v3836
      %v4001 = vunpack.c.h.b16 %v3836
      %v4002 = vunpack.c.l.b16 %v3837
      %v4003 = vunpack.c.l.b16 %v3838
      %v4004 = vunpack.c.h.b16 %v3838
      %v4005 = vunpack.c.l.b16 %v3839
      %v4006 = vunpack.c.l.b16 %v3840
      %v4007 = vunpack.c.h.b16 %v3840
      %v4008 = vunpack.c.l.b16 %v3841
      %v4009 = vunpack.c.l.b16 %v3842
      %v4010 = vunpack.c.h.b16 %v3842
      %v4011 = vunpack.c.l.b16 %v3843
      %v4012 = vunpack.c.l.b16 %v3844
      %v4013 = vunpack.c.h.b16 %v3844
      %v4014 = vunpack.c.l.b16 %v3845
      %v4015 = vunpack.c.l.b16 %v3846
      %v4016 = vunpack.c.h.b16 %v3846
      %v4017 = vunpack.c.l.b16 %v3847
      %v4018 = vunpack.c.l.b16 %v3848
      %v4019 = vunpack.c.h.b16 %v3848
      %v4020 = vunpack.c.l.b16 %v3849
      %v4021 = vunpack.c.l.b16 %v3850
      %v4022 = vunpack.c.h.b16 %v3850
      %v4023 = vunpack.c.l.b16 %v3851
      %v4024 = vunpack.c.l.b16 %v3852
      %v4025 = vunpack.c.h.b16 %v3852
      %v4026 = vunpack.c.l.b16 %v3853
      %v4027 = vunpack.c.l.b16 %v3854
      %v4028 = vunpack.c.h.b16 %v3854
      %v4029 = vunpack.c.l.b16 %v3855
      %v4030 = vunpack.c.l.b16 %v3856
      %v4031 = vunpack.c.h.b16 %v3856
      %v4032 = vunpack.c.l.b16 %v3857
      %v4033 = vunpack.c.l.b16 %v3858
      %v4034 = vunpack.c.h.b16 %v3858
      %v4035 = vunpack.c.l.b16 %v3859
      %v4036 = vunpack.c.l.b16 %v3860
      %v4037 = vunpack.c.h.b16 %v3860
      %v4038 = vunpack.c.l.b16 %v3861
      %v4039 = vunpack.c.l.b16 %v3862
      %v4040 = vunpack.c.h.b16 %v3862
      %v4041 = vunpack.c.l.b16 %v3863
      %v4042 = vpack.c.b16 %v3949, %v3946
      %v4043 = vpack.c.b16 %v3950, %v3947
      %v4044 = vpack.c.b16 %v3951, %v3948
      %v4045 = vpack.c.b16 %v3955, %v3952
      %v4046 = vpack.c.b16 %v3956, %v3953
      %v4047 = vpack.c.b16 %v3957, %v3954
      %v4048 = vpack.c.b16 %v3961, %v3958
      %v4049 = vpack.c.b16 %v3962, %v3959
      %v4050 = vpack.c.b16 %v3963, %v3960
      %v4051 = vpack.c.b16 %v3967, %v3964
      %v4052 = vpack.c.b16 %v3968, %v3965
      %v4053 = vpack.c.b16 %v3969, %v3966
      %v4054 = vpack.c.b16 %v3973, %v3970
      %v4055 = vpack.c.b16 %v3974, %v3971
      %v4056 = vpack.c.b16 %v3975, %v3972
      %v4057 = vpack.c.b16 %v3979, %v3976
      %v4058 = vpack.c.b16 %v3980, %v3977
      %v4059 = vpack.c.b16 %v3981, %v3978
      %v4060 = vpack.c.b16 %v3985, %v3982
      %v4061 = vpack.c.b16 %v3986, %v3983
      %v4062 = vpack.c.b16 %v3987, %v3984
      %v4063 = vpack.c.b16 %v3991, %v3988
      %v4064 = vpack.c.b16 %v3992, %v3989
      %v4065 = vpack.c.b16 %v3993, %v3990
      %v4066 = vpack.c.b16 %v3997, %v3994
      %v4067 = vpack.c.b16 %v3998, %v3995
      %v4068 = vpack.c.b16 %v3999, %v3996
      %v4069 = vpack.c.b16 %v4003, %v4000
      %v4070 = vpack.c.b16 %v4004, %v4001
      %v4071 = vpack.c.b16 %v4005, %v4002
      %v4072 = vpack.c.b16 %v4009, %v4006
      %v4073 = vpack.c.b16 %v4010, %v4007
      %v4074 = vpack.c.b16 %v4011, %v4008
      %v4075 = vpack.c.b16 %v4015, %v4012
      %v4076 = vpack.c.b16 %v4016, %v4013
      %v4077 = vpack.c.b16 %v4017, %v4014
      %v4078 = vpack.c.b16 %v4021, %v4018
      %v4079 = vpack.c.b16 %v4022, %v4019
      %v4080 = vpack.c.b16 %v4023, %v4020
      %v4081 = vpack.c.b16 %v4027, %v4024
      %v4082 = vpack.c.b16 %v4028, %v4025
      %v4083 = vpack.c.b16 %v4029, %v4026
      %v4084 = vpack.c.b16 %v4033, %v4030
      %v4085 = vpack.c.b16 %v4034, %v4031
      %v4086 = vpack.c.b16 %v4035, %v4032
      %v4087 = vpack.c.b16 %v4039, %v4036
      %v4088 = vpack.c.b16 %v4040, %v4037
      %v4089 = vpack.c.b16 %v4041, %v4038
      %4138 = vmatprep.subr.bf16.mxu0 %v4064
      %4139 = vmatpush1.bf16.msra.mxu0 %v4063
      %4140 = vmatprep.subr.bf16.mxu0 %v4061
      %4141 = vmatpush1.bf16.msra.mxu0 %v4060
      %4142 = vmatprep.subr.bf16.mxu0 %v4058
      %4143 = vmatpush1.bf16.msra.mxu0 %v4057
      %4144 = vmatprep.subr.bf16.mxu0 %v4055
      %4145 = vmatpush1.bf16.msra.mxu0 %v4054
      %4146 = vmatprep.subr.bf16.mxu0 %v4052
      %4147 = vmatpush1.bf16.msra.mxu0 %v4051
      %4148 = vmatprep.subr.bf16.mxu0 %v4049
      %4149 = vmatpush1.bf16.msra.mxu0 %v4048
      %4150 = vmatprep.subr.bf16.mxu0 %v4046
      %4151 = vmatpush1.bf16.msra.mxu0 %v4045
      %4152 = vmatprep.subr.bf16.mxu0 %v4043
      %4153 = vmatpush1.bf16.msra.mxu0 %v4042
      %4154 = vmatprep.subr.bf16.mxu0 %v4088
      %4155 = vmatpush2.bf16.msra.mxu0 %v4087
      %4156 = vmatprep.subr.bf16.mxu0 %v4085
      %4157 = vmatpush2.bf16.msra.mxu0 %v4084
      %4158 = vmatprep.subr.bf16.mxu0 %v4082
      %4159 = vmatpush2.bf16.msra.mxu0 %v4081
      %4160 = vmatprep.subr.bf16.mxu0 %v4079
      %4161 = vmatpush2.bf16.msra.mxu0 %v4078
      %4162 = vmatprep.subr.bf16.mxu0 %v4076
      %4163 = vmatpush2.bf16.msra.mxu0 %v4075
      %4164 = vmatprep.subr.bf16.mxu0 %v4073
      %4165 = vmatpush2.bf16.msra.mxu0 %v4072
      %4166 = vmatprep.subr.bf16.mxu0 %v4070
      %4167 = vmatpush2.bf16.msra.mxu0 %v4069
      %4168 = vmatprep.subr.bf16.mxu0 %v4067
      %4169 = vmatpush2.bf16.msra.mxu0 %v4066
      %4170 = vmatprep.mubr.bf16.mxu0 %v3768
      %4171 = vmatmul.mubr.bf16.gmra.mxu0 %v3767
      %v4172 = vpop.f32.mrf.mxu0
      %v4173 = vadd.f32 %v3870, %v4172
      %v4174 = vpop.f32.mrf.mxu0
      %v4175 = vadd.f32 %v3874, %v4174
      %v4176 = vpop.f32.mrf.mxu0
      %v4177 = vadd.f32 %v3870, %v4176
      %v4178 = vpop.f32.mrf.mxu0
      %v4179 = vadd.f32 %v3874, %v4178
      %4180 = vmatprep.mubr.bf16.mxu0 %v3770
      %4181 = vmatmul.mubr.bf16.gmra.mxu0 %v3769
      %v4182 = vpop.f32.mrf.mxu0
      %v4183 = vadd.f32 %v3870, %v4182
      %v4184 = vpop.f32.mrf.mxu0
      %v4185 = vadd.f32 %v3874, %v4184
      %v4186 = vpop.f32.mrf.mxu0
      %v4187 = vadd.f32 %v3870, %v4186
      %v4188 = vpop.f32.mrf.mxu0
      %v4189 = vadd.f32 %v3874, %v4188
      %4190 = vmatprep.mubr.bf16.mxu0 %v3772
      %4191 = vmatmul.mubr.bf16.gmra.mxu0 %v3771
      %v4192 = vpop.f32.mrf.mxu0
      %v4193 = vadd.f32 %v3870, %v4192
      %v4194 = vpop.f32.mrf.mxu0
      %v4195 = vadd.f32 %v3874, %v4194
      %v4196 = vpop.f32.mrf.mxu0
      %v4197 = vadd.f32 %v3870, %v4196
      %v4198 = vpop.f32.mrf.mxu0
      %v4199 = vadd.f32 %v3874, %v4198
      %4200 = vmatprep.mubr.bf16.mxu0 %v3774
      %4201 = vmatmul.mubr.bf16.gmra.mxu0 %v3773
      %v4202 = vpop.f32.mrf.mxu0
      %v4203 = vadd.f32 %v3870, %v4202
      %v4204 = vpop.f32.mrf.mxu0
      %v4205 = vadd.f32 %v3874, %v4204
      %v4206 = vpop.f32.mrf.mxu0
      %v4207 = vadd.f32 %v3870, %v4206
      %v4208 = vpop.f32.mrf.mxu0
      %v4209 = vadd.f32 %v3874, %v4208
      %4210 = vmatprep.mubr.bf16.mxu0 %v3776
      %4211 = vmatmul.mubr.bf16.gmra.mxu0 %v3775
      %v4212 = vpop.f32.mrf.mxu0
      %v4213 = vadd.f32 %v3870, %v4212
      %v4214 = vpop.f32.mrf.mxu0
      %v4215 = vadd.f32 %v3874, %v4214
      %v4216 = vpop.f32.mrf.mxu0
      %v4217 = vadd.f32 %v3870, %v4216
      %v4218 = vpop.f32.mrf.mxu0
      %v4219 = vadd.f32 %v3874, %v4218
      %4220 = vmatprep.mubr.bf16.mxu0 %v3778
      %4221 = vmatmul.mubr.bf16.gmra.mxu0 %v3777
      %v4222 = vpop.f32.mrf.mxu0
      %v4223 = vadd.f32 %v3870, %v4222
      %v4224 = vpop.f32.mrf.mxu0
      %v4225 = vadd.f32 %v3874, %v4224
      %v4226 = vpop.f32.mrf.mxu0
      %v4227 = vadd.f32 %v3870, %v4226
      %v4228 = vpop.f32.mrf.mxu0
      %v4229 = vadd.f32 %v3874, %v4228
      %4230 = vmatprep.mubr.bf16.mxu0 %v3780
      %4231 = vmatmul.mubr.bf16.gmra.mxu0 %v3779
      %v4232 = vpop.f32.mrf.mxu0
      %v4233 = vadd.f32 %v3870, %v4232
      %v4234 = vpop.f32.mrf.mxu0
      %v4235 = vadd.f32 %v3874, %v4234
      %v4236 = vpop.f32.mrf.mxu0
      %v4237 = vadd.f32 %v3870, %v4236
      %v4238 = vpop.f32.mrf.mxu0
      %v4239 = vadd.f32 %v3874, %v4238
      %4240 = vmatprep.mubr.bf16.mxu0 %v3782
      %4241 = vmatmul.mubr.bf16.gmra.mxu0 %v3781
      %v4242 = vpop.f32.mrf.mxu0
      %v4243 = vadd.f32 %v3870, %v4242
      %v4244 = vpop.f32.mrf.mxu0
      %v4245 = vadd.f32 %v3874, %v4244
      %v4246 = vpop.f32.mrf.mxu0
      %v4247 = vadd.f32 %v3870, %v4246
      %v4248 = vpop.f32.mrf.mxu0
      %v4249 = vadd.f32 %v3874, %v4248
      %4250 = vmatprep.mubr.bf16.mxu0 %v3784
      %4251 = vmatmul.mubr.bf16.gmra.mxu0 %v3783
      %v4252 = vpop.f32.mrf.mxu0
      %v4253 = vadd.f32 %v3870, %v4252
      %v4254 = vpop.f32.mrf.mxu0
      %v4255 = vadd.f32 %v3874, %v4254
      %v4256 = vpop.f32.mrf.mxu0
      %v4257 = vadd.f32 %v3870, %v4256
      %v4258 = vpop.f32.mrf.mxu0
      %v4259 = vadd.f32 %v3874, %v4258
      %4260 = vmatprep.mubr.bf16.mxu0 %v3786
      %4261 = vmatmul.mubr.bf16.gmra.mxu0 %v3785
      %v4262 = vpop.f32.mrf.mxu0
      %v4263 = vadd.f32 %v3870, %v4262
      %v4264 = vpop.f32.mrf.mxu0
      %v4265 = vadd.f32 %v3874, %v4264
      %v4266 = vpop.f32.mrf.mxu0
      %v4267 = vadd.f32 %v3870, %v4266
      %v4268 = vpop.f32.mrf.mxu0
      %v4269 = vadd.f32 %v3874, %v4268
      %4270 = vmatprep.mubr.bf16.mxu0 %v3788
      %4271 = vmatmul.mubr.bf16.gmra.mxu0 %v3787
      %v4272 = vpop.f32.mrf.mxu0
      %v4273 = vadd.f32 %v3870, %v4272
      %v4274 = vpop.f32.mrf.mxu0
      %v4275 = vadd.f32 %v3874, %v4274
      %v4276 = vpop.f32.mrf.mxu0
      %v4277 = vadd.f32 %v3870, %v4276
      %v4278 = vpop.f32.mrf.mxu0
      %v4279 = vadd.f32 %v3874, %v4278
      %4280 = vmatprep.mubr.bf16.mxu0 %v3790
      %4281 = vmatmul.mubr.bf16.gmra.mxu0 %v3789
      %v4282 = vpop.f32.mrf.mxu0
      %v4283 = vadd.f32 %v3870, %v4282
      %v4284 = vpop.f32.mrf.mxu0
      %v4285 = vadd.f32 %v3874, %v4284
      %v4286 = vpop.f32.mrf.mxu0
      %v4287 = vadd.f32 %v3870, %v4286
      %v4288 = vpop.f32.mrf.mxu0
      %v4289 = vadd.f32 %v3874, %v4288
      %4290 = vmatprep.mubr.bf16.mxu0 %v3792
      %4291 = vmatmul.mubr.bf16.gmra.mxu0 %v3791
      %v4292 = vpop.f32.mrf.mxu0
      %v4293 = vadd.f32 %v3870, %v4292
      %v4294 = vpop.f32.mrf.mxu0
      %v4295 = vadd.f32 %v3874, %v4294
      %v4296 = vpop.f32.mrf.mxu0
      %v4297 = vadd.f32 %v3870, %v4296
      %v4298 = vpop.f32.mrf.mxu0
      %v4299 = vadd.f32 %v3874, %v4298
      %4300 = vmatprep.mubr.bf16.mxu0 %v3794
      %4301 = vmatmul.mubr.bf16.gmra.mxu0 %v3793
      %v4302 = vpop.f32.mrf.mxu0
      %v4303 = vadd.f32 %v3870, %v4302
      %v4304 = vpop.f32.mrf.mxu0
      %v4305 = vadd.f32 %v3874, %v4304
      %v4306 = vpop.f32.mrf.mxu0
      %v4307 = vadd.f32 %v3870, %v4306
      %v4308 = vpop.f32.mrf.mxu0
      %v4309 = vadd.f32 %v3874, %v4308
      %4310 = vmatprep.mubr.bf16.mxu0 %v3796
      %4311 = vmatmul.mubr.bf16.gmra.mxu0 %v3795
      %v4312 = vpop.f32.mrf.mxu0
      %v4313 = vadd.f32 %v3870, %v4312
      %v4314 = vpop.f32.mrf.mxu0
      %v4315 = vadd.f32 %v3874, %v4314
      %v4316 = vpop.f32.mrf.mxu0
      %v4317 = vadd.f32 %v3870, %v4316
      %v4318 = vpop.f32.mrf.mxu0
      %v4319 = vadd.f32 %v3874, %v4318
      %4320 = vmatprep.mubr.bf16.mxu0 %v3798
      %4321 = vmatmul.mubr.bf16.gmra.mxu0 %v3797
      %v4322 = vpop.f32.mrf.mxu0
      %v4323 = vadd.f32 %v3870, %v4322
      %v4324 = vpop.f32.mrf.mxu0
      %v4325 = vadd.f32 %v3874, %v4324
      %v4326 = vpop.f32.mrf.mxu0
      %v4327 = vadd.f32 %v3870, %v4326
      %v4328 = vpop.f32.mrf.mxu0
      %v4329 = vadd.f32 %v3874, %v4328
      %4330 = vdwg.mxu0
      %4331 = vmatprep.subr.bf16.mxu0 0
      %4332 = vmatpush1.bf16.msra.mxu0 %v4065
      %4333 = vmatprep.subr.bf16.mxu0 0
      %4334 = vmatpush1.bf16.msra.mxu0 %v4062
      %4335 = vmatprep.subr.bf16.mxu0 0
      %4336 = vmatpush1.bf16.msra.mxu0 %v4059
      %4337 = vmatprep.subr.bf16.mxu0 0
      %4338 = vmatpush1.bf16.msra.mxu0 %v4056
      %4339 = vmatprep.subr.bf16.mxu0 0
      %4340 = vmatpush1.bf16.msra.mxu0 %v4053
      %4341 = vmatprep.subr.bf16.mxu0 0
      %4342 = vmatpush1.bf16.msra.mxu0 %v4050
      %4343 = vmatprep.subr.bf16.mxu0 0
      %4344 = vmatpush1.bf16.msra.mxu0 %v4047
      %4345 = vmatprep.subr.bf16.mxu0 0
      %4346 = vmatpush1.bf16.msra.mxu0 %v4044
      %4347 = vmatprep.subr.bf16.mxu0 0
      %4348 = vmatpush2.bf16.msra.mxu0 %v4089
      %4349 = vmatprep.subr.bf16.mxu0 0
      %4350 = vmatpush2.bf16.msra.mxu0 %v4086
      %4351 = vmatprep.subr.bf16.mxu0 0
      %4352 = vmatpush2.bf16.msra.mxu0 %v4083
      %4353 = vmatprep.subr.bf16.mxu0 0
      %4354 = vmatpush2.bf16.msra.mxu0 %v4080
      %4355 = vmatprep.subr.bf16.mxu0 0
      %4356 = vmatpush2.bf16.msra.mxu0 %v4077
      %4357 = vmatprep.subr.bf16.mxu0 0
      %4358 = vmatpush2.bf16.msra.mxu0 %v4074
      %4359 = vmatprep.subr.bf16.mxu0 0
      %4360 = vmatpush2.bf16.msra.mxu0 %v4071
      %4361 = vmatprep.subr.bf16.mxu0 0
      %4362 = vmatpush2.bf16.msra.mxu0 %v4068
      %4363 = vmatprep.mubr.bf16.mxu0 %v3768
      %4364 = vmatmul.mubr.bf16.gmra.mxu0 %v3767
      %v4365 = vpop.f32.mrf.mxu0
      %v4366 = vadd.f32 %v3878, %v4365
      %v4367 = vpop.f32.mrf.mxu0
      %v4368 = vpop.f32.mrf.mxu0
      %v4369 = vadd.f32 %v3878, %v4368
      %v4370 = vpop.f32.mrf.mxu0
      %4371 = vmatprep.mubr.bf16.mxu0 %v3770
      %4372 = vmatmul.mubr.bf16.gmra.mxu0 %v3769
      %v4373 = vpop.f32.mrf.mxu0
      %v4374 = vadd.f32 %v3878, %v4373
      %v4375 = vpop.f32.mrf.mxu0
      %v4376 = vpop.f32.mrf.mxu0
      %v4377 = vadd.f32 %v3878, %v4376
      %v4378 = vpop.f32.mrf.mxu0
      %4379 = vmatprep.mubr.bf16.mxu0 %v3772
      %4380 = vmatmul.mubr.bf16.gmra.mxu0 %v3771
      %v4381 = vpop.f32.mrf.mxu0
      %v4382 = vadd.f32 %v3878, %v4381
      %v4383 = vpop.f32.mrf.mxu0
      %v4384 = vpop.f32.mrf.mxu0
      %v4385 = vadd.f32 %v3878, %v4384
      %v4386 = vpop.f32.mrf.mxu0
      %4387 = vmatprep.mubr.bf16.mxu0 %v3774
      %4388 = vmatmul.mubr.bf16.gmra.mxu0 %v3773
      %v4389 = vpop.f32.mrf.mxu0
      %v4390 = vadd.f32 %v3878, %v4389
      %v4391 = vpop.f32.mrf.mxu0
      %v4392 = vpop.f32.mrf.mxu0
      %v4393 = vadd.f32 %v3878, %v4392
      %v4394 = vpop.f32.mrf.mxu0
      %4395 = vmatprep.mubr.bf16.mxu0 %v3776
      %4396 = vmatmul.mubr.bf16.gmra.mxu0 %v3775
      %v4397 = vpop.f32.mrf.mxu0
      %v4398 = vadd.f32 %v3878, %v4397
      %v4399 = vpop.f32.mrf.mxu0
      %v4400 = vpop.f32.mrf.mxu0
      %v4401 = vadd.f32 %v3878, %v4400
      %v4402 = vpop.f32.mrf.mxu0
      %4403 = vmatprep.mubr.bf16.mxu0 %v3778
      %4404 = vmatmul.mubr.bf16.gmra.mxu0 %v3777
      %v4405 = vpop.f32.mrf.mxu0
      %v4406 = vadd.f32 %v3878, %v4405
      %v4407 = vpop.f32.mrf.mxu0
      %v4408 = vpop.f32.mrf.mxu0
      %v4409 = vadd.f32 %v3878, %v4408
      %v4410 = vpop.f32.mrf.mxu0
      %4411 = vmatprep.mubr.bf16.mxu0 %v3780
      %4412 = vmatmul.mubr.bf16.gmra.mxu0 %v3779
      %v4413 = vpop.f32.mrf.mxu0
      %v4414 = vadd.f32 %v3878, %v4413
      %v4415 = vpop.f32.mrf.mxu0
      %v4416 = vpop.f32.mrf.mxu0
      %v4417 = vadd.f32 %v3878, %v4416
      %v4418 = vpop.f32.mrf.mxu0
      %4419 = vmatprep.mubr.bf16.mxu0 %v3782
      %4420 = vmatmul.mubr.bf16.gmra.mxu0 %v3781
      %v4421 = vpop.f32.mrf.mxu0
      %v4422 = vadd.f32 %v3878, %v4421
      %v4423 = vpop.f32.mrf.mxu0
      %v4424 = vpop.f32.mrf.mxu0
      %v4425 = vadd.f32 %v3878, %v4424
      %v4426 = vpop.f32.mrf.mxu0
      %4427 = vmatprep.mubr.bf16.mxu0 %v3784
      %4428 = vmatmul.mubr.bf16.gmra.mxu0 %v3783
      %v4429 = vpop.f32.mrf.mxu0
      %v4430 = vadd.f32 %v3878, %v4429
      %v4431 = vpop.f32.mrf.mxu0
      %v4432 = vpop.f32.mrf.mxu0
      %v4433 = vadd.f32 %v3878, %v4432
      %v4434 = vpop.f32.mrf.mxu0
      %4435 = vmatprep.mubr.bf16.mxu0 %v3786
      %4436 = vmatmul.mubr.bf16.gmra.mxu0 %v3785
      %v4437 = vpop.f32.mrf.mxu0
      %v4438 = vadd.f32 %v3878, %v4437
      %v4439 = vpop.f32.mrf.mxu0
      %v4440 = vpop.f32.mrf.mxu0
      %v4441 = vadd.f32 %v3878, %v4440
      %v4442 = vpop.f32.mrf.mxu0
      %4443 = vmatprep.mubr.bf16.mxu0 %v3788
      %4444 = vmatmul.mubr.bf16.gmra.mxu0 %v3787
      %v4445 = vpop.f32.mrf.mxu0
      %v4446 = vadd.f32 %v3878, %v4445
      %v4447 = vpop.f32.mrf.mxu0
      %v4448 = vpop.f32.mrf.mxu0
      %v4449 = vadd.f32 %v3878, %v4448
      %v4450 = vpop.f32.mrf.mxu0
      %4451 = vmatprep.mubr.bf16.mxu0 %v3790
      %4452 = vmatmul.mubr.bf16.gmra.mxu0 %v3789
      %v4453 = vpop.f32.mrf.mxu0
      %v4454 = vadd.f32 %v3878, %v4453
      %v4455 = vpop.f32.mrf.mxu0
      %v4456 = vpop.f32.mrf.mxu0
      %v4457 = vadd.f32 %v3878, %v4456
      %v4458 = vpop.f32.mrf.mxu0
      %4459 = vmatprep.mubr.bf16.mxu0 %v3792
      %4460 = vmatmul.mubr.bf16.gmra.mxu0 %v3791
      %v4461 = vpop.f32.mrf.mxu0
      %v4462 = vadd.f32 %v3878, %v4461
      %v4463 = vpop.f32.mrf.mxu0
      %v4464 = vpop.f32.mrf.mxu0
      %v4465 = vadd.f32 %v3878, %v4464
      %v4466 = vpop.f32.mrf.mxu0
      %4467 = vmatprep.mubr.bf16.mxu0 %v3794
      %4468 = vmatmul.mubr.bf16.gmra.mxu0 %v3793
      %v4469 = vpop.f32.mrf.mxu0
      %v4470 = vadd.f32 %v3878, %v4469
      %v4471 = vpop.f32.mrf.mxu0
      %v4472 = vpop.f32.mrf.mxu0
      %v4473 = vadd.f32 %v3878, %v4472
      %v4474 = vpop.f32.mrf.mxu0
      %4475 = vmatprep.mubr.bf16.mxu0 %v3796
      %4476 = vmatmul.mubr.bf16.gmra.mxu0 %v3795
      %v4477 = vpop.f32.mrf.mxu0
      %v4478 = vadd.f32 %v3878, %v4477
      %v4479 = vpop.f32.mrf.mxu0
      %v4480 = vpop.f32.mrf.mxu0
      %v4481 = vadd.f32 %v3878, %v4480
      %v4482 = vpop.f32.mrf.mxu0
      %4483 = vmatprep.mubr.bf16.mxu0 %v3798
      %4484 = vmatmul.mubr.bf16.gmra.mxu0 %v3797
      %v4485 = vpop.f32.mrf.mxu0
      %v4486 = vadd.f32 %v3878, %v4485
      %v4487 = vpop.f32.mrf.mxu0
      %v4488 = vpop.f32.mrf.mxu0
      %v4489 = vadd.f32 %v3878, %v4488
      %v4490 = vpop.f32.mrf.mxu0
      %4491 = vdwg.mxu0
      %v4492 = vxor.u32 %v4173, 2147483648
      %v4493 = vxor.u32 %v4177, 2147483648
      %v4494 = vxor.u32 %v4183, 2147483648
      %v4495 = vxor.u32 %v4187, 2147483648
      %v4496 = vxor.u32 %v4193, 2147483648
      %v4497 = vxor.u32 %v4197, 2147483648
      %v4498 = vxor.u32 %v4203, 2147483648
      %v4499 = vxor.u32 %v4207, 2147483648
      %v4500 = vxor.u32 %v4213, 2147483648
      %v4501 = vxor.u32 %v4217, 2147483648
      %v4502 = vxor.u32 %v4223, 2147483648
      %v4503 = vxor.u32 %v4227, 2147483648
      %v4504 = vxor.u32 %v4233, 2147483648
      %v4505 = vxor.u32 %v4237, 2147483648
      %v4506 = vxor.u32 %v4243, 2147483648
      %v4507 = vxor.u32 %v4247, 2147483648
      %v4508 = vxor.u32 %v4253, 2147483648
      %v4509 = vxor.u32 %v4257, 2147483648
      %v4510 = vxor.u32 %v4263, 2147483648
      %v4511 = vxor.u32 %v4267, 2147483648
      %v4512 = vxor.u32 %v4273, 2147483648
      %v4513 = vxor.u32 %v4277, 2147483648
      %v4514 = vxor.u32 %v4283, 2147483648
      %v4515 = vxor.u32 %v4287, 2147483648
      %v4516 = vxor.u32 %v4293, 2147483648
      %v4517 = vxor.u32 %v4297, 2147483648
      %v4518 = vxor.u32 %v4303, 2147483648
      %v4519 = vxor.u32 %v4307, 2147483648
      %v4520 = vxor.u32 %v4313, 2147483648
      %v4521 = vxor.u32 %v4317, 2147483648
      %v4522 = vxor.u32 %v4323, 2147483648
      %v4523 = vxor.u32 %v4327, 2147483648
      %v4524 = vmul.f32 %v4492, 1.442695
      %v4525 = vpow.pop %v4524
      %v4526 = vmul.f32 %v4493, 1.442695
      %v4527 = vpow.pop %v4526
      %v4528 = vmul.f32 %v4494, 1.442695
      %v4529 = vpow.pop %v4528
      %v4530 = vmul.f32 %v4495, 1.442695
      %v4531 = vpow.pop %v4530
      %v4532 = vmul.f32 %v4496, 1.442695
      %v4533 = vpow.pop %v4532
      %v4534 = vmul.f32 %v4497, 1.442695
      %v4535 = vpow.pop %v4534
      %v4536 = vmul.f32 %v4498, 1.442695
      %v4537 = vpow.pop %v4536
      %v4538 = vmul.f32 %v4499, 1.442695
      %v4539 = vpow.pop %v4538
      %v4540 = vmul.f32 %v4500, 1.442695
      %v4541 = vpow.pop %v4540
      %v4542 = vmul.f32 %v4501, 1.442695
      %v4543 = vpow.pop %v4542
      %v4544 = vmul.f32 %v4502, 1.442695
      %v4545 = vpow.pop %v4544
      %v4546 = vmul.f32 %v4503, 1.442695
      %v4547 = vpow.pop %v4546
      %v4548 = vmul.f32 %v4504, 1.442695
      %v4549 = vpow.pop %v4548
      %v4550 = vmul.f32 %v4505, 1.442695
      %v4551 = vpow.pop %v4550
      %v4552 = vmul.f32 %v4506, 1.442695
      %v4553 = vpow.pop %v4552
      %v4554 = vmul.f32 %v4507, 1.442695
      %v4555 = vpow.pop %v4554
      %v4556 = vmul.f32 %v4508, 1.442695
      %v4557 = vpow.pop %v4556
      %v4558 = vmul.f32 %v4509, 1.442695
      %v4559 = vpow.pop %v4558
      %v4560 = vmul.f32 %v4510, 1.442695
      %v4561 = vpow.pop %v4560
      %v4562 = vmul.f32 %v4511, 1.442695
      %v4563 = vpow.pop %v4562
      %v4564 = vmul.f32 %v4512, 1.442695
      %v4565 = vpow.pop %v4564
      %v4566 = vmul.f32 %v4513, 1.442695
      %v4567 = vpow.pop %v4566
      %v4568 = vmul.f32 %v4514, 1.442695
      %v4569 = vpow.pop %v4568
      %v4570 = vmul.f32 %v4515, 1.442695
      %v4571 = vpow.pop %v4570
      %v4572 = vmul.f32 %v4516, 1.442695
      %v4573 = vpow.pop %v4572
      %v4574 = vmul.f32 %v4517, 1.442695
      %v4575 = vpow.pop %v4574
      %v4576 = vmul.f32 %v4518, 1.442695
      %v4577 = vpow.pop %v4576
      %v4578 = vmul.f32 %v4519, 1.442695
      %v4579 = vpow.pop %v4578
      %v4580 = vmul.f32 %v4520, 1.442695
      %v4581 = vpow.pop %v4580
      %v4582 = vmul.f32 %v4521, 1.442695
      %v4583 = vpow.pop %v4582
      %v4584 = vmul.f32 %v4522, 1.442695
      %v4585 = vpow.pop %v4584
      %v4586 = vmul.f32 %v4523, 1.442695
      %v4587 = vpow.pop %v4586
      %v4588 = vadd.f32 %v4525, 1.0
      %v4589 = vadd.f32 %v4527, 1.0
      %v4590 = vadd.f32 %v4529, 1.0
      %v4591 = vadd.f32 %v4531, 1.0
      %v4592 = vadd.f32 %v4533, 1.0
      %v4593 = vadd.f32 %v4535, 1.0
      %v4594 = vadd.f32 %v4537, 1.0
      %v4595 = vadd.f32 %v4539, 1.0
      %v4596 = vadd.f32 %v4541, 1.0
      %v4597 = vadd.f32 %v4543, 1.0
      %v4598 = vadd.f32 %v4545, 1.0
      %v4599 = vadd.f32 %v4547, 1.0
      %v4600 = vadd.f32 %v4549, 1.0
      %v4601 = vadd.f32 %v4551, 1.0
      %v4602 = vadd.f32 %v4553, 1.0
      %v4603 = vadd.f32 %v4555, 1.0
      %v4604 = vadd.f32 %v4557, 1.0
      %v4605 = vadd.f32 %v4559, 1.0
      %v4606 = vadd.f32 %v4561, 1.0
      %v4607 = vadd.f32 %v4563, 1.0
      %v4608 = vadd.f32 %v4565, 1.0
      %v4609 = vadd.f32 %v4567, 1.0
      %v4610 = vadd.f32 %v4569, 1.0
      %v4611 = vadd.f32 %v4571, 1.0
      %v4612 = vadd.f32 %v4573, 1.0
      %v4613 = vadd.f32 %v4575, 1.0
      %v4614 = vadd.f32 %v4577, 1.0
      %v4615 = vadd.f32 %v4579, 1.0
      %v4616 = vadd.f32 %v4581, 1.0
      %v4617 = vadd.f32 %v4583, 1.0
      %v4618 = vadd.f32 %v4585, 1.0
      %v4619 = vadd.f32 %v4587, 1.0
      %v4620 = vrcp.pop %v4588
      %v4621 = vmul.f32 1.0, %v4620
      %v4622 = vrcp.pop %v4589
      %v4623 = vmul.f32 1.0, %v4622
      %v4624 = vrcp.pop %v4590
      %v4625 = vmul.f32 1.0, %v4624
      %v4626 = vrcp.pop %v4591
      %v4627 = vmul.f32 1.0, %v4626
      %v4628 = vrcp.pop %v4592
      %v4629 = vmul.f32 1.0, %v4628
      %v4630 = vrcp.pop %v4593
      %v4631 = vmul.f32 1.0, %v4630
      %v4632 = vrcp.pop %v4594
      %v4633 = vmul.f32 1.0, %v4632
      %v4634 = vrcp.pop %v4595
      %v4635 = vmul.f32 1.0, %v4634
      %v4636 = vrcp.pop %v4596
      %v4637 = vmul.f32 1.0, %v4636
      %v4638 = vrcp.pop %v4597
      %v4639 = vmul.f32 1.0, %v4638
      %v4640 = vrcp.pop %v4598
      %v4641 = vmul.f32 1.0, %v4640
      %v4642 = vrcp.pop %v4599
      %v4643 = vmul.f32 1.0, %v4642
      %v4644 = vrcp.pop %v4600
      %v4645 = vmul.f32 1.0, %v4644
      %v4646 = vrcp.pop %v4601
      %v4647 = vmul.f32 1.0, %v4646
      %v4648 = vrcp.pop %v4602
      %v4649 = vmul.f32 1.0, %v4648
      %v4650 = vrcp.pop %v4603
      %v4651 = vmul.f32 1.0, %v4650
      %v4652 = vrcp.pop %v4604
      %v4653 = vmul.f32 1.0, %v4652
      %v4654 = vrcp.pop %v4605
      %v4655 = vmul.f32 1.0, %v4654
      %v4656 = vrcp.pop %v4606
      %v4657 = vmul.f32 1.0, %v4656
      %v4658 = vrcp.pop %v4607
      %v4659 = vmul.f32 1.0, %v4658
      %v4660 = vrcp.pop %v4608
      %v4661 = vmul.f32 1.0, %v4660
      %v4662 = vrcp.pop %v4609
      %v4663 = vmul.f32 1.0, %v4662
      %v4664 = vrcp.pop %v4610
      %v4665 = vmul.f32 1.0, %v4664
      %v4666 = vrcp.pop %v4611
      %v4667 = vmul.f32 1.0, %v4666
      %v4668 = vrcp.pop %v4612
      %v4669 = vmul.f32 1.0, %v4668
      %v4670 = vrcp.pop %v4613
      %v4671 = vmul.f32 1.0, %v4670
      %v4672 = vrcp.pop %v4614
      %v4673 = vmul.f32 1.0, %v4672
      %v4674 = vrcp.pop %v4615
      %v4675 = vmul.f32 1.0, %v4674
      %v4676 = vrcp.pop %v4616
      %v4677 = vmul.f32 1.0, %v4676
      %v4678 = vrcp.pop %v4617
      %v4679 = vmul.f32 1.0, %v4678
      %v4680 = vrcp.pop %v4618
      %v4681 = vmul.f32 1.0, %v4680
      %v4682 = vrcp.pop %v4619
      %v4683 = vmul.f32 1.0, %v4682
      %v4684 = vpack.c.bf16 %v4623, %v4621
      %v4685 = vpack.c.bf16 %v4627, %v4625
      %v4686 = vpack.c.bf16 %v4631, %v4629
      %v4687 = vpack.c.bf16 %v4635, %v4633
      %v4688 = vpack.c.bf16 %v4639, %v4637
      %v4689 = vpack.c.bf16 %v4643, %v4641
      %v4690 = vpack.c.bf16 %v4647, %v4645
      %v4691 = vpack.c.bf16 %v4651, %v4649
      %v4692 = vpack.c.bf16 %v4655, %v4653
      %v4693 = vpack.c.bf16 %v4659, %v4657
      %v4694 = vpack.c.bf16 %v4663, %v4661
      %v4695 = vpack.c.bf16 %v4667, %v4665
      %v4696 = vpack.c.bf16 %v4671, %v4669
      %v4697 = vpack.c.bf16 %v4675, %v4673
      %v4698 = vpack.c.bf16 %v4679, %v4677
      %v4699 = vpack.c.bf16 %v4683, %v4681
      %4700 = vmatprep.subr.bf16.mxu0 %v1894
      %4701 = vmatpush1.bf16.msra.mxu0 %v1893
      %4702 = vmatprep.subr.bf16.mxu0 %v1892
      %4703 = vmatpush1.bf16.msra.mxu0 %v1891
      %4704 = vmatprep.subr.bf16.mxu0 %v1890
      %4705 = vmatpush1.bf16.msra.mxu0 %v1889
      %4706 = vmatprep.subr.bf16.mxu0 %v1888
      %4707 = vmatpush1.bf16.msra.mxu0 %v1887
      %4708 = vmatprep.subr.bf16.mxu0 %v1886
      %4709 = vmatpush1.bf16.msra.mxu0 %v1885
      %4710 = vmatprep.subr.bf16.mxu0 %v1884
      %4711 = vmatpush1.bf16.msra.mxu0 %v1883
      %4712 = vmatprep.subr.bf16.mxu0 %v1882
      %4713 = vmatpush1.bf16.msra.mxu0 %v1881
      %4714 = vmatprep.subr.bf16.mxu0 %v1880
      %4715 = vmatpush1.bf16.msra.mxu0 %v1879
      %4716 = vmatprep.subr.bf16.mxu0 0
      %4717 = vmatpush2.bf16.msra.mxu0 0
      %4718 = vmatprep.subr.bf16.mxu0 0
      %4719 = vmatpush2.bf16.msra.mxu0 0
      %4720 = vmatprep.subr.bf16.mxu0 0
      %4721 = vmatpush2.bf16.msra.mxu0 0
      %4722 = vmatprep.subr.bf16.mxu0 0
      %4723 = vmatpush2.bf16.msra.mxu0 0
      %4724 = vmatprep.subr.bf16.mxu0 0
      %4725 = vmatpush2.bf16.msra.mxu0 0
      %4726 = vmatprep.subr.bf16.mxu0 0
      %4727 = vmatpush2.bf16.msra.mxu0 0
      %4728 = vmatprep.subr.bf16.mxu0 0
      %4729 = vmatpush2.bf16.msra.mxu0 0
      %4730 = vmatprep.subr.bf16.mxu0 0
      %4731 = vmatpush2.bf16.msra.mxu0 0
      %4732 = vmatprep.mubr.bf16.mxu0 0
      %4733 = vmatmul.mubr.bf16.gmra.mxu0 %v4684
      %v4734 = vpop.f32.mrf.mxu0
      %v4735 = vadd.f32 0.0, %v4734
      %v4736 = vpop.f32.mrf.mxu0
      %v4737 = vadd.f32 0.0, %v4736
      %v4738 = vpop.f32.mrf.mxu0
      %v4739 = vadd.f32 0.0, %v4738
      %v4740 = vpop.f32.mrf.mxu0
      %v4741 = vadd.f32 0.0, %v4740
      %4742 = vmatprep.mubr.bf16.mxu0 0
      %4743 = vmatmul.mubr.bf16.gmra.mxu0 %v4685
      %v4744 = vpop.f32.mrf.mxu0
      %v4745 = vadd.f32 0.0, %v4744
      %v4746 = vpop.f32.mrf.mxu0
      %v4747 = vadd.f32 0.0, %v4746
      %v4748 = vpop.f32.mrf.mxu0
      %v4749 = vadd.f32 0.0, %v4748
      %v4750 = vpop.f32.mrf.mxu0
      %v4751 = vadd.f32 0.0, %v4750
      %4752 = vmatprep.mubr.bf16.mxu0 0
      %4753 = vmatmul.mubr.bf16.gmra.mxu0 %v4686
      %v4754 = vpop.f32.mrf.mxu0
      %v4755 = vadd.f32 0.0, %v4754
      %v4756 = vpop.f32.mrf.mxu0
      %v4757 = vadd.f32 0.0, %v4756
      %v4758 = vpop.f32.mrf.mxu0
      %v4759 = vadd.f32 0.0, %v4758
      %v4760 = vpop.f32.mrf.mxu0
      %v4761 = vadd.f32 0.0, %v4760
      %4762 = vmatprep.mubr.bf16.mxu0 0
      %4763 = vmatmul.mubr.bf16.gmra.mxu0 %v4687
      %v4764 = vpop.f32.mrf.mxu0
      %v4765 = vadd.f32 0.0, %v4764
      %v4766 = vpop.f32.mrf.mxu0
      %v4767 = vadd.f32 0.0, %v4766
      %v4768 = vpop.f32.mrf.mxu0
      %v4769 = vadd.f32 0.0, %v4768
      %v4770 = vpop.f32.mrf.mxu0
      %v4771 = vadd.f32 0.0, %v4770
      %4772 = vmatprep.mubr.bf16.mxu0 0
      %4773 = vmatmul.mubr.bf16.gmra.mxu0 %v4688
      %v4774 = vpop.f32.mrf.mxu0
      %v4775 = vadd.f32 0.0, %v4774
      %v4776 = vpop.f32.mrf.mxu0
      %v4777 = vadd.f32 0.0, %v4776
      %v4778 = vpop.f32.mrf.mxu0
      %v4779 = vadd.f32 0.0, %v4778
      %v4780 = vpop.f32.mrf.mxu0
      %v4781 = vadd.f32 0.0, %v4780
      %4782 = vmatprep.mubr.bf16.mxu0 0
      %4783 = vmatmul.mubr.bf16.gmra.mxu0 %v4689
      %v4784 = vpop.f32.mrf.mxu0
      %v4785 = vadd.f32 0.0, %v4784
      %v4786 = vpop.f32.mrf.mxu0
      %v4787 = vadd.f32 0.0, %v4786
      %v4788 = vpop.f32.mrf.mxu0
      %v4789 = vadd.f32 0.0, %v4788
      %v4790 = vpop.f32.mrf.mxu0
      %v4791 = vadd.f32 0.0, %v4790
      %4792 = vmatprep.mubr.bf16.mxu0 0
      %4793 = vmatmul.mubr.bf16.gmra.mxu0 %v4690
      %v4794 = vpop.f32.mrf.mxu0
      %v4795 = vadd.f32 0.0, %v4794
      %v4796 = vpop.f32.mrf.mxu0
      %v4797 = vadd.f32 0.0, %v4796
      %v4798 = vpop.f32.mrf.mxu0
      %v4799 = vadd.f32 0.0, %v4798
      %v4800 = vpop.f32.mrf.mxu0
      %v4801 = vadd.f32 0.0, %v4800
      %4802 = vmatprep.mubr.bf16.mxu0 0
      %4803 = vmatmul.mubr.bf16.gmra.mxu0 %v4691
      %v4804 = vpop.f32.mrf.mxu0
      %v4805 = vadd.f32 0.0, %v4804
      %v4806 = vpop.f32.mrf.mxu0
      %v4807 = vadd.f32 0.0, %v4806
      %v4808 = vpop.f32.mrf.mxu0
      %v4809 = vadd.f32 0.0, %v4808
      %v4810 = vpop.f32.mrf.mxu0
      %v4811 = vadd.f32 0.0, %v4810
      %4812 = vmatprep.mubr.bf16.mxu0 0
      %4813 = vmatmul.mubr.bf16.gmra.mxu0 %v4692
      %v4814 = vpop.f32.mrf.mxu0
      %v4815 = vadd.f32 0.0, %v4814
      %v4816 = vpop.f32.mrf.mxu0
      %v4817 = vadd.f32 0.0, %v4816
      %v4818 = vpop.f32.mrf.mxu0
      %v4819 = vadd.f32 0.0, %v4818
      %v4820 = vpop.f32.mrf.mxu0
      %v4821 = vadd.f32 0.0, %v4820
      %4822 = vmatprep.mubr.bf16.mxu0 0
      %4823 = vmatmul.mubr.bf16.gmra.mxu0 %v4693
      %v4824 = vpop.f32.mrf.mxu0
      %v4825 = vadd.f32 0.0, %v4824
      %v4826 = vpop.f32.mrf.mxu0
      %v4827 = vadd.f32 0.0, %v4826
      %v4828 = vpop.f32.mrf.mxu0
      %v4829 = vadd.f32 0.0, %v4828
      %v4830 = vpop.f32.mrf.mxu0
      %v4831 = vadd.f32 0.0, %v4830
      %4832 = vmatprep.mubr.bf16.mxu0 0
      %4833 = vmatmul.mubr.bf16.gmra.mxu0 %v4694
      %v4834 = vpop.f32.mrf.mxu0
      %v4835 = vadd.f32 0.0, %v4834
      %v4836 = vpop.f32.mrf.mxu0
      %v4837 = vadd.f32 0.0, %v4836
      %v4838 = vpop.f32.mrf.mxu0
      %v4839 = vadd.f32 0.0, %v4838
      %v4840 = vpop.f32.mrf.mxu0
      %v4841 = vadd.f32 0.0, %v4840
      %4842 = vmatprep.mubr.bf16.mxu0 0
      %4843 = vmatmul.mubr.bf16.gmra.mxu0 %v4695
      %v4844 = vpop.f32.mrf.mxu0
      %v4845 = vadd.f32 0.0, %v4844
      %v4846 = vpop.f32.mrf.mxu0
      %v4847 = vadd.f32 0.0, %v4846
      %v4848 = vpop.f32.mrf.mxu0
      %v4849 = vadd.f32 0.0, %v4848
      %v4850 = vpop.f32.mrf.mxu0
      %v4851 = vadd.f32 0.0, %v4850
      %4852 = vmatprep.mubr.bf16.mxu0 0
      %4853 = vmatmul.mubr.bf16.gmra.mxu0 %v4696
      %v4854 = vpop.f32.mrf.mxu0
      %v4855 = vadd.f32 0.0, %v4854
      %v4856 = vpop.f32.mrf.mxu0
      %v4857 = vadd.f32 0.0, %v4856
      %v4858 = vpop.f32.mrf.mxu0
      %v4859 = vadd.f32 0.0, %v4858
      %v4860 = vpop.f32.mrf.mxu0
      %v4861 = vadd.f32 0.0, %v4860
      %4862 = vmatprep.mubr.bf16.mxu0 0
      %4863 = vmatmul.mubr.bf16.gmra.mxu0 %v4697
      %v4864 = vpop.f32.mrf.mxu0
      %v4865 = vadd.f32 0.0, %v4864
      %v4866 = vpop.f32.mrf.mxu0
      %v4867 = vadd.f32 0.0, %v4866
      %v4868 = vpop.f32.mrf.mxu0
      %v4869 = vadd.f32 0.0, %v4868
      %v4870 = vpop.f32.mrf.mxu0
      %v4871 = vadd.f32 0.0, %v4870
      %4872 = vmatprep.mubr.bf16.mxu0 0
      %4873 = vmatmul.mubr.bf16.gmra.mxu0 %v4698
      %v4874 = vpop.f32.mrf.mxu0
      %v4875 = vadd.f32 0.0, %v4874
      %v4876 = vpop.f32.mrf.mxu0
      %v4877 = vadd.f32 0.0, %v4876
      %v4878 = vpop.f32.mrf.mxu0
      %v4879 = vadd.f32 0.0, %v4878
      %v4880 = vpop.f32.mrf.mxu0
      %v4881 = vadd.f32 0.0, %v4880
      %4882 = vmatprep.mubr.bf16.mxu0 0
      %4883 = vmatmul.mubr.bf16.gmra.mxu0 %v4699
      %v4884 = vpop.f32.mrf.mxu0
      %v4885 = vadd.f32 0.0, %v4884
      %v4886 = vpop.f32.mrf.mxu0
      %v4887 = vadd.f32 0.0, %v4886
      %v4888 = vpop.f32.mrf.mxu0
      %v4889 = vadd.f32 0.0, %v4888
      %v4890 = vpop.f32.mrf.mxu0
      %v4891 = vadd.f32 0.0, %v4890
      %4892 = vdwg.mxu0
      %v4893 = vmul.f32 %v4175, %v4735
      %v4894 = vmul.f32 %v4366, %v4737
      %v4895 = vmul.f32 %v4179, %v4739
      %v4896 = vmul.f32 %v4369, %v4741
      %v4897 = vmul.f32 %v4185, %v4745
      %v4898 = vmul.f32 %v4374, %v4747
      %v4899 = vmul.f32 %v4189, %v4749
      %v4900 = vmul.f32 %v4377, %v4751
      %v4901 = vmul.f32 %v4195, %v4755
      %v4902 = vmul.f32 %v4382, %v4757
      %v4903 = vmul.f32 %v4199, %v4759
      %v4904 = vmul.f32 %v4385, %v4761
      %v4905 = vmul.f32 %v4205, %v4765
      %v4906 = vmul.f32 %v4390, %v4767
      %v4907 = vmul.f32 %v4209, %v4769
      %v4908 = vmul.f32 %v4393, %v4771
      %v4909 = vmul.f32 %v4215, %v4775
      %v4910 = vmul.f32 %v4398, %v4777
      %v4911 = vmul.f32 %v4219, %v4779
      %v4912 = vmul.f32 %v4401, %v4781
      %v4913 = vmul.f32 %v4225, %v4785
      %v4914 = vmul.f32 %v4406, %v4787
      %v4915 = vmul.f32 %v4229, %v4789
      %v4916 = vmul.f32 %v4409, %v4791
      %v4917 = vmul.f32 %v4235, %v4795
      %v4918 = vmul.f32 %v4414, %v4797
      %v4919 = vmul.f32 %v4239, %v4799
      %v4920 = vmul.f32 %v4417, %v4801
      %v4921 = vmul.f32 %v4245, %v4805
      %v4922 = vmul.f32 %v4422, %v4807
      %v4923 = vmul.f32 %v4249, %v4809
      %v4924 = vmul.f32 %v4425, %v4811
      %v4925 = vmul.f32 %v4255, %v4815
      %v4926 = vmul.f32 %v4430, %v4817
      %v4927 = vmul.f32 %v4259, %v4819
      %v4928 = vmul.f32 %v4433, %v4821
      %v4929 = vmul.f32 %v4265, %v4825
      %v4930 = vmul.f32 %v4438, %v4827
      %v4931 = vmul.f32 %v4269, %v4829
      %v4932 = vmul.f32 %v4441, %v4831
      %v4933 = vmul.f32 %v4275, %v4835
      %v4934 = vmul.f32 %v4446, %v4837
      %v4935 = vmul.f32 %v4279, %v4839
      %v4936 = vmul.f32 %v4449, %v4841
      %v4937 = vmul.f32 %v4285, %v4845
      %v4938 = vmul.f32 %v4454, %v4847
      %v4939 = vmul.f32 %v4289, %v4849
      %v4940 = vmul.f32 %v4457, %v4851
      %v4941 = vmul.f32 %v4295, %v4855
      %v4942 = vmul.f32 %v4462, %v4857
      %v4943 = vmul.f32 %v4299, %v4859
      %v4944 = vmul.f32 %v4465, %v4861
      %v4945 = vmul.f32 %v4305, %v4865
      %v4946 = vmul.f32 %v4470, %v4867
      %v4947 = vmul.f32 %v4309, %v4869
      %v4948 = vmul.f32 %v4473, %v4871
      %v4949 = vmul.f32 %v4315, %v4875
      %v4950 = vmul.f32 %v4478, %v4877
      %v4951 = vmul.f32 %v4319, %v4879
      %v4952 = vmul.f32 %v4481, %v4881
      %v4953 = vmul.f32 %v4325, %v4885
      %v4954 = vmul.f32 %v4486, %v4887
      %v4955 = vmul.f32 %v4329, %v4889
      %v4956 = vmul.f32 %v4489, %v4891
      %s4957 = scalar_lea.vmem %s5, 4
      %v4958 = vld [vmem:[%s4957] sm:$0x3]
      %v4960 = vlaneseq
      %v4961 = vshrl.u32 %v4960, 7
      %v4962 = vsub.s32 0, %v4961
      %v4963 = vrot.slane %v4958, %v4962
      %v4964 = vlaneseq
      %v4965 = vshrl.u32 %v4964, 7
      %v4966 = vsub.s32 1, %v4965
      %v4967 = vrot.slane %v4958, %v4966
      %v4970 = vadd.f32 %v4893, %v4963
      %v4971 = vadd.f32 %v4894, %v4967
      %v4972 = vadd.f32 %v4895, %v4963
      %v4973 = vadd.f32 %v4896, %v4967
      %v4974 = vadd.f32 %v4897, %v4963
      %v4975 = vadd.f32 %v4898, %v4967
      %v4976 = vadd.f32 %v4899, %v4963
      %v4977 = vadd.f32 %v4900, %v4967
      %v4978 = vadd.f32 %v4901, %v4963
      %v4979 = vadd.f32 %v4902, %v4967
      %v4980 = vadd.f32 %v4903, %v4963
      %v4981 = vadd.f32 %v4904, %v4967
      %v4982 = vadd.f32 %v4905, %v4963
      %v4983 = vadd.f32 %v4906, %v4967
      %v4984 = vadd.f32 %v4907, %v4963
      %v4985 = vadd.f32 %v4908, %v4967
      %v4986 = vadd.f32 %v4909, %v4963
      %v4987 = vadd.f32 %v4910, %v4967
      %v4988 = vadd.f32 %v4911, %v4963
      %v4989 = vadd.f32 %v4912, %v4967
      %v4990 = vadd.f32 %v4913, %v4963
      %v4991 = vadd.f32 %v4914, %v4967
      %v4992 = vadd.f32 %v4915, %v4963
      %v4993 = vadd.f32 %v4916, %v4967
      %v4994 = vadd.f32 %v4917, %v4963
      %v4995 = vadd.f32 %v4918, %v4967
      %v4996 = vadd.f32 %v4919, %v4963
      %v4997 = vadd.f32 %v4920, %v4967
      %v4998 = vadd.f32 %v4921, %v4963
      %v4999 = vadd.f32 %v4922, %v4967
      %v5000 = vadd.f32 %v4923, %v4963
      %v5001 = vadd.f32 %v4924, %v4967
      %v5002 = vadd.f32 %v4925, %v4963
      %v5003 = vadd.f32 %v4926, %v4967
      %v5004 = vadd.f32 %v4927, %v4963
      %v5005 = vadd.f32 %v4928, %v4967
      %v5006 = vadd.f32 %v4929, %v4963
      %v5007 = vadd.f32 %v4930, %v4967
      %v5008 = vadd.f32 %v4931, %v4963
      %v5009 = vadd.f32 %v4932, %v4967
      %v5010 = vadd.f32 %v4933, %v4963
      %v5011 = vadd.f32 %v4934, %v4967
      %v5012 = vadd.f32 %v4935, %v4963
      %v5013 = vadd.f32 %v4936, %v4967
      %v5014 = vadd.f32 %v4937, %v4963
      %v5015 = vadd.f32 %v4938, %v4967
      %v5016 = vadd.f32 %v4939, %v4963
      %v5017 = vadd.f32 %v4940, %v4967
      %v5018 = vadd.f32 %v4941, %v4963
      %v5019 = vadd.f32 %v4942, %v4967
      %v5020 = vadd.f32 %v4943, %v4963
      %v5021 = vadd.f32 %v4944, %v4967
      %v5022 = vadd.f32 %v4945, %v4963
      %v5023 = vadd.f32 %v4946, %v4967
      %v5024 = vadd.f32 %v4947, %v4963
      %v5025 = vadd.f32 %v4948, %v4967
      %v5026 = vadd.f32 %v4949, %v4963
      %v5027 = vadd.f32 %v4950, %v4967
      %v5028 = vadd.f32 %v4951, %v4963
      %v5029 = vadd.f32 %v4952, %v4967
      %v5030 = vadd.f32 %v4953, %v4963
      %v5031 = vadd.f32 %v4954, %v4967
      %v5032 = vadd.f32 %v4955, %v4963
      %v5033 = vadd.f32 %v4956, %v4967
      %v5034 = vadd.f32 %v4970, %v3703
      %v5035 = vadd.f32 %v4971, %v3704
      %v5036 = vadd.f32 %v4972, %v3705
      %v5037 = vadd.f32 %v4973, %v3706
      %v5038 = vadd.f32 %v4974, %v3707
      %v5039 = vadd.f32 %v4975, %v3708
      %v5040 = vadd.f32 %v4976, %v3709
      %v5041 = vadd.f32 %v4977, %v3710
      %v5042 = vadd.f32 %v4978, %v3711
      %v5043 = vadd.f32 %v4979, %v3712
      %v5044 = vadd.f32 %v4980, %v3713
      %v5045 = vadd.f32 %v4981, %v3714
      %v5046 = vadd.f32 %v4982, %v3715
      %v5047 = vadd.f32 %v4983, %v3716
      %v5048 = vadd.f32 %v4984, %v3717
      %v5049 = vadd.f32 %v4985, %v3718
      %v5050 = vadd.f32 %v4986, %v3719
      %v5051 = vadd.f32 %v4987, %v3720
      %v5052 = vadd.f32 %v4988, %v3721
      %v5053 = vadd.f32 %v4989, %v3722
      %v5054 = vadd.f32 %v4990, %v3723
      %v5055 = vadd.f32 %v4991, %v3724
      %v5056 = vadd.f32 %v4992, %v3725
      %v5057 = vadd.f32 %v4993, %v3726
      %v5058 = vadd.f32 %v4994, %v3727
      %v5059 = vadd.f32 %v4995, %v3728
      %v5060 = vadd.f32 %v4996, %v3729
      %v5061 = vadd.f32 %v4997, %v3730
      %v5062 = vadd.f32 %v4998, %v3731
      %v5063 = vadd.f32 %v4999, %v3732
      %v5064 = vadd.f32 %v5000, %v3733
      %v5065 = vadd.f32 %v5001, %v3734
      %v5066 = vadd.f32 %v5002, %v3735
      %v5067 = vadd.f32 %v5003, %v3736
      %v5068 = vadd.f32 %v5004, %v3737
      %v5069 = vadd.f32 %v5005, %v3738
      %v5070 = vadd.f32 %v5006, %v3739
      %v5071 = vadd.f32 %v5007, %v3740
      %v5072 = vadd.f32 %v5008, %v3741
      %v5073 = vadd.f32 %v5009, %v3742
      %v5074 = vadd.f32 %v5010, %v3743
      %v5075 = vadd.f32 %v5011, %v3744
      %v5076 = vadd.f32 %v5012, %v3745
      %v5077 = vadd.f32 %v5013, %v3746
      %v5078 = vadd.f32 %v5014, %v3747
      %v5079 = vadd.f32 %v5015, %v3748
      %v5080 = vadd.f32 %v5016, %v3749
      %v5081 = vadd.f32 %v5017, %v3750
      %v5082 = vadd.f32 %v5018, %v3751
      %v5083 = vadd.f32 %v5019, %v3752
      %v5084 = vadd.f32 %v5020, %v3753
      %v5085 = vadd.f32 %v5021, %v3754
      %v5086 = vadd.f32 %v5022, %v3755
      %v5087 = vadd.f32 %v5023, %v3756
      %v5088 = vadd.f32 %v5024, %v3757
      %v5089 = vadd.f32 %v5025, %v3758
      %v5090 = vadd.f32 %v5026, %v3759
      %v5091 = vadd.f32 %v5027, %v3760
      %v5092 = vadd.f32 %v5028, %v3761
      %v5093 = vadd.f32 %v5029, %v3762
      %v5094 = vadd.f32 %v5030, %v3763
      %v5095 = vadd.f32 %v5031, %v3764
      %v5096 = vadd.f32 %v5032, %v3765
      %v5097 = vadd.f32 %v5033, %v3766
      %v5098 = vmax.f32 %v5034, 0.0
      %v5099 = vmax.f32 %v5035, 0.0
      %v5100 = vmax.f32 %v5036, 0.0
      %v5101 = vmax.f32 %v5037, 0.0
      %v5102 = vmax.f32 %v5038, 0.0
      %v5103 = vmax.f32 %v5039, 0.0
      %v5104 = vmax.f32 %v5040, 0.0
      %v5105 = vmax.f32 %v5041, 0.0
      %v5106 = vmax.f32 %v5042, 0.0
      %v5107 = vmax.f32 %v5043, 0.0
      %v5108 = vmax.f32 %v5044, 0.0
      %v5109 = vmax.f32 %v5045, 0.0
      %v5110 = vmax.f32 %v5046, 0.0
      %v5111 = vmax.f32 %v5047, 0.0
      %v5112 = vmax.f32 %v5048, 0.0
      %v5113 = vmax.f32 %v5049, 0.0
      %v5114 = vmax.f32 %v5050, 0.0
      %v5115 = vmax.f32 %v5051, 0.0
      %v5116 = vmax.f32 %v5052, 0.0
      %v5117 = vmax.f32 %v5053, 0.0
      %v5118 = vmax.f32 %v5054, 0.0
      %v5119 = vmax.f32 %v5055, 0.0
      %v5120 = vmax.f32 %v5056, 0.0
      %v5121 = vmax.f32 %v5057, 0.0
      %v5122 = vmax.f32 %v5058, 0.0
      %v5123 = vmax.f32 %v5059, 0.0
      %v5124 = vmax.f32 %v5060, 0.0
      %v5125 = vmax.f32 %v5061, 0.0
      %v5126 = vmax.f32 %v5062, 0.0
      %v5127 = vmax.f32 %v5063, 0.0
      %v5128 = vmax.f32 %v5064, 0.0
      %v5129 = vmax.f32 %v5065, 0.0
      %v5130 = vmax.f32 %v5066, 0.0
      %v5131 = vmax.f32 %v5067, 0.0
      %v5132 = vmax.f32 %v5068, 0.0
      %v5133 = vmax.f32 %v5069, 0.0
      %v5134 = vmax.f32 %v5070, 0.0
      %v5135 = vmax.f32 %v5071, 0.0
      %v5136 = vmax.f32 %v5072, 0.0
      %v5137 = vmax.f32 %v5073, 0.0
      %v5138 = vmax.f32 %v5074, 0.0
      %v5139 = vmax.f32 %v5075, 0.0
      %v5140 = vmax.f32 %v5076, 0.0
      %v5141 = vmax.f32 %v5077, 0.0
      %v5142 = vmax.f32 %v5078, 0.0
      %v5143 = vmax.f32 %v5079, 0.0
      %v5144 = vmax.f32 %v5080, 0.0
      %v5145 = vmax.f32 %v5081, 0.0
      %v5146 = vmax.f32 %v5082, 0.0
      %v5147 = vmax.f32 %v5083, 0.0
      %v5148 = vmax.f32 %v5084, 0.0
      %v5149 = vmax.f32 %v5085, 0.0
      %v5150 = vmax.f32 %v5086, 0.0
      %v5151 = vmax.f32 %v5087, 0.0
      %v5152 = vmax.f32 %v5088, 0.0
      %v5153 = vmax.f32 %v5089, 0.0
      %v5154 = vmax.f32 %v5090, 0.0
      %v5155 = vmax.f32 %v5091, 0.0
      %v5156 = vmax.f32 %v5092, 0.0
      %v5157 = vmax.f32 %v5093, 0.0
      %v5158 = vmax.f32 %v5094, 0.0
      %v5159 = vmax.f32 %v5095, 0.0
      %v5160 = vmax.f32 %v5096, 0.0
      %v5161 = vmax.f32 %v5097, 0.0
      %v5162 = vpack.c.bf16 %v5100, %v5098
      %v5163 = vpack.c.bf16 %v5101, %v5099
      %v5164 = vpack.c.bf16 %v5104, %v5102
      %v5165 = vpack.c.bf16 %v5105, %v5103
      %v5166 = vpack.c.bf16 %v5108, %v5106
      %v5167 = vpack.c.bf16 %v5109, %v5107
      %v5168 = vpack.c.bf16 %v5112, %v5110
      %v5169 = vpack.c.bf16 %v5113, %v5111
      %v5170 = vpack.c.bf16 %v5116, %v5114
      %v5171 = vpack.c.bf16 %v5117, %v5115
      %v5172 = vpack.c.bf16 %v5120, %v5118
      %v5173 = vpack.c.bf16 %v5121, %v5119
      %v5174 = vpack.c.bf16 %v5124, %v5122
      %v5175 = vpack.c.bf16 %v5125, %v5123
      %v5176 = vpack.c.bf16 %v5128, %v5126
      %v5177 = vpack.c.bf16 %v5129, %v5127
      %v5178 = vpack.c.bf16 %v5132, %v5130
      %v5179 = vpack.c.bf16 %v5133, %v5131
      %v5180 = vpack.c.bf16 %v5136, %v5134
      %v5181 = vpack.c.bf16 %v5137, %v5135
      %v5182 = vpack.c.bf16 %v5140, %v5138
      %v5183 = vpack.c.bf16 %v5141, %v5139
      %v5184 = vpack.c.bf16 %v5144, %v5142
      %v5185 = vpack.c.bf16 %v5145, %v5143
      %v5186 = vpack.c.bf16 %v5148, %v5146
      %v5187 = vpack.c.bf16 %v5149, %v5147
      %v5188 = vpack.c.bf16 %v5152, %v5150
      %v5189 = vpack.c.bf16 %v5153, %v5151
      %v5190 = vpack.c.bf16 %v5156, %v5154
      %v5191 = vpack.c.bf16 %v5157, %v5155
      %v5192 = vpack.c.bf16 %v5160, %v5158
      %v5193 = vpack.c.bf16 %v5161, %v5159
      %v5194 = vld [vmem:[%s7] sm:$0xff]
      %v5195 = vld [vmem:[%s7 + $0x8] sm:$0xff]
      %v5196 = vld [vmem:[%s7 + $0x10] sm:$0xff]
      %v5197 = vld [vmem:[%s7 + $0x18] sm:$0xff]
      %v5198 = vld [vmem:[%s7 + $0x20] sm:$0xff]
      %v5199 = vld [vmem:[%s7 + $0x28] sm:$0xff]
      %v5200 = vld [vmem:[%s7 + $0x30] sm:$0xff]
      %v5201 = vld [vmem:[%s7 + $0x38] sm:$0xff]
      %v5202 = vld [vmem:[%s7 + $0x40] sm:$0xff]
      %v5203 = vld [vmem:[%s7 + $0x48] sm:$0xff]
      %v5204 = vld [vmem:[%s7 + $0x50] sm:$0xff]
      %v5205 = vld [vmem:[%s7 + $0x58] sm:$0xff]
      %v5206 = vld [vmem:[%s7 + $0x60] sm:$0xff]
      %v5207 = vld [vmem:[%s7 + $0x68] sm:$0xff]
      %v5208 = vld [vmem:[%s7 + $0x70] sm:$0xff]
      %v5209 = vld [vmem:[%s7 + $0x78] sm:$0xff]
      %v5210 = vld [vmem:[%s7 + $0x80] sm:$0xff]
      %v5211 = vld [vmem:[%s7 + $0x88] sm:$0xff]
      %v5212 = vld [vmem:[%s7 + $0x90] sm:$0xff]
      %v5213 = vld [vmem:[%s7 + $0x98] sm:$0xff]
      %v5214 = vld [vmem:[%s7 + $0xa0] sm:$0xff]
      %v5215 = vld [vmem:[%s7 + $0xa8] sm:$0xff]
      %v5216 = vld [vmem:[%s7 + $0xb0] sm:$0xff]
      %v5217 = vld [vmem:[%s7 + $0xb8] sm:$0xff]
      %v5218 = vld [vmem:[%s7 + $0xc0] sm:$0xff]
      %v5219 = vld [vmem:[%s7 + $0xc8] sm:$0xff]
      %v5220 = vld [vmem:[%s7 + $0xd0] sm:$0xff]
      %v5221 = vld [vmem:[%s7 + $0xd8] sm:$0xff]
      %v5222 = vld [vmem:[%s7 + $0xe0] sm:$0xff]
      %v5223 = vld [vmem:[%s7 + $0xe8] sm:$0xff]
      %v5224 = vld [vmem:[%s7 + $0xf0] sm:$0xff]
      %v5225 = vld [vmem:[%s7 + $0xf8] sm:$0xff]
      %v5226 = vld [vmem:[%s8] sm:$0x3]
      %v5228 = vlaneseq
      %v5229 = vshrl.u32 %v5228, 7
      %v5230 = vsub.s32 0, %v5229
      %v5231 = vrot.slane %v5226, %v5230
      %v5232 = vlaneseq
      %v5233 = vshrl.u32 %v5232, 7
      %v5234 = vsub.s32 1, %v5233
      %v5235 = vrot.slane %v5226, %v5234
      %v5270 = vunpack.c.l.b16 %v5194
      %v5271 = vunpack.c.h.b16 %v5194
      %v5272 = vunpack.c.l.b16 %v5195
      %v5273 = vunpack.c.h.b16 %v5195
      %v5274 = vunpack.c.l.b16 %v5196
      %v5275 = vunpack.c.h.b16 %v5196
      %v5276 = vunpack.c.l.b16 %v5197
      %v5277 = vunpack.c.h.b16 %v5197
      %v5278 = vunpack.c.l.b16 %v5198
      %v5279 = vunpack.c.h.b16 %v5198
      %v5280 = vunpack.c.l.b16 %v5199
      %v5281 = vunpack.c.h.b16 %v5199
      %v5282 = vunpack.c.l.b16 %v5200
      %v5283 = vunpack.c.h.b16 %v5200
      %v5284 = vunpack.c.l.b16 %v5201
      %v5285 = vunpack.c.h.b16 %v5201
      %v5286 = vunpack.c.l.b16 %v5202
      %v5287 = vunpack.c.h.b16 %v5202
      %v5288 = vunpack.c.l.b16 %v5203
      %v5289 = vunpack.c.h.b16 %v5203
      %v5290 = vunpack.c.l.b16 %v5204
      %v5291 = vunpack.c.h.b16 %v5204
      %v5292 = vunpack.c.l.b16 %v5205
      %v5293 = vunpack.c.h.b16 %v5205
      %v5294 = vunpack.c.l.b16 %v5206
      %v5295 = vunpack.c.h.b16 %v5206
      %v5296 = vunpack.c.l.b16 %v5207
      %v5297 = vunpack.c.h.b16 %v5207
      %v5298 = vunpack.c.l.b16 %v5208
      %v5299 = vunpack.c.h.b16 %v5208
      %v5300 = vunpack.c.l.b16 %v5209
      %v5301 = vunpack.c.h.b16 %v5209
      %v5302 = vunpack.c.l.b16 %v5210
      %v5303 = vunpack.c.h.b16 %v5210
      %v5304 = vunpack.c.l.b16 %v5211
      %v5305 = vunpack.c.h.b16 %v5211
      %v5306 = vunpack.c.l.b16 %v5212
      %v5307 = vunpack.c.h.b16 %v5212
      %v5308 = vunpack.c.l.b16 %v5213
      %v5309 = vunpack.c.h.b16 %v5213
      %v5310 = vunpack.c.l.b16 %v5214
      %v5311 = vunpack.c.h.b16 %v5214
      %v5312 = vunpack.c.l.b16 %v5215
      %v5313 = vunpack.c.h.b16 %v5215
      %v5314 = vunpack.c.l.b16 %v5216
      %v5315 = vunpack.c.h.b16 %v5216
      %v5316 = vunpack.c.l.b16 %v5217
      %v5317 = vunpack.c.h.b16 %v5217
      %v5318 = vunpack.c.l.b16 %v5218
      %v5319 = vunpack.c.h.b16 %v5218
      %v5320 = vunpack.c.l.b16 %v5219
      %v5321 = vunpack.c.h.b16 %v5219
      %v5322 = vunpack.c.l.b16 %v5220
      %v5323 = vunpack.c.h.b16 %v5220
      %v5324 = vunpack.c.l.b16 %v5221
      %v5325 = vunpack.c.h.b16 %v5221
      %v5326 = vunpack.c.l.b16 %v5222
      %v5327 = vunpack.c.h.b16 %v5222
      %v5328 = vunpack.c.l.b16 %v5223
      %v5329 = vunpack.c.h.b16 %v5223
      %v5330 = vunpack.c.l.b16 %v5224
      %v5331 = vunpack.c.h.b16 %v5224
      %v5332 = vunpack.c.l.b16 %v5225
      %v5333 = vunpack.c.h.b16 %v5225
      %v5334 = vpack.c.b16 %v5272, %v5270
      %v5335 = vpack.c.b16 %v5273, %v5271
      %v5336 = vpack.c.b16 %v5276, %v5274
      %v5337 = vpack.c.b16 %v5277, %v5275
      %v5338 = vpack.c.b16 %v5280, %v5278
      %v5339 = vpack.c.b16 %v5281, %v5279
      %v5340 = vpack.c.b16 %v5284, %v5282
      %v5341 = vpack.c.b16 %v5285, %v5283
      %v5342 = vpack.c.b16 %v5288, %v5286
      %v5343 = vpack.c.b16 %v5289, %v5287
      %v5344 = vpack.c.b16 %v5292, %v5290
      %v5345 = vpack.c.b16 %v5293, %v5291
      %v5346 = vpack.c.b16 %v5296, %v5294
      %v5347 = vpack.c.b16 %v5297, %v5295
      %v5348 = vpack.c.b16 %v5300, %v5298
      %v5349 = vpack.c.b16 %v5301, %v5299
      %v5350 = vpack.c.b16 %v5304, %v5302
      %v5351 = vpack.c.b16 %v5305, %v5303
      %v5352 = vpack.c.b16 %v5308, %v5306
      %v5353 = vpack.c.b16 %v5309, %v5307
      %v5354 = vpack.c.b16 %v5312, %v5310
      %v5355 = vpack.c.b16 %v5313, %v5311
      %v5356 = vpack.c.b16 %v5316, %v5314
      %v5357 = vpack.c.b16 %v5317, %v5315
      %v5358 = vpack.c.b16 %v5320, %v5318
      %v5359 = vpack.c.b16 %v5321, %v5319
      %v5360 = vpack.c.b16 %v5324, %v5322
      %v5361 = vpack.c.b16 %v5325, %v5323
      %v5362 = vpack.c.b16 %v5328, %v5326
      %v5363 = vpack.c.b16 %v5329, %v5327
      %v5364 = vpack.c.b16 %v5332, %v5330
      %v5365 = vpack.c.b16 %v5333, %v5331
      %5398 = vmatprep.subr.bf16.mxu0 %v5349
      %5399 = vmatpush1.bf16.msra.mxu0 %v5348
      %5400 = vmatprep.subr.bf16.mxu0 %v5347
      %5401 = vmatpush1.bf16.msra.mxu0 %v5346
      %5402 = vmatprep.subr.bf16.mxu0 %v5345
      %5403 = vmatpush1.bf16.msra.mxu0 %v5344
      %5404 = vmatprep.subr.bf16.mxu0 %v5343
      %5405 = vmatpush1.bf16.msra.mxu0 %v5342
      %5406 = vmatprep.subr.bf16.mxu0 %v5341
      %5407 = vmatpush1.bf16.msra.mxu0 %v5340
      %5408 = vmatprep.subr.bf16.mxu0 %v5339
      %5409 = vmatpush1.bf16.msra.mxu0 %v5338
      %5410 = vmatprep.subr.bf16.mxu0 %v5337
      %5411 = vmatpush1.bf16.msra.mxu0 %v5336
      %5412 = vmatprep.subr.bf16.mxu0 %v5335
      %5413 = vmatpush1.bf16.msra.mxu0 %v5334
      %5414 = vmatprep.subr.bf16.mxu0 %v5365
      %5415 = vmatpush2.bf16.msra.mxu0 %v5364
      %5416 = vmatprep.subr.bf16.mxu0 %v5363
      %5417 = vmatpush2.bf16.msra.mxu0 %v5362
      %5418 = vmatprep.subr.bf16.mxu0 %v5361
      %5419 = vmatpush2.bf16.msra.mxu0 %v5360
      %5420 = vmatprep.subr.bf16.mxu0 %v5359
      %5421 = vmatpush2.bf16.msra.mxu0 %v5358
      %5422 = vmatprep.subr.bf16.mxu0 %v5357
      %5423 = vmatpush2.bf16.msra.mxu0 %v5356
      %5424 = vmatprep.subr.bf16.mxu0 %v5355
      %5425 = vmatpush2.bf16.msra.mxu0 %v5354
      %5426 = vmatprep.subr.bf16.mxu0 %v5353
      %5427 = vmatpush2.bf16.msra.mxu0 %v5352
      %5428 = vmatprep.subr.bf16.mxu0 %v5351
      %5429 = vmatpush2.bf16.msra.mxu0 %v5350
      %5430 = vmatprep.mubr.bf16.mxu0 %v5163
      %5431 = vmatmul.mubr.bf16.gmra.mxu0 %v5162
      %v5432 = vpop.f32.mrf.mxu0
      %v5433 = vadd.f32 %v5231, %v5432
      %v5434 = vpop.f32.mrf.mxu0
      %v5435 = vadd.f32 %v5235, %v5434
      %v5436 = vpop.f32.mrf.mxu0
      %v5437 = vadd.f32 %v5231, %v5436
      %v5438 = vpop.f32.mrf.mxu0
      %v5439 = vadd.f32 %v5235, %v5438
      %5440 = vmatprep.mubr.bf16.mxu0 %v5165
      %5441 = vmatmul.mubr.bf16.gmra.mxu0 %v5164
      %v5442 = vpop.f32.mrf.mxu0
      %v5443 = vadd.f32 %v5231, %v5442
      %v5444 = vpop.f32.mrf.mxu0
      %v5445 = vadd.f32 %v5235, %v5444
      %v5446 = vpop.f32.mrf.mxu0
      %v5447 = vadd.f32 %v5231, %v5446
      %v5448 = vpop.f32.mrf.mxu0
      %v5449 = vadd.f32 %v5235, %v5448
      %5450 = vmatprep.mubr.bf16.mxu0 %v5167
      %5451 = vmatmul.mubr.bf16.gmra.mxu0 %v5166
      %v5452 = vpop.f32.mrf.mxu0
      %v5453 = vadd.f32 %v5231, %v5452
      %v5454 = vpop.f32.mrf.mxu0
      %v5455 = vadd.f32 %v5235, %v5454
      %v5456 = vpop.f32.mrf.mxu0
      %v5457 = vadd.f32 %v5231, %v5456
      %v5458 = vpop.f32.mrf.mxu0
      %v5459 = vadd.f32 %v5235, %v5458
      %5460 = vmatprep.mubr.bf16.mxu0 %v5169
      %5461 = vmatmul.mubr.bf16.gmra.mxu0 %v5168
      %v5462 = vpop.f32.mrf.mxu0
      %v5463 = vadd.f32 %v5231, %v5462
      %v5464 = vpop.f32.mrf.mxu0
      %v5465 = vadd.f32 %v5235, %v5464
      %v5466 = vpop.f32.mrf.mxu0
      %v5467 = vadd.f32 %v5231, %v5466
      %v5468 = vpop.f32.mrf.mxu0
      %v5469 = vadd.f32 %v5235, %v5468
      %5470 = vmatprep.mubr.bf16.mxu0 %v5171
      %5471 = vmatmul.mubr.bf16.gmra.mxu0 %v5170
      %v5472 = vpop.f32.mrf.mxu0
      %v5473 = vadd.f32 %v5231, %v5472
      %v5474 = vpop.f32.mrf.mxu0
      %v5475 = vadd.f32 %v5235, %v5474
      %v5476 = vpop.f32.mrf.mxu0
      %v5477 = vadd.f32 %v5231, %v5476
      %v5478 = vpop.f32.mrf.mxu0
      %v5479 = vadd.f32 %v5235, %v5478
      %5480 = vmatprep.mubr.bf16.mxu0 %v5173
      %5481 = vmatmul.mubr.bf16.gmra.mxu0 %v5172
      %v5482 = vpop.f32.mrf.mxu0
      %v5483 = vadd.f32 %v5231, %v5482
      %v5484 = vpop.f32.mrf.mxu0
      %v5485 = vadd.f32 %v5235, %v5484
      %v5486 = vpop.f32.mrf.mxu0
      %v5487 = vadd.f32 %v5231, %v5486
      %v5488 = vpop.f32.mrf.mxu0
      %v5489 = vadd.f32 %v5235, %v5488
      %5490 = vmatprep.mubr.bf16.mxu0 %v5175
      %5491 = vmatmul.mubr.bf16.gmra.mxu0 %v5174
      %v5492 = vpop.f32.mrf.mxu0
      %v5493 = vadd.f32 %v5231, %v5492
      %v5494 = vpop.f32.mrf.mxu0
      %v5495 = vadd.f32 %v5235, %v5494
      %v5496 = vpop.f32.mrf.mxu0
      %v5497 = vadd.f32 %v5231, %v5496
      %v5498 = vpop.f32.mrf.mxu0
      %v5499 = vadd.f32 %v5235, %v5498
      %5500 = vmatprep.mubr.bf16.mxu0 %v5177
      %5501 = vmatmul.mubr.bf16.gmra.mxu0 %v5176
      %v5502 = vpop.f32.mrf.mxu0
      %v5503 = vadd.f32 %v5231, %v5502
      %v5504 = vpop.f32.mrf.mxu0
      %v5505 = vadd.f32 %v5235, %v5504
      %v5506 = vpop.f32.mrf.mxu0
      %v5507 = vadd.f32 %v5231, %v5506
      %v5508 = vpop.f32.mrf.mxu0
      %v5509 = vadd.f32 %v5235, %v5508
      %5510 = vmatprep.mubr.bf16.mxu0 %v5179
      %5511 = vmatmul.mubr.bf16.gmra.mxu0 %v5178
      %v5512 = vpop.f32.mrf.mxu0
      %v5513 = vadd.f32 %v5231, %v5512
      %v5514 = vpop.f32.mrf.mxu0
      %v5515 = vadd.f32 %v5235, %v5514
      %v5516 = vpop.f32.mrf.mxu0
      %v5517 = vadd.f32 %v5231, %v5516
      %v5518 = vpop.f32.mrf.mxu0
      %v5519 = vadd.f32 %v5235, %v5518
      %5520 = vmatprep.mubr.bf16.mxu0 %v5181
      %5521 = vmatmul.mubr.bf16.gmra.mxu0 %v5180
      %v5522 = vpop.f32.mrf.mxu0
      %v5523 = vadd.f32 %v5231, %v5522
      %v5524 = vpop.f32.mrf.mxu0
      %v5525 = vadd.f32 %v5235, %v5524
      %v5526 = vpop.f32.mrf.mxu0
      %v5527 = vadd.f32 %v5231, %v5526
      %v5528 = vpop.f32.mrf.mxu0
      %v5529 = vadd.f32 %v5235, %v5528
      %5530 = vmatprep.mubr.bf16.mxu0 %v5183
      %5531 = vmatmul.mubr.bf16.gmra.mxu0 %v5182
      %v5532 = vpop.f32.mrf.mxu0
      %v5533 = vadd.f32 %v5231, %v5532
      %v5534 = vpop.f32.mrf.mxu0
      %v5535 = vadd.f32 %v5235, %v5534
      %v5536 = vpop.f32.mrf.mxu0
      %v5537 = vadd.f32 %v5231, %v5536
      %v5538 = vpop.f32.mrf.mxu0
      %v5539 = vadd.f32 %v5235, %v5538
      %5540 = vmatprep.mubr.bf16.mxu0 %v5185
      %5541 = vmatmul.mubr.bf16.gmra.mxu0 %v5184
      %v5542 = vpop.f32.mrf.mxu0
      %v5543 = vadd.f32 %v5231, %v5542
      %v5544 = vpop.f32.mrf.mxu0
      %v5545 = vadd.f32 %v5235, %v5544
      %v5546 = vpop.f32.mrf.mxu0
      %v5547 = vadd.f32 %v5231, %v5546
      %v5548 = vpop.f32.mrf.mxu0
      %v5549 = vadd.f32 %v5235, %v5548
      %5550 = vmatprep.mubr.bf16.mxu0 %v5187
      %5551 = vmatmul.mubr.bf16.gmra.mxu0 %v5186
      %v5552 = vpop.f32.mrf.mxu0
      %v5553 = vadd.f32 %v5231, %v5552
      %v5554 = vpop.f32.mrf.mxu0
      %v5555 = vadd.f32 %v5235, %v5554
      %v5556 = vpop.f32.mrf.mxu0
      %v5557 = vadd.f32 %v5231, %v5556
      %v5558 = vpop.f32.mrf.mxu0
      %v5559 = vadd.f32 %v5235, %v5558
      %5560 = vmatprep.mubr.bf16.mxu0 %v5189
      %5561 = vmatmul.mubr.bf16.gmra.mxu0 %v5188
      %v5562 = vpop.f32.mrf.mxu0
      %v5563 = vadd.f32 %v5231, %v5562
      %v5564 = vpop.f32.mrf.mxu0
      %v5565 = vadd.f32 %v5235, %v5564
      %v5566 = vpop.f32.mrf.mxu0
      %v5567 = vadd.f32 %v5231, %v5566
      %v5568 = vpop.f32.mrf.mxu0
      %v5569 = vadd.f32 %v5235, %v5568
      %5570 = vmatprep.mubr.bf16.mxu0 %v5191
      %5571 = vmatmul.mubr.bf16.gmra.mxu0 %v5190
      %v5572 = vpop.f32.mrf.mxu0
      %v5573 = vadd.f32 %v5231, %v5572
      %v5574 = vpop.f32.mrf.mxu0
      %v5575 = vadd.f32 %v5235, %v5574
      %v5576 = vpop.f32.mrf.mxu0
      %v5577 = vadd.f32 %v5231, %v5576
      %v5578 = vpop.f32.mrf.mxu0
      %v5579 = vadd.f32 %v5235, %v5578
      %5580 = vmatprep.mubr.bf16.mxu0 %v5193
      %5581 = vmatmul.mubr.bf16.gmra.mxu0 %v5192
      %v5582 = vpop.f32.mrf.mxu0
      %v5583 = vadd.f32 %v5231, %v5582
      %v5584 = vpop.f32.mrf.mxu0
      %v5585 = vadd.f32 %v5235, %v5584
      %v5586 = vpop.f32.mrf.mxu0
      %v5587 = vadd.f32 %v5231, %v5586
      %v5588 = vpop.f32.mrf.mxu0
      %v5589 = vadd.f32 %v5235, %v5588
      %5590 = vdwg.mxu0
      %v5591 = vmax.f32 %v5433, 0.0
      %v5592 = vmax.f32 %v5435, 0.0
      %v5593 = vmax.f32 %v5437, 0.0
      %v5594 = vmax.f32 %v5439, 0.0
      %v5595 = vmax.f32 %v5443, 0.0
      %v5596 = vmax.f32 %v5445, 0.0
      %v5597 = vmax.f32 %v5447, 0.0
      %v5598 = vmax.f32 %v5449, 0.0
      %v5599 = vmax.f32 %v5453, 0.0
      %v5600 = vmax.f32 %v5455, 0.0
      %v5601 = vmax.f32 %v5457, 0.0
      %v5602 = vmax.f32 %v5459, 0.0
      %v5603 = vmax.f32 %v5463, 0.0
      %v5604 = vmax.f32 %v5465, 0.0
      %v5605 = vmax.f32 %v5467, 0.0
      %v5606 = vmax.f32 %v5469, 0.0
      %v5607 = vmax.f32 %v5473, 0.0
      %v5608 = vmax.f32 %v5475, 0.0
      %v5609 = vmax.f32 %v5477, 0.0
      %v5610 = vmax.f32 %v5479, 0.0
      %v5611 = vmax.f32 %v5483, 0.0
      %v5612 = vmax.f32 %v5485, 0.0
      %v5613 = vmax.f32 %v5487, 0.0
      %v5614 = vmax.f32 %v5489, 0.0
      %v5615 = vmax.f32 %v5493, 0.0
      %v5616 = vmax.f32 %v5495, 0.0
      %v5617 = vmax.f32 %v5497, 0.0
      %v5618 = vmax.f32 %v5499, 0.0
      %v5619 = vmax.f32 %v5503, 0.0
      %v5620 = vmax.f32 %v5505, 0.0
      %v5621 = vmax.f32 %v5507, 0.0
      %v5622 = vmax.f32 %v5509, 0.0
      %v5623 = vmax.f32 %v5513, 0.0
      %v5624 = vmax.f32 %v5515, 0.0
      %v5625 = vmax.f32 %v5517, 0.0
      %v5626 = vmax.f32 %v5519, 0.0
      %v5627 = vmax.f32 %v5523, 0.0
      %v5628 = vmax.f32 %v5525, 0.0
      %v5629 = vmax.f32 %v5527, 0.0
      %v5630 = vmax.f32 %v5529, 0.0
      %v5631 = vmax.f32 %v5533, 0.0
      %v5632 = vmax.f32 %v5535, 0.0
      %v5633 = vmax.f32 %v5537, 0.0
      %v5634 = vmax.f32 %v5539, 0.0
      %v5635 = vmax.f32 %v5543, 0.0
      %v5636 = vmax.f32 %v5545, 0.0
      %v5637 = vmax.f32 %v5547, 0.0
      %v5638 = vmax.f32 %v5549, 0.0
      %v5639 = vmax.f32 %v5553, 0.0
      %v5640 = vmax.f32 %v5555, 0.0
      %v5641 = vmax.f32 %v5557, 0.0
      %v5642 = vmax.f32 %v5559, 0.0
      %v5643 = vmax.f32 %v5563, 0.0
      %v5644 = vmax.f32 %v5565, 0.0
      %v5645 = vmax.f32 %v5567, 0.0
      %v5646 = vmax.f32 %v5569, 0.0
      %v5647 = vmax.f32 %v5573, 0.0
      %v5648 = vmax.f32 %v5575, 0.0
      %v5649 = vmax.f32 %v5577, 0.0
      %v5650 = vmax.f32 %v5579, 0.0
      %v5651 = vmax.f32 %v5583, 0.0
      %v5652 = vmax.f32 %v5585, 0.0
      %v5653 = vmax.f32 %v5587, 0.0
      %v5654 = vmax.f32 %v5589, 0.0
      %v5655 = vpack.c.bf16 %v5593, %v5591
      %v5656 = vpack.c.bf16 %v5594, %v5592
      %v5657 = vpack.c.bf16 %v5597, %v5595
      %v5658 = vpack.c.bf16 %v5598, %v5596
      %v5659 = vpack.c.bf16 %v5601, %v5599
      %v5660 = vpack.c.bf16 %v5602, %v5600
      %v5661 = vpack.c.bf16 %v5605, %v5603
      %v5662 = vpack.c.bf16 %v5606, %v5604
      %v5663 = vpack.c.bf16 %v5609, %v5607
      %v5664 = vpack.c.bf16 %v5610, %v5608
      %v5665 = vpack.c.bf16 %v5613, %v5611
      %v5666 = vpack.c.bf16 %v5614, %v5612
      %v5667 = vpack.c.bf16 %v5617, %v5615
      %v5668 = vpack.c.bf16 %v5618, %v5616
      %v5669 = vpack.c.bf16 %v5621, %v5619
      %v5670 = vpack.c.bf16 %v5622, %v5620
      %v5671 = vpack.c.bf16 %v5625, %v5623
      %v5672 = vpack.c.bf16 %v5626, %v5624
      %v5673 = vpack.c.bf16 %v5629, %v5627
      %v5674 = vpack.c.bf16 %v5630, %v5628
      %v5675 = vpack.c.bf16 %v5633, %v5631
      %v5676 = vpack.c.bf16 %v5634, %v5632
      %v5677 = vpack.c.bf16 %v5637, %v5635
      %v5678 = vpack.c.bf16 %v5638, %v5636
      %v5679 = vpack.c.bf16 %v5641, %v5639
      %v5680 = vpack.c.bf16 %v5642, %v5640
      %v5681 = vpack.c.bf16 %v5645, %v5643
      %v5682 = vpack.c.bf16 %v5646, %v5644
      %v5683 = vpack.c.bf16 %v5649, %v5647
      %v5684 = vpack.c.bf16 %v5650, %v5648
      %v5685 = vpack.c.bf16 %v5653, %v5651
      %v5686 = vpack.c.bf16 %v5654, %v5652
      %v5687 = vld [vmem:[%s9] sm:$0xf]
      %v5688 = vld [vmem:[%s9 + $0x4] sm:$0xf]
      %v5689 = vld [vmem:[%s9 + $0x8] sm:$0xf]
      %v5690 = vld [vmem:[%s9 + $0xc] sm:$0xf]
      %v5691 = vld [vmem:[%s9 + $0x10] sm:$0xf]
      %v5692 = vld [vmem:[%s9 + $0x14] sm:$0xf]
      %v5693 = vld [vmem:[%s9 + $0x18] sm:$0xf]
      %v5694 = vld [vmem:[%s9 + $0x1c] sm:$0xf]
      %v5695 = vld [vmem:[%s9 + $0x20] sm:$0xf]
      %v5696 = vld [vmem:[%s9 + $0x24] sm:$0xf]
      %v5697 = vld [vmem:[%s9 + $0x28] sm:$0xf]
      %v5698 = vld [vmem:[%s9 + $0x2c] sm:$0xf]
      %v5699 = vld [vmem:[%s9 + $0x30] sm:$0xf]
      %v5700 = vld [vmem:[%s9 + $0x34] sm:$0xf]
      %v5701 = vld [vmem:[%s9 + $0x38] sm:$0xf]
      %v5702 = vld [vmem:[%s9 + $0x3c] sm:$0xf]
      %v5703 = vld [vmem:[%s9 + $0x40] sm:$0xf]
      %v5704 = vld [vmem:[%s9 + $0x44] sm:$0xf]
      %v5705 = vld [vmem:[%s9 + $0x48] sm:$0xf]
      %v5706 = vld [vmem:[%s9 + $0x4c] sm:$0xf]
      %v5707 = vld [vmem:[%s9 + $0x50] sm:$0xf]
      %v5708 = vld [vmem:[%s9 + $0x54] sm:$0xf]
      %v5709 = vld [vmem:[%s9 + $0x58] sm:$0xf]
      %v5710 = vld [vmem:[%s9 + $0x5c] sm:$0xf]
      %v5711 = vld [vmem:[%s9 + $0x60] sm:$0xf]
      %v5712 = vld [vmem:[%s9 + $0x64] sm:$0xf]
      %v5713 = vld [vmem:[%s9 + $0x68] sm:$0xf]
      %v5714 = vld [vmem:[%s9 + $0x6c] sm:$0xf]
      %v5715 = vld [vmem:[%s9 + $0x70] sm:$0xf]
      %v5716 = vld [vmem:[%s9 + $0x74] sm:$0xf]
      %v5717 = vld [vmem:[%s9 + $0x78] sm:$0xf]
      %v5718 = vld [vmem:[%s9 + $0x7c] sm:$0xf]
      %v5719 = vld [vmem:[%s10] sm:$0x1]
      %v5721 = vlaneseq
      %v5722 = vshrl.u32 %v5721, 7
      %v5723 = vsub.s32 0, %v5722
      %v5724 = vrot.slane %v5719, %v5723
      %v5758 = vunpack.c.l.b16 %v5687
      %v5759 = vunpack.c.l.b16 %v5688
      %v5760 = vunpack.c.l.b16 %v5689
      %v5761 = vunpack.c.l.b16 %v5690
      %v5762 = vunpack.c.l.b16 %v5691
      %v5763 = vunpack.c.l.b16 %v5692
      %v5764 = vunpack.c.l.b16 %v5693
      %v5765 = vunpack.c.l.b16 %v5694
      %v5766 = vunpack.c.l.b16 %v5695
      %v5767 = vunpack.c.l.b16 %v5696
      %v5768 = vunpack.c.l.b16 %v5697
      %v5769 = vunpack.c.l.b16 %v5698
      %v5770 = vunpack.c.l.b16 %v5699
      %v5771 = vunpack.c.l.b16 %v5700
      %v5772 = vunpack.c.l.b16 %v5701
      %v5773 = vunpack.c.l.b16 %v5702
      %v5774 = vunpack.c.l.b16 %v5703
      %v5775 = vunpack.c.l.b16 %v5704
      %v5776 = vunpack.c.l.b16 %v5705
      %v5777 = vunpack.c.l.b16 %v5706
      %v5778 = vunpack.c.l.b16 %v5707
      %v5779 = vunpack.c.l.b16 %v5708
      %v5780 = vunpack.c.l.b16 %v5709
      %v5781 = vunpack.c.l.b16 %v5710
      %v5782 = vunpack.c.l.b16 %v5711
      %v5783 = vunpack.c.l.b16 %v5712
      %v5784 = vunpack.c.l.b16 %v5713
      %v5785 = vunpack.c.l.b16 %v5714
      %v5786 = vunpack.c.l.b16 %v5715
      %v5787 = vunpack.c.l.b16 %v5716
      %v5788 = vunpack.c.l.b16 %v5717
      %v5789 = vunpack.c.l.b16 %v5718
      %v5790 = vpack.c.b16 %v5759, %v5758
      %v5791 = vpack.c.b16 %v5761, %v5760
      %v5792 = vpack.c.b16 %v5763, %v5762
      %v5793 = vpack.c.b16 %v5765, %v5764
      %v5794 = vpack.c.b16 %v5767, %v5766
      %v5795 = vpack.c.b16 %v5769, %v5768
      %v5796 = vpack.c.b16 %v5771, %v5770
      %v5797 = vpack.c.b16 %v5773, %v5772
      %v5798 = vpack.c.b16 %v5775, %v5774
      %v5799 = vpack.c.b16 %v5777, %v5776
      %v5800 = vpack.c.b16 %v5779, %v5778
      %v5801 = vpack.c.b16 %v5781, %v5780
      %v5802 = vpack.c.b16 %v5783, %v5782
      %v5803 = vpack.c.b16 %v5785, %v5784
      %v5804 = vpack.c.b16 %v5787, %v5786
      %v5805 = vpack.c.b16 %v5789, %v5788
      %5822 = vmatprep.subr.bf16.mxu0 0
      %5823 = vmatpush1.bf16.msra.mxu0 %v5797
      %5824 = vmatprep.subr.bf16.mxu0 0
      %5825 = vmatpush1.bf16.msra.mxu0 %v5796
      %5826 = vmatprep.subr.bf16.mxu0 0
      %5827 = vmatpush1.bf16.msra.mxu0 %v5795
      %5828 = vmatprep.subr.bf16.mxu0 0
      %5829 = vmatpush1.bf16.msra.mxu0 %v5794
      %5830 = vmatprep.subr.bf16.mxu0 0
      %5831 = vmatpush1.bf16.msra.mxu0 %v5793
      %5832 = vmatprep.subr.bf16.mxu0 0
      %5833 = vmatpush1.bf16.msra.mxu0 %v5792
      %5834 = vmatprep.subr.bf16.mxu0 0
      %5835 = vmatpush1.bf16.msra.mxu0 %v5791
      %5836 = vmatprep.subr.bf16.mxu0 0
      %5837 = vmatpush1.bf16.msra.mxu0 %v5790
      %5838 = vmatprep.subr.bf16.mxu0 0
      %5839 = vmatpush2.bf16.msra.mxu0 %v5805
      %5840 = vmatprep.subr.bf16.mxu0 0
      %5841 = vmatpush2.bf16.msra.mxu0 %v5804
      %5842 = vmatprep.subr.bf16.mxu0 0
      %5843 = vmatpush2.bf16.msra.mxu0 %v5803
      %5844 = vmatprep.subr.bf16.mxu0 0
      %5845 = vmatpush2.bf16.msra.mxu0 %v5802
      %5846 = vmatprep.subr.bf16.mxu0 0
      %5847 = vmatpush2.bf16.msra.mxu0 %v5801
      %5848 = vmatprep.subr.bf16.mxu0 0
      %5849 = vmatpush2.bf16.msra.mxu0 %v5800
      %5850 = vmatprep.subr.bf16.mxu0 0
      %5851 = vmatpush2.bf16.msra.mxu0 %v5799
      %5852 = vmatprep.subr.bf16.mxu0 0
      %5853 = vmatpush2.bf16.msra.mxu0 %v5798
      %5854 = vmatprep.mubr.bf16.mxu0 %v5656
      %5855 = vmatmul.mubr.bf16.gmra.mxu0 %v5655
      %v5856 = vpop.f32.mrf.mxu0
      %v5857 = vadd.f32 %v5724, %v5856
      %v5858 = vpop.f32.mrf.mxu0
      %v5859 = vpop.f32.mrf.mxu0
      %v5860 = vadd.f32 %v5724, %v5859
      %v5861 = vpop.f32.mrf.mxu0
      %5862 = vmatprep.mubr.bf16.mxu0 %v5658
      %5863 = vmatmul.mubr.bf16.gmra.mxu0 %v5657
      %v5864 = vpop.f32.mrf.mxu0
      %v5865 = vadd.f32 %v5724, %v5864
      %v5866 = vpop.f32.mrf.mxu0
      %v5867 = vpop.f32.mrf.mxu0
      %v5868 = vadd.f32 %v5724, %v5867
      %v5869 = vpop.f32.mrf.mxu0
      %5870 = vmatprep.mubr.bf16.mxu0 %v5660
      %5871 = vmatmul.mubr.bf16.gmra.mxu0 %v5659
      %v5872 = vpop.f32.mrf.mxu0
      %v5873 = vadd.f32 %v5724, %v5872
      %v5874 = vpop.f32.mrf.mxu0
      %v5875 = vpop.f32.mrf.mxu0
      %v5876 = vadd.f32 %v5724, %v5875
      %v5877 = vpop.f32.mrf.mxu0
      %5878 = vmatprep.mubr.bf16.mxu0 %v5662
      %5879 = vmatmul.mubr.bf16.gmra.mxu0 %v5661
      %v5880 = vpop.f32.mrf.mxu0
      %v5881 = vadd.f32 %v5724, %v5880
      %v5882 = vpop.f32.mrf.mxu0
      %v5883 = vpop.f32.mrf.mxu0
      %v5884 = vadd.f32 %v5724, %v5883
      %v5885 = vpop.f32.mrf.mxu0
      %5886 = vmatprep.mubr.bf16.mxu0 %v5664
      %5887 = vmatmul.mubr.bf16.gmra.mxu0 %v5663
      %v5888 = vpop.f32.mrf.mxu0
      %v5889 = vadd.f32 %v5724, %v5888
      %v5890 = vpop.f32.mrf.mxu0
      %v5891 = vpop.f32.mrf.mxu0
      %v5892 = vadd.f32 %v5724, %v5891
      %v5893 = vpop.f32.mrf.mxu0
      %5894 = vmatprep.mubr.bf16.mxu0 %v5666
      %5895 = vmatmul.mubr.bf16.gmra.mxu0 %v5665
      %v5896 = vpop.f32.mrf.mxu0
      %v5897 = vadd.f32 %v5724, %v5896
      %v5898 = vpop.f32.mrf.mxu0
      %v5899 = vpop.f32.mrf.mxu0
      %v5900 = vadd.f32 %v5724, %v5899
      %v5901 = vpop.f32.mrf.mxu0
      %5902 = vmatprep.mubr.bf16.mxu0 %v5668
      %5903 = vmatmul.mubr.bf16.gmra.mxu0 %v5667
      %v5904 = vpop.f32.mrf.mxu0
      %v5905 = vadd.f32 %v5724, %v5904
      %v5906 = vpop.f32.mrf.mxu0
      %v5907 = vpop.f32.mrf.mxu0
      %v5908 = vadd.f32 %v5724, %v5907
      %v5909 = vpop.f32.mrf.mxu0
      %5910 = vmatprep.mubr.bf16.mxu0 %v5670
      %5911 = vmatmul.mubr.bf16.gmra.mxu0 %v5669
      %v5912 = vpop.f32.mrf.mxu0
      %v5913 = vadd.f32 %v5724, %v5912
      %v5914 = vpop.f32.mrf.mxu0
      %v5915 = vpop.f32.mrf.mxu0
      %v5916 = vadd.f32 %v5724, %v5915
      %v5917 = vpop.f32.mrf.mxu0
      %5918 = vmatprep.mubr.bf16.mxu0 %v5672
      %5919 = vmatmul.mubr.bf16.gmra.mxu0 %v5671
      %v5920 = vpop.f32.mrf.mxu0
      %v5921 = vadd.f32 %v5724, %v5920
      %v5922 = vpop.f32.mrf.mxu0
      %v5923 = vpop.f32.mrf.mxu0
      %v5924 = vadd.f32 %v5724, %v5923
      %v5925 = vpop.f32.mrf.mxu0
      %5926 = vmatprep.mubr.bf16.mxu0 %v5674
      %5927 = vmatmul.mubr.bf16.gmra.mxu0 %v5673
      %v5928 = vpop.f32.mrf.mxu0
      %v5929 = vadd.f32 %v5724, %v5928
      %v5930 = vpop.f32.mrf.mxu0
      %v5931 = vpop.f32.mrf.mxu0
      %v5932 = vadd.f32 %v5724, %v5931
      %v5933 = vpop.f32.mrf.mxu0
      %5934 = vmatprep.mubr.bf16.mxu0 %v5676
      %5935 = vmatmul.mubr.bf16.gmra.mxu0 %v5675
      %v5936 = vpop.f32.mrf.mxu0
      %v5937 = vadd.f32 %v5724, %v5936
      %v5938 = vpop.f32.mrf.mxu0
      %v5939 = vpop.f32.mrf.mxu0
      %v5940 = vadd.f32 %v5724, %v5939
      %v5941 = vpop.f32.mrf.mxu0
      %5942 = vmatprep.mubr.bf16.mxu0 %v5678
      %5943 = vmatmul.mubr.bf16.gmra.mxu0 %v5677
      %v5944 = vpop.f32.mrf.mxu0
      %v5945 = vadd.f32 %v5724, %v5944
      %v5946 = vpop.f32.mrf.mxu0
      %v5947 = vpop.f32.mrf.mxu0
      %v5948 = vadd.f32 %v5724, %v5947
      %v5949 = vpop.f32.mrf.mxu0
      %5950 = vmatprep.mubr.bf16.mxu0 %v5680
      %5951 = vmatmul.mubr.bf16.gmra.mxu0 %v5679
      %v5952 = vpop.f32.mrf.mxu0
      %v5953 = vadd.f32 %v5724, %v5952
      %v5954 = vpop.f32.mrf.mxu0
      %v5955 = vpop.f32.mrf.mxu0
      %v5956 = vadd.f32 %v5724, %v5955
      %v5957 = vpop.f32.mrf.mxu0
      %5958 = vmatprep.mubr.bf16.mxu0 %v5682
      %5959 = vmatmul.mubr.bf16.gmra.mxu0 %v5681
      %v5960 = vpop.f32.mrf.mxu0
      %v5961 = vadd.f32 %v5724, %v5960
      %v5962 = vpop.f32.mrf.mxu0
      %v5963 = vpop.f32.mrf.mxu0
      %v5964 = vadd.f32 %v5724, %v5963
      %v5965 = vpop.f32.mrf.mxu0
      %5966 = vmatprep.mubr.bf16.mxu0 %v5684
      %5967 = vmatmul.mubr.bf16.gmra.mxu0 %v5683
      %v5968 = vpop.f32.mrf.mxu0
      %v5969 = vadd.f32 %v5724, %v5968
      %v5970 = vpop.f32.mrf.mxu0
      %v5971 = vpop.f32.mrf.mxu0
      %v5972 = vadd.f32 %v5724, %v5971
      %v5973 = vpop.f32.mrf.mxu0
      %5974 = vmatprep.mubr.bf16.mxu0 %v5686
      %5975 = vmatmul.mubr.bf16.gmra.mxu0 %v5685
      %v5976 = vpop.f32.mrf.mxu0
      %v5977 = vadd.f32 %v5724, %v5976
      %v5978 = vpop.f32.mrf.mxu0
      %v5979 = vpop.f32.mrf.mxu0
      %v5980 = vadd.f32 %v5724, %v5979
      %v5981 = vpop.f32.mrf.mxu0
      %5982 = vdwg.mxu0
      %5983 = vst [vmem:[%s388] sm:$0xff] %v5857
      %5984 = vst [vmem:[%s388 + $0x8] sm:$0xff] %v5860
      %5985 = vst [vmem:[%s388 + $0x10] sm:$0xff] %v5865
      %5986 = vst [vmem:[%s388 + $0x18] sm:$0xff] %v5868
      %5987 = vst [vmem:[%s388 + $0x20] sm:$0xff] %v5873
      %5988 = vst [vmem:[%s388 + $0x28] sm:$0xff] %v5876
      %5989 = vst [vmem:[%s388 + $0x30] sm:$0xff] %v5881
      %5990 = vst [vmem:[%s388 + $0x38] sm:$0xff] %v5884
      %5991 = vst [vmem:[%s388 + $0x40] sm:$0xff] %v5889
      %5992 = vst [vmem:[%s388 + $0x48] sm:$0xff] %v5892
      %5993 = vst [vmem:[%s388 + $0x50] sm:$0xff] %v5897
      %5994 = vst [vmem:[%s388 + $0x58] sm:$0xff] %v5900
      %5995 = vst [vmem:[%s388 + $0x60] sm:$0xff] %v5905
      %5996 = vst [vmem:[%s388 + $0x68] sm:$0xff] %v5908
      %5997 = vst [vmem:[%s388 + $0x70] sm:$0xff] %v5913
      %5998 = vst [vmem:[%s388 + $0x78] sm:$0xff] %v5916
      %5999 = vst [vmem:[%s388 + $0x80] sm:$0xff] %v5921
      %6000 = vst [vmem:[%s388 + $0x88] sm:$0xff] %v5924
      %6001 = vst [vmem:[%s388 + $0x90] sm:$0xff] %v5929
      %6002 = vst [vmem:[%s388 + $0x98] sm:$0xff] %v5932
      %6003 = vst [vmem:[%s388 + $0xa0] sm:$0xff] %v5937
      %6004 = vst [vmem:[%s388 + $0xa8] sm:$0xff] %v5940
      %6005 = vst [vmem:[%s388 + $0xb0] sm:$0xff] %v5945
      %6006 = vst [vmem:[%s388 + $0xb8] sm:$0xff] %v5948
      %6007 = vst [vmem:[%s388 + $0xc0] sm:$0xff] %v5953
      %6008 = vst [vmem:[%s388 + $0xc8] sm:$0xff] %v5956
      %6009 = vst [vmem:[%s388 + $0xd0] sm:$0xff] %v5961
      %6010 = vst [vmem:[%s388 + $0xd8] sm:$0xff] %v5964
      %6011 = vst [vmem:[%s388 + $0xe0] sm:$0xff] %v5969
      %6012 = vst [vmem:[%s388 + $0xe8] sm:$0xff] %v5972
      %6013 = vst [vmem:[%s388 + $0xf0] sm:$0xff] %v5977
      %6014 = vst [vmem:[%s388 + $0xf8] sm:$0xff] %v5980
      %s6015 = smul.u32 32, %s22
      %p6016 = scmp.lt.s32.totalorder %s6015, 63
      %s6017 = scalar_select %p6016, %s6015, 63
      %s6018 = smul.addr %s6017, 8
      %s6019 = scalar_lea.vmem %s11, %s6018
      // Predicated region
      $region65: #{node_model_forward.1} parent=63 // pred_check
        %p6020 = pneg %p276
      $region66: #{node_model_forward.1} parent=63 // pred_check_branch
        %6022 = sbr.rel (%p6020) target = $region68
      $region67: #{node_model_forward.1} parent=63 // pred_region
        %s6023 = smul.u32 32, %s22
      $region68: #{node_model_forward.1} parent=63 // pred_fallthru
        _
    $region64: #{node_model_forward.1} parent=5 // pred_fallthru
      _
    %p6024 = scmp.le.s32.totalorder 2, %s17
    // Predicated region
    $region69: #{node_model_forward.1} parent=5 // pred_check
      %p6025 = pneg %p6024
    $region70: #{node_model_forward.1} parent=5 // pred_check_branch
      %6027 = sbr.rel (%p6025) target = $region72
    $region71: #{node_model_forward.1} parent=5 // pred_region
      %s6028 = ssub.s32 %s17, 2
      // Predicated region
      $region73: #{node_model_forward.1} parent=71 // pred_check
        %p6029 = pneg %p282
      $region74: #{node_model_forward.1} parent=71 // pred_check_branch
        %6031 = sbr.rel (%p6029) target = $region76
      $region75: #{node_model_forward.1} parent=71 // pred_region
        %s6032 = smul.u32 32, %s23
        %p6033 = scmp.lt.s32.totalorder %s6032, 63
        %s6034 = scalar_select %p6033, %s6032, 63
        %s6035 = smul.addr %s6034, 8
        %s6036 = scalar_lea.vmem %s11, %s6035
      $region76: #{node_model_forward.1} parent=71 // pred_fallthru
        _
    $region72: #{node_model_forward.1} parent=5 // pred_fallthru
      _
  $region6: #{node_model_forward.1} parent=0 // loop_footer
    %s21 = sadd.s32 1, %s17
  $region7: #{node_model_forward.1} parent=0 // loop_footer_branch
    %16 = sbr.rel target = $region3
  $region8: #{node_model_forward.1} parent=0 // loop_exit
    _

</llo_original>
